<compile_context>
chip_gen: v7x
topology: tpu7x:2x2x1
jax: 0.10.0
libtpu: 0.0.40
codegen_flags: <defaults>
</compile_context>

<pallas_src>
import math
import functools

import jax
import jax.numpy as jnp
from jax import lax
from jax.experimental import pallas as pl
from jax.experimental.pallas import tpu as pltpu


# ----------------------------- in-kernel helpers -----------------------------

def _layernorm(x, w, b, eps=1e-5):
    mu = jnp.mean(x, axis=-1, keepdims=True)
    var = jnp.mean(jnp.square(x - mu), axis=-1, keepdims=True)
    return (x - mu) * lax.rsqrt(var + eps) * w + b


def _gelu_tanh(x):
    c = math.sqrt(2.0 / math.pi)
    return 0.5 * x * (1.0 + jnp.tanh(c * (x + 0.044715 * x * x * x)))


@functools.lru_cache(maxsize=None)
def _vmem_budget_bytes():
    """Per-generation VMEM budget (leave headroom for double buffers)."""
    try:
        cap = int(pltpu.get_tpu_info().vmem_capacity_bytes)
        return min((cap * 3) // 4, 100 * 1024 * 1024)   # ~48 MiB on v7x, ~96 MiB on v5e/v6e
    except Exception:
        return 64 * 1024 * 1024


def _cparams(sem):
    return pltpu.CompilerParams(dimension_semantics=sem,
                                vmem_limit_bytes=_vmem_budget_bytes())


def _const_spec(shape):
    zeros = (0,) * len(shape)
    return pl.BlockSpec(shape, lambda *g: zeros)


def _tile_t(T, cap=None):
    if cap is None:
        cap = 512 if _vmem_budget_bytes() >= 80 * 1024 * 1024 else 256
    for t in (512, 256, 128, 64, 32, 16, 8):
        if t <= cap and T % t == 0:
            return t
    return T


def _tile_v(Vp):
    for t in (512, 256, 128):
        if Vp % t == 0:
            return t
    return Vp


def _head_group(H, hd):
    """Heads per grid step such that the column block is a multiple of 128 lanes."""
    for hg in range(1, H):
        if H % hg == 0 and (hg * hd) % 128 == 0:
            return hg
    return H      # fall back to all heads (block width == C == full dim)


# ------------------------- kernel 1: LN1 + fused QKV --------------------------

def _qkv_kernel(x_ref, ln1w_ref, ln1b_ref, wqkv_ref, bqkv_ref,
                q_ref, k_ref, v_ref, *, C):
    x = x_ref[0].astype(jnp.float32)                              # (tq, C)
    h = _layernorm(x, ln1w_ref[...], ln1b_ref[...]).astype(jnp.bfloat16)
    qkv = jnp.dot(h, wqkv_ref[...],
                  preferred_element_type=jnp.float32) + bqkv_ref[...]   # (tq, 3C)
    q_ref[0] = qkv[:, :C].astype(q_ref.dtype)
    k_ref[0] = qkv[:, C:2 * C].astype(k_ref.dtype)
    v_ref[0] = qkv[:, 2 * C:].astype(v_ref.dtype)


def qkv_proj(x, blk):
    B, T, C = x.shape
    tq = _tile_t(T)
    bf = jnp.bfloat16
    weights = [blk["ln1_w"], blk["ln1_b"], blk["w_qkv"].astype(bf), blk["b_qkv"]]
    io_spec = pl.BlockSpec((1, tq, C), lambda b, t: (b, t, 0))
    out_sds = jax.ShapeDtypeStruct((B, T, C), bf)
    return pl.pallas_call(
        functools.partial(_qkv_kernel, C=C),
        out_shape=(out_sds, out_sds, out_sds),
        grid_spec=pltpu.PrefetchScalarGridSpec(
            num_scalar_prefetch=0,
            grid=(B, T // tq),
            in_specs=[io_spec] + [_const_spec(w.shape) for w in weights],
            out_specs=(io_spec, io_spec, io_spec),
        ),
        compiler_params=_cparams(("parallel", "parallel")),
    )(x, *weights)


# --------------------- kernel 2: flash causal attention ------------------------

def _flash_attn_kernel(q_ref, k_ref, v_ref, o_ref, m_sc, l_sc, acc_sc,
                       *, scale, hg, hd, tq, tk):
    qi = pl.program_id(2)
    ki = pl.program_id(3)

    @pl.when(ki == 0)
    def _():
        m_sc[...] = jnp.full(m_sc.shape, -1e30, jnp.float32)
        l_sc[...] = jnp.zeros(l_sc.shape, jnp.float32)
        acc_sc[...] = jnp.zeros(acc_sc.shape, jnp.float32)

    # Causal block-skip: kv blocks strictly above the diagonal do nothing
    # (their DMA block index is also clamped in the index_map -> no re-fetch).
    @pl.when(ki <= qi)
    def _():
        q = q_ref[0].reshape(tq, hg, hd)                          # bf16
        k = k_ref[0].reshape(tk, hg, hd)
        v = v_ref[0].reshape(tk, hg, hd)
        s = jnp.einsum('qgd,kgd->gqk', q, k,
                       preferred_element_type=jnp.float32) * scale     # (hg,tq,tk) f32
        row = lax.broadcasted_iota(jnp.int32, (tq, tk), 0)
        col = lax.broadcasted_iota(jnp.int32, (tq, tk), 1)
        mask = (col - row) <= (qi - ki) * tq          # always true when ki < qi
        s = jnp.where(mask[None, :, :], s, -1e30)

        m_prev = m_sc[...]                                        # (hg,tq,1)
        m_new = jnp.maximum(m_prev, jnp.max(s, axis=-1, keepdims=True))
        alpha = jnp.exp(m_prev - m_new)
        p = jnp.exp((s - m_new).astype(jnp.bfloat16))             # bf16 exp (EUP)
        l_sc[...] = alpha * l_sc[...] + jnp.sum(p.astype(jnp.float32),
                                                axis=-1, keepdims=True)
        acc_sc[...] = alpha * acc_sc[...] + jnp.einsum(
            'gqk,kgd->gqd', p, v, preferred_element_type=jnp.float32)
        m_sc[...] = m_new

    # The diagonal block is the last contributing kv block for this q tile.
    @pl.when(ki == qi)
    def _():
        y = acc_sc[...] * pl.reciprocal(l_sc[...], approx=True)   # (hg,tq,hd)
        o_ref[0] = jnp.swapaxes(y, 0, 1).reshape(tq, hg * hd).astype(o_ref.dtype)


def causal_attention(q, k, v, *, n_head):
    """q,k,v: (B,T,C) bf16 -> (B,T,C) bf16; no head-major transpose needed."""
    B, T, C = q.shape
    H = n_head
    hd = C // H
    hg = _head_group(H, hd)
    hgd = hg * hd
    ta = _tile_t(T, cap=256)
    nq = T // ta

    def qo_map(b, g, qi, ki):
        return (b, qi, g)

    def kv_map(b, g, qi, ki):
        return (b, jnp.minimum(ki, qi), g)      # clamp: skipped blocks not re-fetched

    q_spec = pl.BlockSpec((1, ta, hgd), qo_map)
    kv_spec = pl.BlockSpec((1, ta, hgd), kv_map)

    kernel = functools.partial(_flash_attn_kernel, scale=1.0 / math.sqrt(hd),
                               hg=hg, hd=hd, tq=ta, tk=ta)
    return pl.pallas_call(
        kernel,
        out_shape=jax.ShapeDtypeStruct((B, T, C), jnp.bfloat16),
        grid_spec=pltpu.PrefetchScalarGridSpec(
            num_scalar_prefetch=0,
            grid=(B, H // hg, nq, nq),
            in_specs=[q_spec, kv_spec, kv_spec],
            out_specs=pl.BlockSpec((1, ta, hgd), qo_map),
            scratch_shapes=[pltpu.VMEM((hg, ta, 1), jnp.float32),
                            pltpu.VMEM((hg, ta, 1), jnp.float32),
                            pltpu.VMEM((hg, ta, hd), jnp.float32)],
        ),
        compiler_params=_cparams(("parallel", "parallel", "parallel", "arbitrary")),
    )(q, k, v)


# ------------------------ kernel 3: out-proj + MLP ------------------------------

def _proj_mlp_kernel(x_ref, y_ref, wpr_ref, bpr_ref, ln2w_ref, ln2b_ref,
                     wfc_ref, bfc_ref, wp2_ref, bp2_ref, o_ref):
    x = x_ref[0].astype(jnp.float32)                              # (tq, C) residual
    y = y_ref[0]                                                  # (tq, C) bf16
    x = x + jnp.dot(y, wpr_ref[...], preferred_element_type=jnp.float32) + bpr_ref[...]
    h = _layernorm(x, ln2w_ref[...], ln2b_ref[...]).astype(jnp.bfloat16)
    f = jnp.dot(h, wfc_ref[...], preferred_element_type=jnp.float32) + bfc_ref[...]
    f = _gelu_tanh(f).astype(jnp.bfloat16)
    x = x + jnp.dot(f, wp2_ref[...], preferred_element_type=jnp.float32) + bp2_ref[...]
    o_ref[0] = x.astype(o_ref.dtype)


def proj_mlp(x, y, blk):
    B, T, C = x.shape
    tq = _tile_t(T)
    bf = jnp.bfloat16
    weights = [blk["w_proj"].astype(bf), blk["b_proj"],
               blk["ln2_w"], blk["ln2_b"],
               blk["w_fc"].astype(bf), blk["b_fc"],
               blk["w_proj2"].astype(bf), blk["b_proj2"]]
    x_spec = pl.BlockSpec((1, tq, C), lambda b, t: (b, t, 0))
    return pl.pallas_call(
        _proj_mlp_kernel,
        out_shape=jax.ShapeDtypeStruct((B, T, C), jnp.float32),
        grid_spec=pltpu.PrefetchScalarGridSpec(
            num_scalar_prefetch=0,
            grid=(B, T // tq),
            in_specs=[x_spec, x_spec] + [_const_spec(w.shape) for w in weights],
            out_specs=x_spec,
        ),
        compiler_params=_cparams(("parallel", "parallel")),
    )(x, y, *weights)


# ------------------------ final layernorm + lm_head -----------------------------

def _head_kernel(x_ref, lnfw_ref, lnfb_ref, w_ref, o_ref):
    x = x_ref[0].astype(jnp.float32)                              # (tq, C)
    h = _layernorm(x, lnfw_ref[...], lnfb_ref[...]).astype(jnp.bfloat16)
    o_ref[0] = jnp.dot(h, w_ref[...],                             # standard (M,K)x(K,N)
                       preferred_element_type=jnp.float32).astype(o_ref.dtype)


def final_head(x, lnf_w, lnf_b, wte):
    B, T, C = x.shape
    V = wte.shape[0]
    Vp = ((V + 127) // 128) * 128                 # pad vocab to a lane multiple
    w = wte.astype(jnp.bfloat16).T                # (C, V): tied weight, pre-transposed once
    if Vp != V:
        w = jnp.pad(w, ((0, 0), (0, Vp - V)))
    tq = _tile_t(T)
    tv = _tile_v(Vp)
    logits = pl.pallas_call(
        _head_kernel,
        out_shape=jax.ShapeDtypeStruct((B, T, Vp), jnp.float32),
        grid_spec=pltpu.PrefetchScalarGridSpec(
            num_scalar_prefetch=0,
            # V-tile axis outermost: each (C, tv) weight tile is fetched once and
            # reused across every (b, t) tile -> head is no longer HBM-bound.
            grid=(Vp // tv, B, T // tq),
            in_specs=[pl.BlockSpec((1, tq, C), lambda v, b, t: (b, t, 0)),
                      pl.BlockSpec(lnf_w.shape, lambda v, b, t: (0, 0)),
                      pl.BlockSpec(lnf_b.shape, lambda v, b, t: (0, 0)),
                      pl.BlockSpec((C, tv), lambda v, b, t: (0, v))],
            out_specs=pl.BlockSpec((1, tq, tv), lambda v, b, t: (b, t, v)),
        ),
        compiler_params=_cparams(("parallel", "parallel", "parallel")),
    )(x, lnf_w, lnf_b, w)
    return logits[:, :, :V] if Vp != V else logits


# ------------------------------ parameter setup ---------------------------------

def init_params(key, *, vocab_size, context_size, n_layer, n_head, n_embd):
    """Deterministic init mirroring the PyTorch module's _init_weights."""
    std = 0.02
    proj_std = 0.02 / math.sqrt(2 * n_layer)
    keys = jax.random.split(key, 2 + 4 * n_layer)
    ki = iter(range(len(keys)))

    def nrm(k, shape, s):
        return jax.random.normal(keys[k], shape, dtype=jnp.float32) * s

    params = {
        "wte": nrm(next(ki), (vocab_size, n_embd), std),       # tied with lm_head
        "wpe": nrm(next(ki), (context_size, n_embd), std),
        "lnf_w": jnp.ones((1, n_embd), jnp.float32),
        "lnf_b": jnp.zeros((1, n_embd), jnp.float32),
        "blocks": [],
    }
    for _ in range(n_layer):
        blk = {
            "ln1_w": jnp.ones((1, n_embd), jnp.float32),
            "ln1_b": jnp.zeros((1, n_embd), jnp.float32),
            "w_qkv": nrm(next(ki), (n_embd, 3 * n_embd), std),        # fused c_attn
            "b_qkv": jnp.zeros((1, 3 * n_embd), jnp.float32),
            "w_proj": nrm(next(ki), (n_embd, n_embd), proj_std),      # attn c_proj
            "b_proj": jnp.zeros((1, n_embd), jnp.float32),
            "ln2_w": jnp.ones((1, n_embd), jnp.float32),
            "ln2_b": jnp.zeros((1, n_embd), jnp.float32),
            "w_fc": nrm(next(ki), (n_embd, 4 * n_embd), std),
            "b_fc": jnp.zeros((1, 4 * n_embd), jnp.float32),
            "w_proj2": nrm(next(ki), (4 * n_embd, n_embd), proj_std), # mlp c_proj
            "b_proj2": jnp.zeros((1, n_embd), jnp.float32),
        }
        params["blocks"].append(blk)
    return params


# ---------------------------------- forward -------------------------------------

def gigachad_forward(idx, params, *, n_head):
    """idx: (B, T) int32 token ids -> logits (B, T, vocab)."""
    B, T = idx.shape

    # TODO(synk): embedding gather kept in plain JAX (not the matmul hot path).
    tok_emb = params["wte"][idx]                                  # (B, T, C)
    pos_emb = params["wpe"][:T]                                   # (T, C)
    x = (tok_emb + pos_emb[None, :, :]).astype(jnp.float32)       # dropout p=0 -> identity

    for blk in params["blocks"]:
        q, k, v = qkv_proj(x, blk)                                # (B, T, C) bf16 each
        y = causal_attention(q, k, v, n_head=n_head)              # (B, T, C) bf16
        x = proj_mlp(x, y, blk)                                   # (B, T, C) f32

    return final_head(x, params["lnf_w"], params["lnf_b"], params["wte"])


# ------------------------------------ main ---------------------------------------

if __name__ == "__main__":
    # small config consistent with TransformerConfig
    vocab_size = 64
    context_size = 16
    n_layer = 2
    n_head = 4
    n_embd = 32
    B, T = 2, 8

    key = jax.random.PRNGKey(0)
    k_param, k_idx = jax.random.split(key)
    params = init_params(k_param,
                         vocab_size=vocab_size, context_size=context_size,
                         n_layer=n_layer, n_head=n_head, n_embd=n_embd)
    idx = jax.random.randint(k_idx, (B, T), 0, vocab_size, dtype=jnp.int32)

    logits = jax.jit(functools.partial(gigachad_forward, n_head=n_head))(idx, params)
    logits = jax.block_until_ready(logits)

    assert logits.shape == (B, T, vocab_size), logits.shape
    assert bool(jnp.all(jnp.isfinite(logits)))
    print("KERNEL_OK")
</pallas_src>

<mosaic_0001>
module attributes {stable_mosaic.version = 11 : i64} {
  func.func @_flash_attn_kernel(%arg0: i32, %arg1: i32, %arg2: i32, %arg3: i32, %arg4: memref<1x8x32xbf16, #tpu.memory_space<vmem>>, %arg5: memref<1x8x32xbf16, #tpu.memory_space<vmem>>, %arg6: memref<1x8x32xbf16, #tpu.memory_space<vmem>>, %arg7: memref<1x8x32xbf16, #tpu.memory_space<vmem>>, %arg8: memref<4x8x1xf32, #tpu.memory_space<vmem>>, %arg9: memref<4x8x1xf32, #tpu.memory_space<vmem>>, %arg10: memref<4x8x8xf32, #tpu.memory_space<vmem>>) attributes {dimension_semantics = [#tpu.dimension_semantics<parallel>, #tpu.dimension_semantics<parallel>, #tpu.dimension_semantics<parallel>, #tpu.dimension_semantics<arbitrary>], iteration_bounds = array<i64: 2, 1, 1, 1>, scalar_prefetch = 0 : i64, scratch_operands = 3 : i64, tpu.core_type = #tpu.core_type<tc>, window_params = [{transform_indices = @transform_0, window_bounds = array<i64: 1, 8, 32>}, {transform_indices = @transform_1, window_bounds = array<i64: 1, 8, 32>}, {transform_indices = @transform_2, window_bounds = array<i64: 1, 8, 32>}, {transform_indices = @transform_3, window_bounds = array<i64: 1, 8, 32>}]} {
    %c0_i32 = arith.constant 0 : i32
    %0 = arith.cmpi eq, %arg3, %c0_i32 : i32
    %1 = arith.extui %0 : i1 to i32
    %c0_i32_0 = arith.constant 0 : i32
    %2 = arith.cmpi ne, %1, %c0_i32_0 : i32
    scf.if %2 {
      %cst = arith.constant -1.000000e+30 : f32
      %9 = vector.broadcast %cst : f32 to vector<4x8x1xf32>
      %c0 = arith.constant 0 : index
      %c0_3 = arith.constant 0 : index
      %c0_4 = arith.constant 0 : index
      %10 = vector.load %arg8[%c0, %c0_3, %c0_4] : memref<4x8x1xf32, #tpu.memory_space<vmem>>, vector<4x8x1xf32>
      tpu.vector_store %arg8[%c0, %c0_3, %c0_4], %9 {strides = array<i32>} : memref<4x8x1xf32, #tpu.memory_space<vmem>>, vector<4x8x1xf32>,
      %cst_5 = arith.constant 0.000000e+00 : f32
      %11 = vector.broadcast %cst_5 : f32 to vector<4x8x1xf32>
      %c0_6 = arith.constant 0 : index
      %c0_7 = arith.constant 0 : index
      %c0_8 = arith.constant 0 : index
      %12 = vector.load %arg9[%c0_6, %c0_7, %c0_8] : memref<4x8x1xf32, #tpu.memory_space<vmem>>, vector<4x8x1xf32>
      tpu.vector_store %arg9[%c0_6, %c0_7, %c0_8], %11 {strides = array<i32>} : memref<4x8x1xf32, #tpu.memory_space<vmem>>, vector<4x8x1xf32>,
      %cst_9 = arith.constant 0.000000e+00 : f32
      %13 = vector.broadcast %cst_9 : f32 to vector<4x8x8xf32>
      %c0_10 = arith.constant 0 : index
      %c0_11 = arith.constant 0 : index
      %c0_12 = arith.constant 0 : index
      %14 = vector.load %arg10[%c0_10, %c0_11, %c0_12] : memref<4x8x8xf32, #tpu.memory_space<vmem>>, vector<4x8x8xf32>
      tpu.vector_store %arg10[%c0_10, %c0_11, %c0_12], %13 {strides = array<i32>} : memref<4x8x8xf32, #tpu.memory_space<vmem>>, vector<4x8x8xf32>,
    } else {
    }
    %3 = arith.cmpi sle, %arg3, %arg2 : i32
    %4 = arith.extui %3 : i1 to i32
    %c0_i32_1 = arith.constant 0 : i32
    %5 = arith.cmpi ne, %4, %c0_i32_1 : i32
    scf.if %5 {
      %c0 = arith.constant 0 : index
      %c0_3 = arith.constant 0 : index
      %c0_4 = arith.constant 0 : index
      %9 = vector.load %arg4[%c0, %c0_3, %c0_4] : memref<1x8x32xbf16, #tpu.memory_space<vmem>>, vector<1x8x32xbf16>
      %10 = vector.shape_cast %9 : vector<1x8x32xbf16> to vector<8x32xbf16>
      %11 = vector.shape_cast %10 : vector<8x32xbf16> to vector<8x4x8xbf16>
      %c0_5 = arith.constant 0 : index
      %c0_6 = arith.constant 0 : index
      %c0_7 = arith.constant 0 : index
      %12 = vector.load %arg5[%c0_5, %c0_6, %c0_7] : memref<1x8x32xbf16, #tpu.memory_space<vmem>>, vector<1x8x32xbf16>
      %13 = vector.shape_cast %12 : vector<1x8x32xbf16> to vector<8x32xbf16>
      %14 = vector.shape_cast %13 : vector<8x32xbf16> to vector<8x4x8xbf16>
      %c0_8 = arith.constant 0 : index
      %c0_9 = arith.constant 0 : index
      %c0_10 = arith.constant 0 : index
      %15 = vector.load %arg6[%c0_8, %c0_9, %c0_10] : memref<1x8x32xbf16, #tpu.memory_space<vmem>>, vector<1x8x32xbf16>
      %16 = vector.shape_cast %15 : vector<1x8x32xbf16> to vector<8x32xbf16>
      %17 = vector.shape_cast %16 : vector<8x32xbf16> to vector<8x4x8xbf16>
      "tpu.trace_start"() <{level = 10 : i32, message = "qgd,kgd->gqk"}> : () -> ()
      %cst = arith.constant dense<0.000000e+00> : vector<4x8x8xf32>
      %18 = tpu.matmul %11, %14, %cst {dimension_numbers = #tpu.dot_dimension_numbers<[2], [2], [0], [0], [0, 1, 0, 0, 1, 0], [1], [1]>} : vector<8x4x8xbf16>, vector<8x4x8xbf16>, vector<4x8x8xf32> -> vector<4x8x8xf32>
      "tpu.trace_stop"() : () -> ()
      %cst_11 = arith.constant 0.353553385 : f32
      %19 = vector.broadcast %cst_11 : f32 to vector<4x8x8xf32>
      %20 = arith.mulf %18, %19 : vector<4x8x8xf32>
      %21 = tpu.iota {dimensions = array<i32: 0>} : vector<8x8xi32>
      %22 = tpu.iota {dimensions = array<i32: 1>} : vector<8x8xi32>
      %23 = arith.subi %22, %21 : vector<8x8xi32>
      %24 = arith.subi %arg2, %arg3 : i32
      %c8_i32 = arith.constant 8 : i32
      %25 = arith.muli %24, %c8_i32 : i32
      %26 = vector.broadcast %25 : i32 to vector<8x8xi32>
      %27 = arith.cmpi sle, %23, %26 : vector<8x8xi32>
      %28 = vector.shape_cast %27 : vector<8x8xi1> to vector<1x8x8xi1>
      %cst_12 = arith.constant -1.000000e+30 : f32
      %29 = vector.shape_cast %28 : vector<1x8x8xi1> to vector<1x8x8xi1>
      %30 = vector.broadcast %29 : vector<1x8x8xi1> to vector<4x8x8xi1>
      %31 = vector.broadcast %cst_12 : f32 to vector<4x8x8xf32>
      %32 = arith.select %30, %20, %31 : vector<4x8x8xi1>, vector<4x8x8xf32>
      %c0_13 = arith.constant 0 : index
      %c0_14 = arith.constant 0 : index
      %c0_15 = arith.constant 0 : index
      %33 = vector.load %arg8[%c0_13, %c0_14, %c0_15] : memref<4x8x1xf32, #tpu.memory_space<vmem>>, vector<4x8x1xf32>
      %cst_16 = arith.constant dense<0xFF800000> : vector<4x8xf32>
      %34 = vector.multi_reduction <maximumf>, %32, %cst_16 [2] : vector<4x8x8xf32> to vector<4x8xf32>
      %35 = vector.shape_cast %34 : vector<4x8xf32> to vector<4x8x1xf32>
      %36 = arith.maximumf %33, %35 : vector<4x8x1xf32>
      %37 = arith.subf %33, %36 : vector<4x8x1xf32>
      %38 = math.exp %37 : vector<4x8x1xf32>
      %39 = vector.broadcast %36 : vector<4x8x1xf32> to vector<4x8x8xf32>
      %40 = arith.subf %32, %39 : vector<4x8x8xf32>
      %41 = arith.truncf %40 : vector<4x8x8xf32> to vector<4x8x8xbf16>
      %42 = math.exp %41 : vector<4x8x8xbf16>
      %c0_17 = arith.constant 0 : index
      %c0_18 = arith.constant 0 : index
      %c0_19 = arith.constant 0 : index
      %43 = vector.load %arg9[%c0_17, %c0_18, %c0_19] : memref<4x8x1xf32, #tpu.memory_space<vmem>>, vector<4x8x1xf32>
      %44 = arith.mulf %38, %43 : vector<4x8x1xf32>
      %45 = arith.extf %42 : vector<4x8x8xbf16> to vector<4x8x8xf32>
      %cst_20 = arith.constant dense<0.000000e+00> : vector<4x8xf32>
      %46 = vector.multi_reduction <add>, %45, %cst_20 [2] : vector<4x8x8xf32> to vector<4x8xf32>
      %47 = vector.shape_cast %46 : vector<4x8xf32> to vector<4x8x1xf32>
      %48 = arith.addf %44, %47 : vector<4x8x1xf32>
      %c0_21 = arith.constant 0 : index
      %c0_22 = arith.constant 0 : index
      %c0_23 = arith.constant 0 : index
      %49 = vector.load %arg9[%c0_21, %c0_22, %c0_23] : memref<4x8x1xf32, #tpu.memory_space<vmem>>, vector<4x8x1xf32>
      tpu.vector_store %arg9[%c0_21, %c0_22, %c0_23], %48 {strides = array<i32>} : memref<4x8x1xf32, #tpu.memory_space<vmem>>, vector<4x8x1xf32>,
      %c0_24 = arith.constant 0 : index
      %c0_25 = arith.constant 0 : index
      %c0_26 = arith.constant 0 : index
      %50 = vector.load %arg10[%c0_24, %c0_25, %c0_26] : memref<4x8x8xf32, #tpu.memory_space<vmem>>, vector<4x8x8xf32>
      %51 = vector.broadcast %38 : vector<4x8x1xf32> to vector<4x8x8xf32>
      %52 = arith.mulf %51, %50 : vector<4x8x8xf32>
      "tpu.trace_start"() <{level = 10 : i32, message = "gqk,kgd->gqd"}> : () -> ()
      %cst_27 = arith.constant dense<0.000000e+00> : vector<4x8x8xf32>
      %53 = tpu.matmul %42, %17, %cst_27 {dimension_numbers = #tpu.dot_dimension_numbers<[2], [0], [1], [2], [0, 0, 0, 1, 1, 2], [0], [1]>} : vector<4x8x8xbf16>, vector<8x4x8xbf16>, vector<4x8x8xf32> -> vector<4x8x8xf32>
      "tpu.trace_stop"() : () -> ()
      %54 = arith.addf %52, %53 : vector<4x8x8xf32>
      %c0_28 = arith.constant 0 : index
      %c0_29 = arith.constant 0 : index
      %c0_30 = arith.constant 0 : index
      %55 = vector.load %arg10[%c0_28, %c0_29, %c0_30] : memref<4x8x8xf32, #tpu.memory_space<vmem>>, vector<4x8x8xf32>
      tpu.vector_store %arg10[%c0_28, %c0_29, %c0_30], %54 {strides = array<i32>} : memref<4x8x8xf32, #tpu.memory_space<vmem>>, vector<4x8x8xf32>,
      %c0_31 = arith.constant 0 : index
      %c0_32 = arith.constant 0 : index
      %c0_33 = arith.constant 0 : index
      %56 = vector.load %arg8[%c0_31, %c0_32, %c0_33] : memref<4x8x1xf32, #tpu.memory_space<vmem>>, vector<4x8x1xf32>
      tpu.vector_store %arg8[%c0_31, %c0_32, %c0_33], %36 {strides = array<i32>} : memref<4x8x1xf32, #tpu.memory_space<vmem>>, vector<4x8x1xf32>,
    } else {
    }
    %6 = arith.cmpi eq, %arg3, %arg2 : i32
    %7 = arith.extui %6 : i1 to i32
    %c0_i32_2 = arith.constant 0 : i32
    %8 = arith.cmpi ne, %7, %c0_i32_2 : i32
    scf.if %8 {
      %c0 = arith.constant 0 : index
      %c0_3 = arith.constant 0 : index
      %c0_4 = arith.constant 0 : index
      %9 = vector.load %arg10[%c0, %c0_3, %c0_4] : memref<4x8x8xf32, #tpu.memory_space<vmem>>, vector<4x8x8xf32>
      %c0_5 = arith.constant 0 : index
      %c0_6 = arith.constant 0 : index
      %c0_7 = arith.constant 0 : index
      %10 = vector.load %arg9[%c0_5, %c0_6, %c0_7] : memref<4x8x1xf32, #tpu.memory_space<vmem>>, vector<4x8x1xf32>
      %11 = tpu.reciprocal %10 {approx = true} : vector<4x8x1xf32> -> vector<4x8x1xf32>
      %12 = vector.broadcast %11 : vector<4x8x1xf32> to vector<4x8x8xf32>
      %13 = arith.mulf %9, %12 : vector<4x8x8xf32>
      %14 = tpu.transpose %13, [1, 0, 2] : vector<4x8x8xf32> -> vector<8x4x8xf32>
      %15 = vector.shape_cast %14 : vector<8x4x8xf32> to vector<8x32xf32>
      %16 = arith.truncf %15 : vector<8x32xf32> to vector<8x32xbf16>
      %c0_8 = arith.constant 0 : index
      %c0_9 = arith.constant 0 : index
      %c0_10 = arith.constant 0 : index
      %17 = vector.load %arg7[%c0_8, %c0_9, %c0_10] : memref<1x8x32xbf16, #tpu.memory_space<vmem>>, vector<1x8x32xbf16>
      %18 = vector.shape_cast %17 : vector<1x8x32xbf16> to vector<8x32xbf16>
      %19 = vector.shape_cast %16 : vector<8x32xbf16> to vector<1x8x32xbf16>
      tpu.vector_store %arg7[%c0_8, %c0_9, %c0_10], %19 {strides = array<i32>} : memref<1x8x32xbf16, #tpu.memory_space<vmem>>, vector<1x8x32xbf16>,
    } else {
    }
    return
  }
  func.func @transform_0(%arg0: i32, %arg1: i32, %arg2: i32, %arg3: i32) -> (i32, i32, i32) {
    %c0_i32 = arith.constant 0 : i32
    return %arg0, %arg2, %arg1 : i32, i32, i32
  }
  func.func @transform_1(%arg0: i32, %arg1: i32, %arg2: i32, %arg3: i32) -> (i32, i32, i32) {
    %0 = arith.minsi %arg3, %arg2 : i32
    %c0_i32 = arith.constant 0 : i32
    return %arg0, %0, %arg1 : i32, i32, i32
  }
  func.func @transform_2(%arg0: i32, %arg1: i32, %arg2: i32, %arg3: i32) -> (i32, i32, i32) {
    %0 = arith.minsi %arg3, %arg2 : i32
    %c0_i32 = arith.constant 0 : i32
    return %arg0, %0, %arg1 : i32, i32, i32
  }
  func.func @transform_3(%arg0: i32, %arg1: i32, %arg2: i32, %arg3: i32) -> (i32, i32, i32) {
    %c0_i32 = arith.constant 0 : i32
    return %arg0, %arg2, %arg1 : i32, i32, i32
  }
}

module attributes {stable_mosaic.version = 11 : i64} {
  func.func @_qkv_kernel(%arg0: i32, %arg1: i32, %arg2: memref<1x8x32xf32, #tpu.memory_space<vmem>>, %arg3: memref<1x32xf32, #tpu.memory_space<vmem>>, %arg4: memref<1x32xf32, #tpu.memory_space<vmem>>, %arg5: memref<32x96xbf16, #tpu.memory_space<vmem>>, %arg6: memref<1x96xf32, #tpu.memory_space<vmem>>, %arg7: memref<1x8x32xbf16, #tpu.memory_space<vmem>>, %arg8: memref<1x8x32xbf16, #tpu.memory_space<vmem>>, %arg9: memref<1x8x32xbf16, #tpu.memory_space<vmem>>) attributes {dimension_semantics = [#tpu.dimension_semantics<parallel>, #tpu.dimension_semantics<parallel>], iteration_bounds = array<i64: 2, 1>, scalar_prefetch = 0 : i64, scratch_operands = 0 : i64, tpu.core_type = #tpu.core_type<tc>, window_params = [{transform_indices = @transform_0, window_bounds = array<i64: 1, 8, 32>}, {pipeline_mode = #tpu.pipeline_mode<synchronous>, transform_indices = @transform_1, window_bounds = array<i64: 1, 32>}, {pipeline_mode = #tpu.pipeline_mode<synchronous>, transform_indices = @transform_2, window_bounds = array<i64: 1, 32>}, {pipeline_mode = #tpu.pipeline_mode<synchronous>, transform_indices = @transform_3, window_bounds = array<i64: 32, 96>}, {pipeline_mode = #tpu.pipeline_mode<synchronous>, transform_indices = @transform_4, window_bounds = array<i64: 1, 96>}, {transform_indices = @transform_5, window_bounds = array<i64: 1, 8, 32>}, {transform_indices = @transform_6, window_bounds = array<i64: 1, 8, 32>}, {transform_indices = @transform_7, window_bounds = array<i64: 1, 8, 32>}]} {
    %c0 = arith.constant 0 : index
    %c0_0 = arith.constant 0 : index
    %c0_1 = arith.constant 0 : index
    %0 = vector.load %arg2[%c0, %c0_0, %c0_1] : memref<1x8x32xf32, #tpu.memory_space<vmem>>, vector<1x8x32xf32>
    %1 = vector.shape_cast %0 : vector<1x8x32xf32> to vector<8x32xf32>
    %c0_2 = arith.constant 0 : index
    %c0_3 = arith.constant 0 : index
    %2 = vector.load %arg3[%c0_2, %c0_3] : memref<1x32xf32, #tpu.memory_space<vmem>>, vector<1x32xf32>
    %c0_4 = arith.constant 0 : index
    %c0_5 = arith.constant 0 : index
    %3 = vector.load %arg4[%c0_4, %c0_5] : memref<1x32xf32, #tpu.memory_space<vmem>>, vector<1x32xf32>
    %cst = arith.constant dense<0.000000e+00> : vector<8xf32>
    %4 = vector.multi_reduction <add>, %1, %cst [1] : vector<8x32xf32> to vector<8xf32>
    %5 = vector.shape_cast %4 : vector<8xf32> to vector<8x1xf32>
    %cst_6 = arith.constant 3.200000e+01 : f32
    %6 = vector.broadcast %cst_6 : f32 to vector<8x1xf32>
    %7 = arith.divf %5, %6 : vector<8x1xf32>
    %8 = vector.broadcast %7 : vector<8x1xf32> to vector<8x32xf32>
    %9 = arith.subf %1, %8 : vector<8x32xf32>
    %10 = arith.mulf %9, %9 : vector<8x32xf32>
    %cst_7 = arith.constant dense<0.000000e+00> : vector<8xf32>
    %11 = vector.multi_reduction <add>, %10, %cst_7 [1] : vector<8x32xf32> to vector<8xf32>
    %12 = vector.shape_cast %11 : vector<8xf32> to vector<8x1xf32>
    %cst_8 = arith.constant 3.200000e+01 : f32
    %13 = vector.broadcast %cst_8 : f32 to vector<8x1xf32>
    %14 = arith.divf %12, %13 : vector<8x1xf32>
    %15 = vector.broadcast %7 : vector<8x1xf32> to vector<8x32xf32>
    %16 = arith.subf %1, %15 : vector<8x32xf32>
    %cst_9 = arith.constant 9.99999974E-6 : f32
    %17 = vector.broadcast %cst_9 : f32 to vector<8x1xf32>
    %18 = arith.addf %14, %17 : vector<8x1xf32>
    %19 = math.rsqrt %18 : vector<8x1xf32>
    %20 = vector.broadcast %19 : vector<8x1xf32> to vector<8x32xf32>
    %21 = arith.mulf %16, %20 : vector<8x32xf32>
    %22 = vector.broadcast %2 : vector<1x32xf32> to vector<8x32xf32>
    %23 = arith.mulf %21, %22 : vector<8x32xf32>
    %24 = vector.broadcast %3 : vector<1x32xf32> to vector<8x32xf32>
    %25 = arith.addf %23, %24 : vector<8x32xf32>
    %26 = arith.truncf %25 : vector<8x32xf32> to vector<8x32xbf16>
    %c0_10 = arith.constant 0 : index
    %c0_11 = arith.constant 0 : index
    %27 = vector.load %arg5[%c0_10, %c0_11] : memref<32x96xbf16, #tpu.memory_space<vmem>>, vector<32x96xbf16>
    %cst_12 = arith.constant dense<0.000000e+00> : vector<8x96xf32>
    %28 = tpu.matmul %26, %27, %cst_12 {dimension_numbers = #tpu.dot_dimension_numbers<[1], [0], [0], [1], [0, 0, 1, 1], [], []>} : vector<8x32xbf16>, vector<32x96xbf16>, vector<8x96xf32> -> vector<8x96xf32>
    %c0_13 = arith.constant 0 : index
    %c0_14 = arith.constant 0 : index
    %29 = vector.load %arg6[%c0_13, %c0_14] : memref<1x96xf32, #tpu.memory_space<vmem>>, vector<1x96xf32>
    %30 = vector.broadcast %29 : vector<1x96xf32> to vector<8x96xf32>
    %31 = arith.addf %28, %30 : vector<8x96xf32>
    %32 = vector.extract_strided_slice %31 {offsets = [0, 0], sizes = [8, 32], strides = [1, 1]} : vector<8x96xf32> to vector<8x32xf32>
    %33 = arith.truncf %32 : vector<8x32xf32> to vector<8x32xbf16>
    %c0_15 = arith.constant 0 : index
    %c0_16 = arith.constant 0 : index
    %c0_17 = arith.constant 0 : index
    %34 = vector.load %arg7[%c0_15, %c0_16, %c0_17] : memref<1x8x32xbf16, #tpu.memory_space<vmem>>, vector<1x8x32xbf16>
    %35 = vector.shape_cast %34 : vector<1x8x32xbf16> to vector<8x32xbf16>
    %36 = vector.shape_cast %33 : vector<8x32xbf16> to vector<1x8x32xbf16>
    tpu.vector_store %arg7[%c0_15, %c0_16, %c0_17], %36 {strides = array<i32>} : memref<1x8x32xbf16, #tpu.memory_space<vmem>>, vector<1x8x32xbf16>,
    %37 = vector.extract_strided_slice %31 {offsets = [0, 32], sizes = [8, 32], strides = [1, 1]} : vector<8x96xf32> to vector<8x32xf32>
    %38 = arith.truncf %37 : vector<8x32xf32> to vector<8x32xbf16>
    %c0_18 = arith.constant 0 : index
    %c0_19 = arith.constant 0 : index
    %c0_20 = arith.constant 0 : index
    %39 = vector.load %arg8[%c0_18, %c0_19, %c0_20] : memref<1x8x32xbf16, #tpu.memory_space<vmem>>, vector<1x8x32xbf16>
    %40 = vector.shape_cast %39 : vector<1x8x32xbf16> to vector<8x32xbf16>
    %41 = vector.shape_cast %38 : vector<8x32xbf16> to vector<1x8x32xbf16>
    tpu.vector_store %arg8[%c0_18, %c0_19, %c0_20], %41 {strides = array<i32>} : memref<1x8x32xbf16, #tpu.memory_space<vmem>>, vector<1x8x32xbf16>,
    %42 = vector.extract_strided_slice %31 {offsets = [0, 64], sizes = [8, 32], strides = [1, 1]} : vector<8x96xf32> to vector<8x32xf32>
    %43 = arith.truncf %42 : vector<8x32xf32> to vector<8x32xbf16>
    %c0_21 = arith.constant 0 : index
    %c0_22 = arith.constant 0 : index
    %c0_23 = arith.constant 0 : index
    %44 = vector.load %arg9[%c0_21, %c0_22, %c0_23] : memref<1x8x32xbf16, #tpu.memory_space<vmem>>, vector<1x8x32xbf16>
    %45 = vector.shape_cast %44 : vector<1x8x32xbf16> to vector<8x32xbf16>
    %46 = vector.shape_cast %43 : vector<8x32xbf16> to vector<1x8x32xbf16>
    tpu.vector_store %arg9[%c0_21, %c0_22, %c0_23], %46 {strides = array<i32>} : memref<1x8x32xbf16, #tpu.memory_space<vmem>>, vector<1x8x32xbf16>,
    return
  }
  func.func @transform_0(%arg0: i32, %arg1: i32) -> (i32, i32, i32) {
    %c0_i32 = arith.constant 0 : i32
    %c0_i32_0 = arith.constant 0 : i32
    return %arg0, %arg1, %c0_i32 : i32, i32, i32
  }
  func.func @transform_1(%arg0: i32, %arg1: i32) -> (i32, i32) {
    %c0_i32 = arith.constant 0 : i32
    %c0_i32_0 = arith.constant 0 : i32
    %c0_i32_1 = arith.constant 0 : i32
    return %c0_i32, %c0_i32_0 : i32, i32
  }
  func.func @transform_2(%arg0: i32, %arg1: i32) -> (i32, i32) {
    %c0_i32 = arith.constant 0 : i32
    %c0_i32_0 = arith.constant 0 : i32
    %c0_i32_1 = arith.constant 0 : i32
    return %c0_i32, %c0_i32_0 : i32, i32
  }
  func.func @transform_3(%arg0: i32, %arg1: i32) -> (i32, i32) {
    %c0_i32 = arith.constant 0 : i32
    %c0_i32_0 = arith.constant 0 : i32
    %c0_i32_1 = arith.constant 0 : i32
    return %c0_i32, %c0_i32_0 : i32, i32
  }
  func.func @transform_4(%arg0: i32, %arg1: i32) -> (i32, i32) {
    %c0_i32 = arith.constant 0 : i32
    %c0_i32_0 = arith.constant 0 : i32
    %c0_i32_1 = arith.constant 0 : i32
    return %c0_i32, %c0_i32_0 : i32, i32
  }
  func.func @transform_5(%arg0: i32, %arg1: i32) -> (i32, i32, i32) {
    %c0_i32 = arith.constant 0 : i32
    %c0_i32_0 = arith.constant 0 : i32
    return %arg0, %arg1, %c0_i32 : i32, i32, i32
  }
  func.func @transform_6(%arg0: i32, %arg1: i32) -> (i32, i32, i32) {
    %c0_i32 = arith.constant 0 : i32
    %c0_i32_0 = arith.constant 0 : i32
    return %arg0, %arg1, %c0_i32 : i32, i32, i32
  }
  func.func @transform_7(%arg0: i32, %arg1: i32) -> (i32, i32, i32) {
    %c0_i32 = arith.constant 0 : i32
    %c0_i32_0 = arith.constant 0 : i32
    return %arg0, %arg1, %c0_i32 : i32, i32, i32
  }
}

module attributes {stable_mosaic.version = 11 : i64} {
  func.func @_proj_mlp_kernel(%arg0: i32, %arg1: i32, %arg2: memref<1x8x32xf32, #tpu.memory_space<vmem>>, %arg3: memref<1x8x32xbf16, #tpu.memory_space<vmem>>, %arg4: memref<32x32xbf16, #tpu.memory_space<vmem>>, %arg5: memref<1x32xf32, #tpu.memory_space<vmem>>, %arg6: memref<1x32xf32, #tpu.memory_space<vmem>>, %arg7: memref<1x32xf32, #tpu.memory_space<vmem>>, %arg8: memref<32x128xbf16, #tpu.memory_space<vmem>>, %arg9: memref<1x128xf32, #tpu.memory_space<vmem>>, %arg10: memref<128x32xbf16, #tpu.memory_space<vmem>>, %arg11: memref<1x32xf32, #tpu.memory_space<vmem>>, %arg12: memref<1x8x32xf32, #tpu.memory_space<vmem>>) attributes {dimension_semantics = [#tpu.dimension_semantics<parallel>, #tpu.dimension_semantics<parallel>], iteration_bounds = array<i64: 2, 1>, scalar_prefetch = 0 : i64, scratch_operands = 0 : i64, tpu.core_type = #tpu.core_type<tc>, window_params = [{transform_indices = @transform_0, window_bounds = array<i64: 1, 8, 32>}, {transform_indices = @transform_1, window_bounds = array<i64: 1, 8, 32>}, {pipeline_mode = #tpu.pipeline_mode<synchronous>, transform_indices = @transform_2, window_bounds = array<i64: 32, 32>}, {pipeline_mode = #tpu.pipeline_mode<synchronous>, transform_indices = @transform_3, window_bounds = array<i64: 1, 32>}, {pipeline_mode = #tpu.pipeline_mode<synchronous>, transform_indices = @transform_4, window_bounds = array<i64: 1, 32>}, {pipeline_mode = #tpu.pipeline_mode<synchronous>, transform_indices = @transform_5, window_bounds = array<i64: 1, 32>}, {pipeline_mode = #tpu.pipeline_mode<synchronous>, transform_indices = @transform_6, window_bounds = array<i64: 32, 128>}, {pipeline_mode = #tpu.pipeline_mode<synchronous>, transform_indices = @transform_7, window_bounds = array<i64: 1, 128>}, {pipeline_mode = #tpu.pipeline_mode<synchronous>, transform_indices = @transform_8, window_bounds = array<i64: 128, 32>}, {pipeline_mode = #tpu.pipeline_mode<synchronous>, transform_indices = @transform_9, window_bounds = array<i64: 1, 32>}, {transform_indices = @transform_10, window_bounds = array<i64: 1, 8, 32>}]} {
    %c0 = arith.constant 0 : index
    %c0_0 = arith.constant 0 : index
    %c0_1 = arith.constant 0 : index
    %0 = vector.load %arg2[%c0, %c0_0, %c0_1] : memref<1x8x32xf32, #tpu.memory_space<vmem>>, vector<1x8x32xf32>
    %1 = vector.shape_cast %0 : vector<1x8x32xf32> to vector<8x32xf32>
    %c0_2 = arith.constant 0 : index
    %c0_3 = arith.constant 0 : index
    %c0_4 = arith.constant 0 : index
    %2 = vector.load %arg3[%c0_2, %c0_3, %c0_4] : memref<1x8x32xbf16, #tpu.memory_space<vmem>>, vector<1x8x32xbf16>
    %3 = vector.shape_cast %2 : vector<1x8x32xbf16> to vector<8x32xbf16>
    %c0_5 = arith.constant 0 : index
    %c0_6 = arith.constant 0 : index
    %4 = vector.load %arg4[%c0_5, %c0_6] : memref<32x32xbf16, #tpu.memory_space<vmem>>, vector<32x32xbf16>
    %cst = arith.constant dense<0.000000e+00> : vector<8x32xf32>
    %5 = tpu.matmul %3, %4, %cst {dimension_numbers = #tpu.dot_dimension_numbers<[1], [0], [0], [1], [0, 0, 1, 1], [], []>} : vector<8x32xbf16>, vector<32x32xbf16>, vector<8x32xf32> -> vector<8x32xf32>
    %6 = arith.addf %1, %5 : vector<8x32xf32>
    %c0_7 = arith.constant 0 : index
    %c0_8 = arith.constant 0 : index
    %7 = vector.load %arg5[%c0_7, %c0_8] : memref<1x32xf32, #tpu.memory_space<vmem>>, vector<1x32xf32>
    %8 = vector.broadcast %7 : vector<1x32xf32> to vector<8x32xf32>
    %9 = arith.addf %6, %8 : vector<8x32xf32>
    %c0_9 = arith.constant 0 : index
    %c0_10 = arith.constant 0 : index
    %10 = vector.load %arg6[%c0_9, %c0_10] : memref<1x32xf32, #tpu.memory_space<vmem>>, vector<1x32xf32>
    %c0_11 = arith.constant 0 : index
    %c0_12 = arith.constant 0 : index
    %11 = vector.load %arg7[%c0_11, %c0_12] : memref<1x32xf32, #tpu.memory_space<vmem>>, vector<1x32xf32>
    %cst_13 = arith.constant dense<0.000000e+00> : vector<8xf32>
    %12 = vector.multi_reduction <add>, %9, %cst_13 [1] : vector<8x32xf32> to vector<8xf32>
    %13 = vector.shape_cast %12 : vector<8xf32> to vector<8x1xf32>
    %cst_14 = arith.constant 3.200000e+01 : f32
    %14 = vector.broadcast %cst_14 : f32 to vector<8x1xf32>
    %15 = arith.divf %13, %14 : vector<8x1xf32>
    %16 = vector.broadcast %15 : vector<8x1xf32> to vector<8x32xf32>
    %17 = arith.subf %9, %16 : vector<8x32xf32>
    %18 = arith.mulf %17, %17 : vector<8x32xf32>
    %cst_15 = arith.constant dense<0.000000e+00> : vector<8xf32>
    %19 = vector.multi_reduction <add>, %18, %cst_15 [1] : vector<8x32xf32> to vector<8xf32>
    %20 = vector.shape_cast %19 : vector<8xf32> to vector<8x1xf32>
    %cst_16 = arith.constant 3.200000e+01 : f32
    %21 = vector.broadcast %cst_16 : f32 to vector<8x1xf32>
    %22 = arith.divf %20, %21 : vector<8x1xf32>
    %23 = vector.broadcast %15 : vector<8x1xf32> to vector<8x32xf32>
    %24 = arith.subf %9, %23 : vector<8x32xf32>
    %cst_17 = arith.constant 9.99999974E-6 : f32
    %25 = vector.broadcast %cst_17 : f32 to vector<8x1xf32>
    %26 = arith.addf %22, %25 : vector<8x1xf32>
    %27 = math.rsqrt %26 : vector<8x1xf32>
    %28 = vector.broadcast %27 : vector<8x1xf32> to vector<8x32xf32>
    %29 = arith.mulf %24, %28 : vector<8x32xf32>
    %30 = vector.broadcast %10 : vector<1x32xf32> to vector<8x32xf32>
    %31 = arith.mulf %29, %30 : vector<8x32xf32>
    %32 = vector.broadcast %11 : vector<1x32xf32> to vector<8x32xf32>
    %33 = arith.addf %31, %32 : vector<8x32xf32>
    %34 = arith.truncf %33 : vector<8x32xf32> to vector<8x32xbf16>
    %c0_18 = arith.constant 0 : index
    %c0_19 = arith.constant 0 : index
    %35 = vector.load %arg8[%c0_18, %c0_19] : memref<32x128xbf16, #tpu.memory_space<vmem>>, vector<32x128xbf16>
    %cst_20 = arith.constant dense<0.000000e+00> : vector<8x128xf32>
    %36 = tpu.matmul %34, %35, %cst_20 {dimension_numbers = #tpu.dot_dimension_numbers<[1], [0], [0], [1], [0, 0, 1, 1], [], []>} : vector<8x32xbf16>, vector<32x128xbf16>, vector<8x128xf32> -> vector<8x128xf32>
    %c0_21 = arith.constant 0 : index
    %c0_22 = arith.constant 0 : index
    %37 = vector.load %arg9[%c0_21, %c0_22] : memref<1x128xf32, #tpu.memory_space<vmem>>, vector<1x128xf32>
    %38 = vector.broadcast %37 : vector<1x128xf32> to vector<8x128xf32>
    %39 = arith.addf %36, %38 : vector<8x128xf32>
    %cst_23 = arith.constant 5.000000e-01 : f32
    %40 = vector.broadcast %cst_23 : f32 to vector<8x128xf32>
    %41 = arith.mulf %40, %39 : vector<8x128xf32>
    %cst_24 = arith.constant 4.471500e-02 : f32
    %42 = vector.broadcast %cst_24 : f32 to vector<8x128xf32>
    %43 = arith.mulf %42, %39 : vector<8x128xf32>
    %44 = arith.mulf %43, %39 : vector<8x128xf32>
    %45 = arith.mulf %44, %39 : vector<8x128xf32>
    %46 = arith.addf %39, %45 : vector<8x128xf32>
    %cst_25 = arith.constant 0.797884583 : f32
    %47 = vector.broadcast %cst_25 : f32 to vector<8x128xf32>
    %48 = arith.mulf %47, %46 : vector<8x128xf32>
    %49 = math.tanh %48 : vector<8x128xf32>
    %cst_26 = arith.constant 1.000000e+00 : f32
    %50 = vector.broadcast %cst_26 : f32 to vector<8x128xf32>
    %51 = arith.addf %50, %49 : vector<8x128xf32>
    %52 = arith.mulf %41, %51 : vector<8x128xf32>
    %53 = arith.truncf %52 : vector<8x128xf32> to vector<8x128xbf16>
    %c0_27 = arith.constant 0 : index
    %c0_28 = arith.constant 0 : index
    %54 = vector.load %arg10[%c0_27, %c0_28] : memref<128x32xbf16, #tpu.memory_space<vmem>>, vector<128x32xbf16>
    %cst_29 = arith.constant dense<0.000000e+00> : vector<8x32xf32>
    %55 = tpu.matmul %53, %54, %cst_29 {dimension_numbers = #tpu.dot_dimension_numbers<[1], [0], [0], [1], [0, 0, 1, 1], [], []>} : vector<8x128xbf16>, vector<128x32xbf16>, vector<8x32xf32> -> vector<8x32xf32>
    %56 = arith.addf %9, %55 : vector<8x32xf32>
    %c0_30 = arith.constant 0 : index
    %c0_31 = arith.constant 0 : index
    %57 = vector.load %arg11[%c0_30, %c0_31] : memref<1x32xf32, #tpu.memory_space<vmem>>, vector<1x32xf32>
    %58 = vector.broadcast %57 : vector<1x32xf32> to vector<8x32xf32>
    %59 = arith.addf %56, %58 : vector<8x32xf32>
    %c0_32 = arith.constant 0 : index
    %c0_33 = arith.constant 0 : index
    %c0_34 = arith.constant 0 : index
    %60 = vector.load %arg12[%c0_32, %c0_33, %c0_34] : memref<1x8x32xf32, #tpu.memory_space<vmem>>, vector<1x8x32xf32>
    %61 = vector.shape_cast %60 : vector<1x8x32xf32> to vector<8x32xf32>
    %62 = vector.shape_cast %59 : vector<8x32xf32> to vector<1x8x32xf32>
    tpu.vector_store %arg12[%c0_32, %c0_33, %c0_34], %62 {strides = array<i32>} : memref<1x8x32xf32, #tpu.memory_space<vmem>>, vector<1x8x32xf32>,
    return
  }
  func.func @transform_0(%arg0: i32, %arg1: i32) -> (i32, i32, i32) {
    %c0_i32 = arith.constant 0 : i32
    %c0_i32_0 = arith.constant 0 : i32
    return %arg0, %arg1, %c0_i32 : i32, i32, i32
  }
  func.func @transform_1(%arg0: i32, %arg1: i32) -> (i32, i32, i32) {
    %c0_i32 = arith.constant 0 : i32
    %c0_i32_0 = arith.constant 0 : i32
    return %arg0, %arg1, %c0_i32 : i32, i32, i32
  }
  func.func @transform_2(%arg0: i32, %arg1: i32) -> (i32, i32) {
    %c0_i32 = arith.constant 0 : i32
    %c0_i32_0 = arith.constant 0 : i32
    %c0_i32_1 = arith.constant 0 : i32
    return %c0_i32, %c0_i32_0 : i32, i32
  }
  func.func @transform_3(%arg0: i32, %arg1: i32) -> (i32, i32) {
    %c0_i32 = arith.constant 0 : i32
    %c0_i32_0 = arith.constant 0 : i32
    %c0_i32_1 = arith.constant 0 : i32
    return %c0_i32, %c0_i32_0 : i32, i32
  }
  func.func @transform_4(%arg0: i32, %arg1: i32) -> (i32, i32) {
    %c0_i32 = arith.constant 0 : i32
    %c0_i32_0 = arith.constant 0 : i32
    %c0_i32_1 = arith.constant 0 : i32
    return %c0_i32, %c0_i32_0 : i32, i32
  }
  func.func @transform_5(%arg0: i32, %arg1: i32) -> (i32, i32) {
    %c0_i32 = arith.constant 0 : i32
    %c0_i32_0 = arith.constant 0 : i32
    %c0_i32_1 = arith.constant 0 : i32
    return %c0_i32, %c0_i32_0 : i32, i32
  }
  func.func @transform_6(%arg0: i32, %arg1: i32) -> (i32, i32) {
    %c0_i32 = arith.constant 0 : i32
    %c0_i32_0 = arith.constant 0 : i32
    %c0_i32_1 = arith.constant 0 : i32
    return %c0_i32, %c0_i32_0 : i32, i32
  }
  func.func @transform_7(%arg0: i32, %arg1: i32) -> (i32, i32) {
    %c0_i32 = arith.constant 0 : i32
    %c0_i32_0 = arith.constant 0 : i32
    %c0_i32_1 = arith.constant 0 : i32
    return %c0_i32, %c0_i32_0 : i32, i32
  }
  func.func @transform_8(%arg0: i32, %arg1: i32) -> (i32, i32) {
    %c0_i32 = arith.constant 0 : i32
    %c0_i32_0 = arith.constant 0 : i32
    %c0_i32_1 = arith.constant 0 : i32
    return %c0_i32, %c0_i32_0 : i32, i32
  }
  func.func @transform_9(%arg0: i32, %arg1: i32) -> (i32, i32) {
    %c0_i32 = arith.constant 0 : i32
    %c0_i32_0 = arith.constant 0 : i32
    %c0_i32_1 = arith.constant 0 : i32
    return %c0_i32, %c0_i32_0 : i32, i32
  }
  func.func @transform_10(%arg0: i32, %arg1: i32) -> (i32, i32, i32) {
    %c0_i32 = arith.constant 0 : i32
    %c0_i32_0 = arith.constant 0 : i32
    return %arg0, %arg1, %c0_i32 : i32, i32, i32
  }
}

module attributes {stable_mosaic.version = 11 : i64} {
  func.func @_head_kernel(%arg0: i32, %arg1: i32, %arg2: i32, %arg3: memref<1x8x32xf32, #tpu.memory_space<vmem>>, %arg4: memref<1x32xf32, #tpu.memory_space<vmem>>, %arg5: memref<1x32xf32, #tpu.memory_space<vmem>>, %arg6: memref<32x128xbf16, #tpu.memory_space<vmem>>, %arg7: memref<1x8x128xf32, #tpu.memory_space<vmem>>) attributes {dimension_semantics = [#tpu.dimension_semantics<parallel>, #tpu.dimension_semantics<parallel>, #tpu.dimension_semantics<parallel>], iteration_bounds = array<i64: 1, 2, 1>, scalar_prefetch = 0 : i64, scratch_operands = 0 : i64, tpu.core_type = #tpu.core_type<tc>, window_params = [{transform_indices = @transform_0, window_bounds = array<i64: 1, 8, 32>}, {pipeline_mode = #tpu.pipeline_mode<synchronous>, transform_indices = @transform_1, window_bounds = array<i64: 1, 32>}, {pipeline_mode = #tpu.pipeline_mode<synchronous>, transform_indices = @transform_2, window_bounds = array<i64: 1, 32>}, {transform_indices = @transform_3, window_bounds = array<i64: 32, 128>}, {transform_indices = @transform_4, window_bounds = array<i64: 1, 8, 128>}]} {
    %c0 = arith.constant 0 : index
    %c0_0 = arith.constant 0 : index
    %c0_1 = arith.constant 0 : index
    %0 = vector.load %arg3[%c0, %c0_0, %c0_1] : memref<1x8x32xf32, #tpu.memory_space<vmem>>, vector<1x8x32xf32>
    %1 = vector.shape_cast %0 : vector<1x8x32xf32> to vector<8x32xf32>
    %c0_2 = arith.constant 0 : index
    %c0_3 = arith.constant 0 : index
    %2 = vector.load %arg4[%c0_2, %c0_3] : memref<1x32xf32, #tpu.memory_space<vmem>>, vector<1x32xf32>
    %c0_4 = arith.constant 0 : index
    %c0_5 = arith.constant 0 : index
    %3 = vector.load %arg5[%c0_4, %c0_5] : memref<1x32xf32, #tpu.memory_space<vmem>>, vector<1x32xf32>
    %cst = arith.constant dense<0.000000e+00> : vector<8xf32>
    %4 = vector.multi_reduction <add>, %1, %cst [1] : vector<8x32xf32> to vector<8xf32>
    %5 = vector.shape_cast %4 : vector<8xf32> to vector<8x1xf32>
    %cst_6 = arith.constant 3.200000e+01 : f32
    %6 = vector.broadcast %cst_6 : f32 to vector<8x1xf32>
    %7 = arith.divf %5, %6 : vector<8x1xf32>
    %8 = vector.broadcast %7 : vector<8x1xf32> to vector<8x32xf32>
    %9 = arith.subf %1, %8 : vector<8x32xf32>
    %10 = arith.mulf %9, %9 : vector<8x32xf32>
    %cst_7 = arith.constant dense<0.000000e+00> : vector<8xf32>
    %11 = vector.multi_reduction <add>, %10, %cst_7 [1] : vector<8x32xf32> to vector<8xf32>
    %12 = vector.shape_cast %11 : vector<8xf32> to vector<8x1xf32>
    %cst_8 = arith.constant 3.200000e+01 : f32
    %13 = vector.broadcast %cst_8 : f32 to vector<8x1xf32>
    %14 = arith.divf %12, %13 : vector<8x1xf32>
    %15 = vector.broadcast %7 : vector<8x1xf32> to vector<8x32xf32>
    %16 = arith.subf %1, %15 : vector<8x32xf32>
    %cst_9 = arith.constant 9.99999974E-6 : f32
    %17 = vector.broadcast %cst_9 : f32 to vector<8x1xf32>
    %18 = arith.addf %14, %17 : vector<8x1xf32>
    %19 = math.rsqrt %18 : vector<8x1xf32>
    %20 = vector.broadcast %19 : vector<8x1xf32> to vector<8x32xf32>
    %21 = arith.mulf %16, %20 : vector<8x32xf32>
    %22 = vector.broadcast %2 : vector<1x32xf32> to vector<8x32xf32>
    %23 = arith.mulf %21, %22 : vector<8x32xf32>
    %24 = vector.broadcast %3 : vector<1x32xf32> to vector<8x32xf32>
    %25 = arith.addf %23, %24 : vector<8x32xf32>
    %26 = arith.truncf %25 : vector<8x32xf32> to vector<8x32xbf16>
    %c0_10 = arith.constant 0 : index
    %c0_11 = arith.constant 0 : index
    %27 = vector.load %arg6[%c0_10, %c0_11] : memref<32x128xbf16, #tpu.memory_space<vmem>>, vector<32x128xbf16>
    %cst_12 = arith.constant dense<0.000000e+00> : vector<8x128xf32>
    %28 = tpu.matmul %26, %27, %cst_12 {dimension_numbers = #tpu.dot_dimension_numbers<[1], [0], [0], [1], [0, 0, 1, 1], [], []>} : vector<8x32xbf16>, vector<32x128xbf16>, vector<8x128xf32> -> vector<8x128xf32>
    %c0_13 = arith.constant 0 : index
    %c0_14 = arith.constant 0 : index
    %c0_15 = arith.constant 0 : index
    %29 = vector.load %arg7[%c0_13, %c0_14, %c0_15] : memref<1x8x128xf32, #tpu.memory_space<vmem>>, vector<1x8x128xf32>
    %30 = vector.shape_cast %29 : vector<1x8x128xf32> to vector<8x128xf32>
    %31 = vector.shape_cast %28 : vector<8x128xf32> to vector<1x8x128xf32>
    tpu.vector_store %arg7[%c0_13, %c0_14, %c0_15], %31 {strides = array<i32>} : memref<1x8x128xf32, #tpu.memory_space<vmem>>, vector<1x8x128xf32>,
    return
  }
  func.func @transform_0(%arg0: i32, %arg1: i32, %arg2: i32) -> (i32, i32, i32) {
    %c0_i32 = arith.constant 0 : i32
    %c0_i32_0 = arith.constant 0 : i32
    return %arg1, %arg2, %c0_i32 : i32, i32, i32
  }
  func.func @transform_1(%arg0: i32, %arg1: i32, %arg2: i32) -> (i32, i32) {
    %c0_i32 = arith.constant 0 : i32
    %c0_i32_0 = arith.constant 0 : i32
    %c0_i32_1 = arith.constant 0 : i32
    return %c0_i32, %c0_i32_0 : i32, i32
  }
  func.func @transform_2(%arg0: i32, %arg1: i32, %arg2: i32) -> (i32, i32) {
    %c0_i32 = arith.constant 0 : i32
    %c0_i32_0 = arith.constant 0 : i32
    %c0_i32_1 = arith.constant 0 : i32
    return %c0_i32, %c0_i32_0 : i32, i32
  }
  func.func @transform_3(%arg0: i32, %arg1: i32, %arg2: i32) -> (i32, i32) {
    %c0_i32 = arith.constant 0 : i32
    %c0_i32_0 = arith.constant 0 : i32
    return %c0_i32, %arg0 : i32, i32
  }
  func.func @transform_4(%arg0: i32, %arg1: i32, %arg2: i32) -> (i32, i32, i32) {
    %c0_i32 = arith.constant 0 : i32
    return %arg1, %arg2, %arg0 : i32, i32, i32
  }
}

</mosaic_0001>

<llo_original>
// kernel: gigachad_forward.13
$region0: #{gigachad_forward.13}
  #allocation0 [shape = 'u32[]', space=smem, size = 0x4, offset = 0x4, fixed_abs, tag = 'smem constant byte address 0x4 - core index']
  #allocation1 [shape = 'u32[144,128]{1,0:T(1,128)}', space=vmem, size = 0x12000, scoped, tag = 'internal scratch']
  %s0 = inlined_call_operand.hbm [shape: f32[2,8,32], index: 0, kind: input, shape index: {}]
  %s1 = inlined_call_operand.hbm [shape: f32[1,32], index: 1, kind: input, shape index: {}]
  %s2 = inlined_call_operand.hbm [shape: f32[1,32], index: 2, kind: input, shape index: {}]
  %s3 = inlined_call_operand.hbm [shape: bf16[32,128], index: 3, kind: input, shape index: {}]
  %s4 = inlined_call_operand.hbm [shape: f32[2,8,128], index: 4, kind: output, shape index: {}]
  %s5 = sld [smem:[#allocation0]]
  $region65: #{gigachad_forward.13} parent=0
    _
  %s7 = ssub.s32 1, %s5
  %s8 = scalar_select 0, %s7, %s5
  $region1: #{gigachad_forward.13} parent=0
    #allocation2 [shape = 'u8[8192]{0}', space=vmem, size = 0x2000, scoped, tag = 'input window, operand 0']
    #allocation3 [shape = 's32[2]{0}', space=sflag, size = 0x8, scoped, tag = 'scoped memory for gigachad_forward.13']
    #allocation4 [shape = 's32[2]{0}', space=sflag, size = 0x8, scoped, tag = 'scoped memory for gigachad_forward.13']
    #allocation5 [shape = 'u8[512]{0}', space=vmem, size = 0x400, scoped, tag = 'input window, operand 1, single buffered']
    #allocation6 [shape = 's32[1]{0}', space=sflag, size = 0x4, scoped, tag = 'scoped memory for gigachad_forward.13']
    #allocation7 [shape = 'u8[512]{0}', space=vmem, size = 0x400, scoped, tag = 'input window, operand 2, single buffered']
    #allocation8 [shape = 'u8[8192]{0}', space=vmem, size = 0x2000, scoped, tag = 'input window, operand 3, single buffered']
    #allocation9 [shape = 's32[1]{0}', space=sflag, size = 0x4, scoped, tag = 'scoped memory for gigachad_forward.13']
    #allocation10 [shape = 'u8[8192]{0}', space=vmem, size = 0x2000, scoped, tag = 'output window, operand 0']
    %9 = vsyncpa [#allocation3], 0
    %s10 = scalar_lea.sflag [#allocation3], 1
    %11 = vsyncpa %s10, 0
    %12 = vsyncpa [#allocation6], 0
    %13 = vsyncpa [#allocation9], 0
    %14 = vsyncpa [#allocation4], 0
    %s15 = scalar_lea.sflag [#allocation4], 1
    %16 = vsyncpa %s15, 0
    loop: start=0, step=1, limit=4
    $region2: #{gigachad_forward.13} parent=1 // loop_pre_header
      _
    $region3: #{gigachad_forward.13} parent=1 // loop_header
      %s18 = sphi 0, %s22
      %p19 = scmp.ge.s32.totalorder %s18, 4
      %s25 = sphi 0, %s44
      %s26 = sphi 0, %s40
      %s27 = sphi 0, %s36
      %s28 = sphi 0, %s25
      %s29 = sphi 0, %s26
      %s30 = sphi 0, %s27
      %s31 = sphi 0, %s28
      %s32 = sphi 0, %s29
      %s33 = sphi 0, %s30
      %s49 = sphi 0, %s51
      %s52 = sphi 0, %s49
      %s53 = sphi 0, %s52
      %s69 = sphi 0, %s53
      %s73 = sphi 0, %s73
      %s75 = sphi 0, %s73
      %s76 = sphi 0, %s75
      %s90 = sphi 0, %s76
      %s94 = sphi 0, %s94
      %s96 = sphi 0, %s94
      %s97 = sphi 0, %s96
      %s111 = sphi 0, %s97
      %s117 = sphi 0, %s119
      %s120 = sphi 0, %s117
      %s121 = sphi 0, %s120
      %s137 = sphi 0, %s121
      %s147 = sphi 0, %s149
      %s150 = sphi 0, %s147
      %s151 = sphi 0, %s150
      %s167 = sphi 0, %s151
    $region4: #{gigachad_forward.13} parent=1 // loop_header_branch
      %21 = sbr.rel (%p19) target = $region8
    $region5: #{gigachad_forward.13} parent=1 // loop_body
      %s23 = ssub.s32 %s18, 1
      %s24 = ssub.s32 %s18, 2
      %s34 = sadd.s32 1, %s27
      %p35 = scmp.ge.s32.totalorder %s34, 1
      %s36 = scalar_select %p35, 0, %s34
      %s37 = sadd.s32 1, %s26
      %s38 = scalar_select %p35, %s37, %s26
      %p39 = scmp.ge.s32.totalorder %s38, 2
      %s40 = scalar_select %p39, 0, %s38
      %s41 = sadd.s32 1, %s25
      %s42 = scalar_select %p39, %s41, %s25
      %p43 = scmp.ge.s32.totalorder %s42, 1
      %s44 = scalar_select %p43, 0, %s42
      %s45 = ssub.s32 %s26, %s40
      %s46 = ssub.s32 %s27, %s36
      %s47 = sor.u32 %s45, %s46
      %p48 = scmp.eq.s32.totalorder %s47, 0
      %s50 = sadd.s32 %s49, 1
      %s51 = scalar_select %p48, %s49, %s50
      %p54 = pneg %p48
      %p55 = scmp.eq.s32.totalorder %s18, 1
      %p56 = por %p54, %p55
      %p57 = scmp.ne.s32.totalorder %s49, %s52
      %p58 = scmp.eq.s32.totalorder %s18, 0
      %p59 = por %p57, %p58
      %p60 = scmp.ne.s32.totalorder %s49, %s52
      %p61 = scmp.eq.s32.totalorder %s23, 1
      %p62 = por %p60, %p61
      %p63 = scmp.ne.s32.totalorder %s52, %s53
      %p64 = scmp.eq.s32.totalorder %s23, 0
      %p65 = por %p63, %p64
      %p66 = scmp.ne.s32.totalorder %s52, %s53
      %p67 = scmp.eq.s32.totalorder %s24, 1
      %p68 = por %p66, %p67
      %p70 = scmp.ne.s32.totalorder %s53, %s69
      %p71 = scmp.eq.s32.totalorder %s24, 0
      %p72 = por %p70, %p71
      %s74 = sadd.s32 %s73, 1
      %p77 = scmp.eq.s32.totalorder %s18, 1
      %p78 = scmp.ne.s32.totalorder %s73, %s75
      %p79 = scmp.eq.s32.totalorder %s18, 0
      %p80 = por %p78, %p79
      %p81 = scmp.ne.s32.totalorder %s73, %s75
      %p82 = scmp.eq.s32.totalorder %s23, 1
      %p83 = por %p81, %p82
      %p84 = scmp.ne.s32.totalorder %s75, %s76
      %p85 = scmp.eq.s32.totalorder %s23, 0
      %p86 = por %p84, %p85
      %p87 = scmp.ne.s32.totalorder %s75, %s76
      %p88 = scmp.eq.s32.totalorder %s24, 1
      %p89 = por %p87, %p88
      %p91 = scmp.ne.s32.totalorder %s76, %s90
      %p92 = scmp.eq.s32.totalorder %s24, 0
      %p93 = por %p91, %p92
      %s95 = sadd.s32 %s94, 1
      %p98 = scmp.eq.s32.totalorder %s18, 1
      %p99 = scmp.ne.s32.totalorder %s94, %s96
      %p100 = scmp.eq.s32.totalorder %s18, 0
      %p101 = por %p99, %p100
      %p102 = scmp.ne.s32.totalorder %s94, %s96
      %p103 = scmp.eq.s32.totalorder %s23, 1
      %p104 = por %p102, %p103
      %p105 = scmp.ne.s32.totalorder %s96, %s97
      %p106 = scmp.eq.s32.totalorder %s23, 0
      %p107 = por %p105, %p106
      %p108 = scmp.ne.s32.totalorder %s96, %s97
      %p109 = scmp.eq.s32.totalorder %s24, 1
      %p110 = por %p108, %p109
      %p112 = scmp.ne.s32.totalorder %s97, %s111
      %p113 = scmp.eq.s32.totalorder %s24, 0
      %p114 = por %p112, %p113
      %s115 = ssub.s32 %s25, %s44
      %p116 = scmp.eq.s32.totalorder %s115, 0
      %s118 = sadd.s32 %s117, 1
      %s119 = scalar_select %p116, %s117, %s118
      %p122 = pneg %p116
      %p123 = scmp.eq.s32.totalorder %s18, 1
      %p124 = por %p122, %p123
      %p125 = scmp.ne.s32.totalorder %s117, %s120
      %p126 = scmp.eq.s32.totalorder %s18, 0
      %p127 = por %p125, %p126
      %p128 = scmp.ne.s32.totalorder %s117, %s120
      %p129 = scmp.eq.s32.totalorder %s23, 1
      %p130 = por %p128, %p129
      %p131 = scmp.ne.s32.totalorder %s120, %s121
      %p132 = scmp.eq.s32.totalorder %s23, 0
      %p133 = por %p131, %p132
      %p134 = scmp.ne.s32.totalorder %s120, %s121
      %p135 = scmp.eq.s32.totalorder %s24, 1
      %p136 = por %p134, %p135
      %p138 = scmp.ne.s32.totalorder %s121, %s137
      %p139 = scmp.eq.s32.totalorder %s24, 0
      %p140 = por %p138, %p139
      %s141 = ssub.s32 %s26, %s40
      %s142 = ssub.s32 %s27, %s36
      %s143 = sor.u32 %s141, %s142
      %s144 = ssub.s32 %s25, %s44
      %s145 = sor.u32 %s143, %s144
      %p146 = scmp.eq.s32.totalorder %s145, 0
      %s148 = sadd.s32 %s147, 1
      %s149 = scalar_select %p146, %s147, %s148
      %p152 = pneg %p146
      %p153 = scmp.eq.s32.totalorder %s18, 1
      %p154 = por %p152, %p153
      %p155 = scmp.ne.s32.totalorder %s147, %s150
      %p156 = scmp.eq.s32.totalorder %s18, 0
      %p157 = por %p155, %p156
      %p158 = scmp.ne.s32.totalorder %s147, %s150
      %p159 = scmp.eq.s32.totalorder %s23, 1
      %p160 = por %p158, %p159
      %p161 = scmp.ne.s32.totalorder %s150, %s151
      %p162 = scmp.eq.s32.totalorder %s23, 0
      %p163 = por %p161, %p162
      %p164 = scmp.ne.s32.totalorder %s150, %s151
      %p165 = scmp.eq.s32.totalorder %s24, 1
      %p166 = por %p164, %p165
      %p168 = scmp.ne.s32.totalorder %s151, %s167
      %p169 = scmp.eq.s32.totalorder %s24, 0
      %p170 = por %p168, %p169
      %p171 = scmp.le.s32.totalorder 1, %s18
      %p172 = scmp.lt.s32.totalorder %s18, 3
      %p173 = pnand %p171, %p172
      %p174 = pneg %p173
      // Predicated region
      $region9: #{gigachad_forward.13} parent=5 // pred_check
        _
      $region10: #{gigachad_forward.13} parent=5 // pred_check_branch
        %176 = sbr.rel (%p173) target = $region12
      $region11: #{gigachad_forward.13} parent=5 // pred_region
        %s177 = ssub.s32 %s18, 1
        // Predicated region
        $region13: #{gigachad_forward.13} parent=11 // pred_check
          %p178 = pneg %p86
        $region14: #{gigachad_forward.13} parent=11 // pred_check_branch
          %180 = sbr.rel (%p178) target = $region16
        $region15: #{gigachad_forward.13} parent=11 // pred_region
          %s182 = ssub.s32 16, 16
          %183 = vsyncadd [#allocation6], %s182
          %s185 = sshll.u32 [#allocation5], 4
          %s186 = int_to_ptr.vmem [resolvable:$true] %s185
          %188 = dma.hbm_to_vmem [thread:$0]  %s1, 16, %s186, [#allocation6]
        $region16: #{gigachad_forward.13} parent=11 // pred_fallthru
          _
        // Predicated region
        $region17: #{gigachad_forward.13} parent=11 // pred_check
          %p189 = pneg %p107
        $region18: #{gigachad_forward.13} parent=11 // pred_check_branch
          %191 = sbr.rel (%p189) target = $region20
        $region19: #{gigachad_forward.13} parent=11 // pred_region
          %s193 = ssub.s32 16, 16
          %194 = vsyncadd [#allocation6], %s193
          %s196 = sshll.u32 [#allocation7], 4
          %s197 = int_to_ptr.vmem [resolvable:$true] %s196
          %199 = dma.hbm_to_vmem [thread:$0]  %s2, 16, %s197, [#allocation6]
        $region20: #{gigachad_forward.13} parent=11 // pred_fallthru
          _
        // Predicated region
        $region21: #{gigachad_forward.13} parent=11 // pred_check
          %p200 = pneg %p133
        $region22: #{gigachad_forward.13} parent=11 // pred_check_branch
          %202 = sbr.rel (%p200) target = $region24
        $region23: #{gigachad_forward.13} parent=11 // pred_region
          %s204 = ssub.s32 256, 256
          %205 = vsyncadd [#allocation9], %s204
          %s206 = smul.addr %s28, 64
          %s207 = scalar_lea.hbm %s3, %s206
          %s208 = sshll.u32 [#allocation8], 4
          %s209 = int_to_ptr.vmem [resolvable:$true] %s208
          %214 = dma.hbm_to_vmem [thread:$0]  %s207, 256, %s209, [#allocation9], 64, 64, 4
        $region24: #{gigachad_forward.13} parent=11 // pred_fallthru
          _
      $region12: #{gigachad_forward.13} parent=5 // pred_fallthru
        _
      %p215 = scmp.lt.s32.totalorder %s18, 2
      // Predicated region
      $region25: #{gigachad_forward.13} parent=5 // pred_check
        %p216 = pneg %p215
      $region26: #{gigachad_forward.13} parent=5 // pred_check_branch
        %218 = sbr.rel (%p216) target = $region28
      $region27: #{gigachad_forward.13} parent=5 // pred_region
        // Predicated region
        $region29: #{gigachad_forward.13} parent=27 // pred_check
          %p219 = pneg %p59
        $region30: #{gigachad_forward.13} parent=27 // pred_check_branch
          %221 = sbr.rel (%p219) target = $region32
        $region31: #{gigachad_forward.13} parent=27 // pred_region
          %s222 = sand.u32 %s49, 1
          %s223 = scalar_lea.sflag [#allocation3], %s222
          %s224 = sand.u32 %s49, 1
          %s225 = smul.addr %s224, 8
          %s226 = scalar_lea.vmem [#allocation2], %s225
          %s228 = ssub.s32 128, 128
          %229 = vsyncadd %s223, %s228
          %s230 = sadd.s32 %s27, %s26
          %s231 = smul.addr %s230, 128
          %s232 = scalar_lea.hbm %s0, %s231
          %s234 = sshll.u32 %s226, 4
          %s235 = int_to_ptr.vmem [resolvable:$true] %s234
          %237 = dma.hbm_to_vmem [thread:$0]  %s232, 128, %s235, %s223
        $region32: #{gigachad_forward.13} parent=27 // pred_fallthru
          _
      $region28: #{gigachad_forward.13} parent=5 // pred_fallthru
        _
      %p238 = scmp.le.s32.totalorder 1, %s18
      %p239 = scmp.lt.s32.totalorder %s18, 3
      %p240 = pnand %p238, %p239
      %p241 = pneg %p240
      // Predicated region
      $region33: #{gigachad_forward.13} parent=5 // pred_check
        _
      $region34: #{gigachad_forward.13} parent=5 // pred_check_branch
        %243 = sbr.rel (%p240) target = $region36
      $region35: #{gigachad_forward.13} parent=5 // pred_region
        %s244 = ssub.s32 %s18, 1
        %s245 = sand.u32 %s52, 1
        %s246 = scalar_lea.sflag [#allocation3], %s245
        %s247 = sand.u32 %s52, 1
        %s248 = smul.addr %s247, 8
        %s249 = scalar_lea.vmem [#allocation2], %s248
        // Predicated region
        $region37: #{gigachad_forward.13} parent=35 // pred_check
          %p250 = pneg %p65
        $region38: #{gigachad_forward.13} parent=35 // pred_check_branch
          %252 = sbr.rel (%p250) target = $region40
        $region39: #{gigachad_forward.13} parent=35 // pred_region
          %253 = dma.done %s246, 128
        $region40: #{gigachad_forward.13} parent=35 // pred_fallthru
          _
        // Predicated region
        $region41: #{gigachad_forward.13} parent=35 // pred_check
          %p254 = pneg %p86
        $region42: #{gigachad_forward.13} parent=35 // pred_check_branch
          %256 = sbr.rel (%p254) target = $region44
        $region43: #{gigachad_forward.13} parent=35 // pred_region
          %257 = dma.done [#allocation6], 16
        $region44: #{gigachad_forward.13} parent=35 // pred_fallthru
          _
        // Predicated region
        $region45: #{gigachad_forward.13} parent=35 // pred_check
          %p258 = pneg %p107
        $region46: #{gigachad_forward.13} parent=35 // pred_check_branch
          %260 = sbr.rel (%p258) target = $region48
        $region47: #{gigachad_forward.13} parent=35 // pred_region
          %261 = dma.done [#allocation6], 16
        $region48: #{gigachad_forward.13} parent=35 // pred_fallthru
          _
        // Predicated region
        $region49: #{gigachad_forward.13} parent=35 // pred_check
          %p262 = pneg %p133
        $region50: #{gigachad_forward.13} parent=35 // pred_check_branch
          %264 = sbr.rel (%p262) target = $region52
        $region51: #{gigachad_forward.13} parent=35 // pred_region
          %265 = dma.done [#allocation9], 256
        $region52: #{gigachad_forward.13} parent=35 // pred_fallthru
          _
        %s266 = sand.u32 %s52, 1
        %s267 = scalar_lea.sflag [#allocation3], %s266
        %s268 = sand.u32 %s52, 1
        %s269 = smul.addr %s268, 8
        %s270 = scalar_lea.vmem [#allocation2], %s269
        %p271 = pneg %p65
        %p272 = pneg %p62
        %p273 = pneg %p86
        %p274 = pneg %p83
        %p275 = pneg %p107
        %p276 = pneg %p104
        %p277 = pneg %p133
        %p278 = pneg %p130
        %p279 = pneg %p163
        %p280 = pneg %p160
        %s281 = sand.u32 %s150, 1
        %s282 = scalar_lea.sflag [#allocation4], %s281
        %s283 = sand.u32 %s150, 1
        %s284 = smul.addr %s283, 8
        %s285 = scalar_lea.vmem [#allocation10], %s284
        %v287 = vld [vmem:[%s249] sm:$0xff]
        %v288 = vld [vmem:[#allocation5] sm:$0x1]
        %v289 = vld [vmem:[#allocation7] sm:$0x1]
        %vm290 = vcmask 261120
        %v291 = vsel %vm290, %v287, 0.0
        %292 = vadd.xlane.f32.xlu0 %v291
        %v293 = vpop.xlane.xlu0 %292
        %v294 = vrcp.pop 32.0
        %v295 = vmul.f32 %v293, %v294
        %v296 = vsub.f32 %v287, %v295
        %v297 = vmul.f32 %v296, %v296
        %v298 = vsel %vm290, %v297, 0.0
        %299 = vadd.xlane.f32.xlu0 %v298
        %v300 = vpop.xlane.xlu0 %299
        %v301 = vmul.f32 %v300, %v294
        %v302 = vadd.f32 %v301, 1e-05
        %v303 = vrsqrt.pop %v302
        %v304 = vmul.f32 %v296, %v303
        %v306 = vlaneseq
        %v307 = vshrl.u32 %v306, 7
        %v308 = vsub.s32 0, %v307
        %v309 = vrot.slane %v288, %v308
        %v311 = vmul.f32 %v304, %v309
        %v313 = vlaneseq
        %v314 = vshrl.u32 %v313, 7
        %v315 = vsub.s32 0, %v314
        %v316 = vrot.slane %v289, %v315
        %v318 = vadd.f32 %v311, %v316
        %v319 = vpack.c.bf16 %v318, %v318
        %v320 = vld [vmem:[#allocation8] sm:$0xf]
        %v321 = vld [vmem:[#allocation8 + $0x4] sm:$0xf]
        %v322 = vld [vmem:[#allocation8 + $0x8] sm:$0xf]
        %v323 = vld [vmem:[#allocation8 + $0xc] sm:$0xf]
        %v328 = vunpack.c.l.b16 %v320
        %v329 = vunpack.c.l.b16 %v321
        %v330 = vunpack.c.l.b16 %v322
        %v331 = vunpack.c.l.b16 %v323
        %v332 = vpack.c.b16 %v329, %v328
        %v333 = vpack.c.b16 %v331, %v330
        %v337 = vsel %vm290, %v319, 0
        %339 = vmatprep.subr.bf16.mxu0 0
        %340 = vmatpush1.bf16.msra.mxu0 %v332
        %341 = vmatprep.subr.bf16.mxu0 0
        %342 = vmatpush1.bf16.msra.mxu0 %v333
        %343 = vmatprep.subr.bf16.mxu0 0
        %344 = vmatpush1.bf16.msra.mxu0 0
        %345 = vmatprep.subr.bf16.mxu0 0
        %346 = vmatpush1.bf16.msra.mxu0 0
        %347 = vmatprep.subr.bf16.mxu0 0
        %348 = vmatpush1.bf16.msra.mxu0 0
        %349 = vmatprep.subr.bf16.mxu0 0
        %350 = vmatpush1.bf16.msra.mxu0 0
        %351 = vmatprep.subr.bf16.mxu0 0
        %352 = vmatpush1.bf16.msra.mxu0 0
        %353 = vmatprep.subr.bf16.mxu0 0
        %354 = vmatpush1.bf16.msra.mxu0 0
        %355 = vmatprep.subr.bf16.mxu0 0
        %356 = vmatpush1.bf16.msra.mxu0 0
        %357 = vmatprep.subr.bf16.mxu0 0
        %358 = vmatpush1.bf16.msra.mxu0 0
        %359 = vmatprep.subr.bf16.mxu0 0
        %360 = vmatpush1.bf16.msra.mxu0 0
        %361 = vmatprep.subr.bf16.mxu0 0
        %362 = vmatpush1.bf16.msra.mxu0 0
        %363 = vmatprep.subr.bf16.mxu0 0
        %364 = vmatpush1.bf16.msra.mxu0 0
        %365 = vmatprep.subr.bf16.mxu0 0
        %366 = vmatpush1.bf16.msra.mxu0 0
        %367 = vmatprep.subr.bf16.mxu0 0
        %368 = vmatpush1.bf16.msra.mxu0 0
        %369 = vmatprep.subr.bf16.mxu0 0
        %370 = vmatpush1.bf16.msra.mxu0 0
        %371 = vmatprep.mubr.bf16.mxu0 0
        %372 = vmatmul.mubr.bf16.gmra.mrb[0].mxu0 %v337
        %v373 = vpop.f32.mrb[0].mxu0
        %v374 = vadd.f32 0.0, %v373
        %v375 = vpop.f32.mrb[0].mxu0
        %v376 = vpop.f32.mrb[0].mxu0
        %v377 = vpop.f32.mrb[0].mxu0
        %378 = vdwg.mxu0
        %379 = vst [vmem:[%s285] sm:$0xff] %v374
        %s380 = sand.u32 %s150, 1
        %s381 = scalar_lea.sflag [#allocation4], %s380
        %s382 = sand.u32 %s150, 1
        %s383 = smul.addr %s382, 8
        %s384 = scalar_lea.vmem [#allocation10], %s383
        // Predicated region
        $region53: #{gigachad_forward.13} parent=35 // pred_check
          %p385 = pneg %p160
        $region54: #{gigachad_forward.13} parent=35 // pred_check_branch
          %387 = sbr.rel (%p385) target = $region56
        $region55: #{gigachad_forward.13} parent=35 // pred_region
          %s389 = ssub.s32 128, 128
          %390 = vsyncadd %s381, %s389
          %s391 = sadd.s32 %s28, %s30
          %s392 = sadd.s32 %s391, %s29
          %s393 = smul.addr %s392, 128
          %s394 = scalar_lea.hbm %s4, %s393
          %s396 = sshll.u32 %s384, 4
          %s397 = int_to_ptr.vmem [resolvable:$true] %s396
          %399 = dma.vmem_to_hbm [thread:$0]  %s397, 128, %s394, %s381
        $region56: #{gigachad_forward.13} parent=35 // pred_fallthru
          _
      $region36: #{gigachad_forward.13} parent=5 // pred_fallthru
        _
      %p400 = scmp.le.s32.totalorder 2, %s18
      // Predicated region
      $region57: #{gigachad_forward.13} parent=5 // pred_check
        %p401 = pneg %p400
      $region58: #{gigachad_forward.13} parent=5 // pred_check_branch
        %403 = sbr.rel (%p401) target = $region60
      $region59: #{gigachad_forward.13} parent=5 // pred_region
        %s404 = ssub.s32 %s18, 2
        // Predicated region
        $region61: #{gigachad_forward.13} parent=59 // pred_check
          %p405 = pneg %p166
        $region62: #{gigachad_forward.13} parent=59 // pred_check_branch
          %407 = sbr.rel (%p405) target = $region64
        $region63: #{gigachad_forward.13} parent=59 // pred_region
          %s408 = sand.u32 %s151, 1
          %s409 = scalar_lea.sflag [#allocation4], %s408
          %s410 = sand.u32 %s151, 1
          %s411 = smul.addr %s410, 8
          %s412 = scalar_lea.vmem [#allocation10], %s411
          %413 = dma.done %s409, 128
        $region64: #{gigachad_forward.13} parent=59 // pred_fallthru
          _
      $region60: #{gigachad_forward.13} parent=5 // pred_fallthru
        _
    $region6: #{gigachad_forward.13} parent=1 // loop_footer
      %s22 = sadd.s32 1, %s18
    $region7: #{gigachad_forward.13} parent=1 // loop_footer_branch
      %17 = sbr.rel target = $region3
    $region8: #{gigachad_forward.13} parent=1 // loop_exit
      _
    %414 = vsyncpa [#allocation3], 1
    %s415 = scalar_lea.sflag [#allocation3], 1
    %416 = vsyncpa %s415, 1
    %417 = vsyncpa [#allocation6], 1
    %418 = vsyncpa [#allocation9], 1
    %419 = vsyncpa [#allocation4], 1
    %s420 = scalar_lea.sflag [#allocation4], 1
    %421 = vsyncpa %s420, 1

// kernel: gigachad_forward.7
$region0: #{gigachad_forward.7}
  #allocation0 [shape = 'u32[]', space=smem, size = 0x4, offset = 0x4, fixed_abs, tag = 'smem constant byte address 0x4 - core index']
  #allocation1 [shape = 'u32[144,128]{1,0:T(1,128)}', space=vmem, size = 0x12000, scoped, tag = 'internal scratch']
  %s0 = inlined_call_operand.hbm [shape: f32[2,8,32], index: 0, kind: input, shape index: {}]
  %s1 = inlined_call_operand.hbm [shape: f32[1,32], index: 1, kind: input, shape index: {}]
  %s2 = inlined_call_operand.hbm [shape: f32[1,32], index: 2, kind: input, shape index: {}]
  %s3 = inlined_call_operand.hbm [shape: bf16[32,96], index: 3, kind: input, shape index: {}]
  %s4 = inlined_call_operand.hbm [shape: f32[1,96], index: 4, kind: input, shape index: {}]
  %s5 = inlined_call_operand.hbm [shape: bf16[2,8,32], index: 5, kind: output, shape index: {0}]
  %s6 = inlined_call_operand.hbm [shape: bf16[2,8,32], index: 6, kind: output, shape index: {1}]
  %s7 = inlined_call_operand.hbm [shape: bf16[2,8,32], index: 7, kind: output, shape index: {2}]
  %8 = xla_tuple %s5, %s6, %s7
  %s9 = sld [smem:[#allocation0]]
  $region89: #{gigachad_forward.7} parent=0
    _
  %s11 = ssub.s32 1, %s9
  %s12 = scalar_select 0, %s11, %s9
  $region1: #{gigachad_forward.7} parent=0
    #allocation2 [shape = 'u8[8192]{0}', space=vmem, size = 0x2000, scoped, tag = 'input window, operand 0']
    #allocation3 [shape = 's32[2]{0}', space=sflag, size = 0x8, scoped, tag = 'scoped memory for gigachad_forward.7']
    #allocation4 [shape = 's32[2]{0}', space=sflag, size = 0x8, scoped, tag = 'scoped memory for gigachad_forward.7']
    #allocation5 [shape = 'u8[512]{0}', space=vmem, size = 0x400, scoped, tag = 'input window, operand 1, single buffered']
    #allocation6 [shape = 's32[1]{0}', space=sflag, size = 0x4, scoped, tag = 'scoped memory for gigachad_forward.7']
    #allocation7 [shape = 'u8[512]{0}', space=vmem, size = 0x400, scoped, tag = 'input window, operand 2, single buffered']
    #allocation8 [shape = 'u8[8192]{0}', space=vmem, size = 0x2000, scoped, tag = 'input window, operand 3, single buffered']
    #allocation9 [shape = 's32[1]{0}', space=sflag, size = 0x4, scoped, tag = 'scoped memory for gigachad_forward.7']
    #allocation10 [shape = 'u8[512]{0}', space=vmem, size = 0x400, scoped, tag = 'input window, operand 4, single buffered']
    #allocation11 [shape = 'u8[4096]{0}', space=vmem, size = 0x1000, scoped, tag = 'output window, operand 0']
    #allocation12 [shape = 'u8[4096]{0}', space=vmem, size = 0x1000, scoped, tag = 'output window, operand 1']
    #allocation13 [shape = 's32[2]{0}', space=sflag, size = 0x8, scoped, tag = 'scoped memory for gigachad_forward.7']
    #allocation14 [shape = 'u8[4096]{0}', space=vmem, size = 0x1000, scoped, tag = 'output window, operand 2']
    %13 = vsyncpa [#allocation3], 0
    %s14 = scalar_lea.sflag [#allocation3], 1
    %15 = vsyncpa %s14, 0
    %16 = vsyncpa [#allocation6], 0
    %17 = vsyncpa [#allocation9], 0
    %18 = vsyncpa [#allocation4], 0
    %s19 = scalar_lea.sflag [#allocation4], 1
    %20 = vsyncpa %s19, 0
    %21 = vsyncpa [#allocation13], 0
    %s22 = scalar_lea.sflag [#allocation13], 1
    %23 = vsyncpa %s22, 0
    loop: start=0, step=1, limit=4
    $region2: #{gigachad_forward.7} parent=1 // loop_pre_header
      _
    $region3: #{gigachad_forward.7} parent=1 // loop_header
      %s25 = sphi 0, %s29
      %p26 = scmp.ge.s32.totalorder %s25, 4
      %s32 = sphi 0, %s44
      %s33 = sphi 0, %s40
      %s34 = sphi 0, %s32
      %s35 = sphi 0, %s33
      %s36 = sphi 0, %s34
      %s37 = sphi 0, %s35
      %s49 = sphi 0, %s51
      %s52 = sphi 0, %s49
      %s53 = sphi 0, %s52
      %s69 = sphi 0, %s53
      %s73 = sphi 0, %s73
      %s75 = sphi 0, %s73
      %s76 = sphi 0, %s75
      %s90 = sphi 0, %s76
      %s94 = sphi 0, %s94
      %s96 = sphi 0, %s94
      %s97 = sphi 0, %s96
      %s111 = sphi 0, %s97
      %s115 = sphi 0, %s115
      %s117 = sphi 0, %s115
      %s118 = sphi 0, %s117
      %s132 = sphi 0, %s118
      %s136 = sphi 0, %s136
      %s138 = sphi 0, %s136
      %s139 = sphi 0, %s138
      %s153 = sphi 0, %s139
      %s161 = sphi 0, %s163
      %s164 = sphi 0, %s161
      %s165 = sphi 0, %s164
      %s181 = sphi 0, %s165
      %s189 = sphi 0, %s191
      %s192 = sphi 0, %s189
      %s193 = sphi 0, %s192
      %s209 = sphi 0, %s193
      %s217 = sphi 0, %s219
      %s220 = sphi 0, %s217
      %s221 = sphi 0, %s220
      %s237 = sphi 0, %s221
    $region4: #{gigachad_forward.7} parent=1 // loop_header_branch
      %28 = sbr.rel (%p26) target = $region8
    $region5: #{gigachad_forward.7} parent=1 // loop_body
      %s30 = ssub.s32 %s25, 1
      %s31 = ssub.s32 %s25, 2
      %s38 = sadd.s32 1, %s33
      %p39 = scmp.ge.s32.totalorder %s38, 1
      %s40 = scalar_select %p39, 0, %s38
      %s41 = sadd.s32 1, %s32
      %s42 = scalar_select %p39, %s41, %s32
      %p43 = scmp.ge.s32.totalorder %s42, 2
      %s44 = scalar_select %p43, 0, %s42
      %s45 = ssub.s32 %s32, %s44
      %s46 = ssub.s32 %s33, %s40
      %s47 = sor.u32 %s45, %s46
      %p48 = scmp.eq.s32.totalorder %s47, 0
      %s50 = sadd.s32 %s49, 1
      %s51 = scalar_select %p48, %s49, %s50
      %p54 = pneg %p48
      %p55 = scmp.eq.s32.totalorder %s25, 1
      %p56 = por %p54, %p55
      %p57 = scmp.ne.s32.totalorder %s49, %s52
      %p58 = scmp.eq.s32.totalorder %s25, 0
      %p59 = por %p57, %p58
      %p60 = scmp.ne.s32.totalorder %s49, %s52
      %p61 = scmp.eq.s32.totalorder %s30, 1
      %p62 = por %p60, %p61
      %p63 = scmp.ne.s32.totalorder %s52, %s53
      %p64 = scmp.eq.s32.totalorder %s30, 0
      %p65 = por %p63, %p64
      %p66 = scmp.ne.s32.totalorder %s52, %s53
      %p67 = scmp.eq.s32.totalorder %s31, 1
      %p68 = por %p66, %p67
      %p70 = scmp.ne.s32.totalorder %s53, %s69
      %p71 = scmp.eq.s32.totalorder %s31, 0
      %p72 = por %p70, %p71
      %s74 = sadd.s32 %s73, 1
      %p77 = scmp.eq.s32.totalorder %s25, 1
      %p78 = scmp.ne.s32.totalorder %s73, %s75
      %p79 = scmp.eq.s32.totalorder %s25, 0
      %p80 = por %p78, %p79
      %p81 = scmp.ne.s32.totalorder %s73, %s75
      %p82 = scmp.eq.s32.totalorder %s30, 1
      %p83 = por %p81, %p82
      %p84 = scmp.ne.s32.totalorder %s75, %s76
      %p85 = scmp.eq.s32.totalorder %s30, 0
      %p86 = por %p84, %p85
      %p87 = scmp.ne.s32.totalorder %s75, %s76
      %p88 = scmp.eq.s32.totalorder %s31, 1
      %p89 = por %p87, %p88
      %p91 = scmp.ne.s32.totalorder %s76, %s90
      %p92 = scmp.eq.s32.totalorder %s31, 0
      %p93 = por %p91, %p92
      %s95 = sadd.s32 %s94, 1
      %p98 = scmp.eq.s32.totalorder %s25, 1
      %p99 = scmp.ne.s32.totalorder %s94, %s96
      %p100 = scmp.eq.s32.totalorder %s25, 0
      %p101 = por %p99, %p100
      %p102 = scmp.ne.s32.totalorder %s94, %s96
      %p103 = scmp.eq.s32.totalorder %s30, 1
      %p104 = por %p102, %p103
      %p105 = scmp.ne.s32.totalorder %s96, %s97
      %p106 = scmp.eq.s32.totalorder %s30, 0
      %p107 = por %p105, %p106
      %p108 = scmp.ne.s32.totalorder %s96, %s97
      %p109 = scmp.eq.s32.totalorder %s31, 1
      %p110 = por %p108, %p109
      %p112 = scmp.ne.s32.totalorder %s97, %s111
      %p113 = scmp.eq.s32.totalorder %s31, 0
      %p114 = por %p112, %p113
      %s116 = sadd.s32 %s115, 1
      %p119 = scmp.eq.s32.totalorder %s25, 1
      %p120 = scmp.ne.s32.totalorder %s115, %s117
      %p121 = scmp.eq.s32.totalorder %s25, 0
      %p122 = por %p120, %p121
      %p123 = scmp.ne.s32.totalorder %s115, %s117
      %p124 = scmp.eq.s32.totalorder %s30, 1
      %p125 = por %p123, %p124
      %p126 = scmp.ne.s32.totalorder %s117, %s118
      %p127 = scmp.eq.s32.totalorder %s30, 0
      %p128 = por %p126, %p127
      %p129 = scmp.ne.s32.totalorder %s117, %s118
      %p130 = scmp.eq.s32.totalorder %s31, 1
      %p131 = por %p129, %p130
      %p133 = scmp.ne.s32.totalorder %s118, %s132
      %p134 = scmp.eq.s32.totalorder %s31, 0
      %p135 = por %p133, %p134
      %s137 = sadd.s32 %s136, 1
      %p140 = scmp.eq.s32.totalorder %s25, 1
      %p141 = scmp.ne.s32.totalorder %s136, %s138
      %p142 = scmp.eq.s32.totalorder %s25, 0
      %p143 = por %p141, %p142
      %p144 = scmp.ne.s32.totalorder %s136, %s138
      %p145 = scmp.eq.s32.totalorder %s30, 1
      %p146 = por %p144, %p145
      %p147 = scmp.ne.s32.totalorder %s138, %s139
      %p148 = scmp.eq.s32.totalorder %s30, 0
      %p149 = por %p147, %p148
      %p150 = scmp.ne.s32.totalorder %s138, %s139
      %p151 = scmp.eq.s32.totalorder %s31, 1
      %p152 = por %p150, %p151
      %p154 = scmp.ne.s32.totalorder %s139, %s153
      %p155 = scmp.eq.s32.totalorder %s31, 0
      %p156 = por %p154, %p155
      %s157 = ssub.s32 %s32, %s44
      %s158 = ssub.s32 %s33, %s40
      %s159 = sor.u32 %s157, %s158
      %p160 = scmp.eq.s32.totalorder %s159, 0
      %s162 = sadd.s32 %s161, 1
      %s163 = scalar_select %p160, %s161, %s162
      %p166 = pneg %p160
      %p167 = scmp.eq.s32.totalorder %s25, 1
      %p168 = por %p166, %p167
      %p169 = scmp.ne.s32.totalorder %s161, %s164
      %p170 = scmp.eq.s32.totalorder %s25, 0
      %p171 = por %p169, %p170
      %p172 = scmp.ne.s32.totalorder %s161, %s164
      %p173 = scmp.eq.s32.totalorder %s30, 1
      %p174 = por %p172, %p173
      %p175 = scmp.ne.s32.totalorder %s164, %s165
      %p176 = scmp.eq.s32.totalorder %s30, 0
      %p177 = por %p175, %p176
      %p178 = scmp.ne.s32.totalorder %s164, %s165
      %p179 = scmp.eq.s32.totalorder %s31, 1
      %p180 = por %p178, %p179
      %p182 = scmp.ne.s32.totalorder %s165, %s181
      %p183 = scmp.eq.s32.totalorder %s31, 0
      %p184 = por %p182, %p183
      %s185 = ssub.s32 %s32, %s44
      %s186 = ssub.s32 %s33, %s40
      %s187 = sor.u32 %s185, %s186
      %p188 = scmp.eq.s32.totalorder %s187, 0
      %s190 = sadd.s32 %s189, 1
      %s191 = scalar_select %p188, %s189, %s190
      %p194 = pneg %p188
      %p195 = scmp.eq.s32.totalorder %s25, 1
      %p196 = por %p194, %p195
      %p197 = scmp.ne.s32.totalorder %s189, %s192
      %p198 = scmp.eq.s32.totalorder %s25, 0
      %p199 = por %p197, %p198
      %p200 = scmp.ne.s32.totalorder %s189, %s192
      %p201 = scmp.eq.s32.totalorder %s30, 1
      %p202 = por %p200, %p201
      %p203 = scmp.ne.s32.totalorder %s192, %s193
      %p204 = scmp.eq.s32.totalorder %s30, 0
      %p205 = por %p203, %p204
      %p206 = scmp.ne.s32.totalorder %s192, %s193
      %p207 = scmp.eq.s32.totalorder %s31, 1
      %p208 = por %p206, %p207
      %p210 = scmp.ne.s32.totalorder %s193, %s209
      %p211 = scmp.eq.s32.totalorder %s31, 0
      %p212 = por %p210, %p211
      %s213 = ssub.s32 %s32, %s44
      %s214 = ssub.s32 %s33, %s40
      %s215 = sor.u32 %s213, %s214
      %p216 = scmp.eq.s32.totalorder %s215, 0
      %s218 = sadd.s32 %s217, 1
      %s219 = scalar_select %p216, %s217, %s218
      %p222 = pneg %p216
      %p223 = scmp.eq.s32.totalorder %s25, 1
      %p224 = por %p222, %p223
      %p225 = scmp.ne.s32.totalorder %s217, %s220
      %p226 = scmp.eq.s32.totalorder %s25, 0
      %p227 = por %p225, %p226
      %p228 = scmp.ne.s32.totalorder %s217, %s220
      %p229 = scmp.eq.s32.totalorder %s30, 1
      %p230 = por %p228, %p229
      %p231 = scmp.ne.s32.totalorder %s220, %s221
      %p232 = scmp.eq.s32.totalorder %s30, 0
      %p233 = por %p231, %p232
      %p234 = scmp.ne.s32.totalorder %s220, %s221
      %p235 = scmp.eq.s32.totalorder %s31, 1
      %p236 = por %p234, %p235
      %p238 = scmp.ne.s32.totalorder %s221, %s237
      %p239 = scmp.eq.s32.totalorder %s31, 0
      %p240 = por %p238, %p239
      %p241 = scmp.le.s32.totalorder 1, %s25
      %p242 = scmp.lt.s32.totalorder %s25, 3
      %p243 = pnand %p241, %p242
      %p244 = pneg %p243
      // Predicated region
      $region9: #{gigachad_forward.7} parent=5 // pred_check
        _
      $region10: #{gigachad_forward.7} parent=5 // pred_check_branch
        %246 = sbr.rel (%p243) target = $region12
      $region11: #{gigachad_forward.7} parent=5 // pred_region
        %s247 = ssub.s32 %s25, 1
        // Predicated region
        $region13: #{gigachad_forward.7} parent=11 // pred_check
          %p248 = pneg %p86
        $region14: #{gigachad_forward.7} parent=11 // pred_check_branch
          %250 = sbr.rel (%p248) target = $region16
        $region15: #{gigachad_forward.7} parent=11 // pred_region
          %s252 = ssub.s32 16, 16
          %253 = vsyncadd [#allocation6], %s252
          %s255 = sshll.u32 [#allocation5], 4
          %s256 = int_to_ptr.vmem [resolvable:$true] %s255
          %258 = dma.hbm_to_vmem [thread:$0]  %s1, 16, %s256, [#allocation6]
        $region16: #{gigachad_forward.7} parent=11 // pred_fallthru
          _
        // Predicated region
        $region17: #{gigachad_forward.7} parent=11 // pred_check
          %p259 = pneg %p107
        $region18: #{gigachad_forward.7} parent=11 // pred_check_branch
          %261 = sbr.rel (%p259) target = $region20
        $region19: #{gigachad_forward.7} parent=11 // pred_region
          %s263 = ssub.s32 16, 16
          %264 = vsyncadd [#allocation6], %s263
          %s266 = sshll.u32 [#allocation7], 4
          %s267 = int_to_ptr.vmem [resolvable:$true] %s266
          %269 = dma.hbm_to_vmem [thread:$0]  %s2, 16, %s267, [#allocation6]
        $region20: #{gigachad_forward.7} parent=11 // pred_fallthru
          _
        // Predicated region
        $region21: #{gigachad_forward.7} parent=11 // pred_check
          %p270 = pneg %p128
        $region22: #{gigachad_forward.7} parent=11 // pred_check_branch
          %272 = sbr.rel (%p270) target = $region24
        $region23: #{gigachad_forward.7} parent=11 // pred_region
          %s274 = ssub.s32 256, 256
          %275 = vsyncadd [#allocation9], %s274
          %s276 = sshll.u32 [#allocation8], 4
          %s277 = int_to_ptr.vmem [resolvable:$true] %s276
          %282 = dma.hbm_to_vmem [thread:$0]  %s3, 256, %s277, [#allocation9], 64, 64, 4
        $region24: #{gigachad_forward.7} parent=11 // pred_fallthru
          _
        // Predicated region
        $region25: #{gigachad_forward.7} parent=11 // pred_check
          %p283 = pneg %p149
        $region26: #{gigachad_forward.7} parent=11 // pred_check_branch
          %285 = sbr.rel (%p283) target = $region28
        $region27: #{gigachad_forward.7} parent=11 // pred_region
          %s287 = ssub.s32 16, 16
          %288 = vsyncadd [#allocation9], %s287
          %s290 = sshll.u32 [#allocation10], 4
          %s291 = int_to_ptr.vmem [resolvable:$true] %s290
          %293 = dma.hbm_to_vmem [thread:$0]  %s4, 16, %s291, [#allocation9]
        $region28: #{gigachad_forward.7} parent=11 // pred_fallthru
          _
      $region12: #{gigachad_forward.7} parent=5 // pred_fallthru
        _
      %p294 = scmp.lt.s32.totalorder %s25, 2
      // Predicated region
      $region29: #{gigachad_forward.7} parent=5 // pred_check
        %p295 = pneg %p294
      $region30: #{gigachad_forward.7} parent=5 // pred_check_branch
        %297 = sbr.rel (%p295) target = $region32
      $region31: #{gigachad_forward.7} parent=5 // pred_region
        // Predicated region
        $region33: #{gigachad_forward.7} parent=31 // pred_check
          %p298 = pneg %p59
        $region34: #{gigachad_forward.7} parent=31 // pred_check_branch
          %300 = sbr.rel (%p298) target = $region36
        $region35: #{gigachad_forward.7} parent=31 // pred_region
          %s301 = sand.u32 %s49, 1
          %s302 = scalar_lea.sflag [#allocation3], %s301
          %s303 = sand.u32 %s49, 1
          %s304 = smul.addr %s303, 8
          %s305 = scalar_lea.vmem [#allocation2], %s304
          %s307 = ssub.s32 128, 128
          %308 = vsyncadd %s302, %s307
          %s309 = sadd.s32 %s33, %s32
          %s310 = smul.addr %s309, 128
          %s311 = scalar_lea.hbm %s0, %s310
          %s313 = sshll.u32 %s305, 4
          %s314 = int_to_ptr.vmem [resolvable:$true] %s313
          %316 = dma.hbm_to_vmem [thread:$0]  %s311, 128, %s314, %s302
        $region36: #{gigachad_forward.7} parent=31 // pred_fallthru
          _
      $region32: #{gigachad_forward.7} parent=5 // pred_fallthru
        _
      %p317 = scmp.le.s32.totalorder 1, %s25
      %p318 = scmp.lt.s32.totalorder %s25, 3
      %p319 = pnand %p317, %p318
      %p320 = pneg %p319
      // Predicated region
      $region37: #{gigachad_forward.7} parent=5 // pred_check
        _
      $region38: #{gigachad_forward.7} parent=5 // pred_check_branch
        %322 = sbr.rel (%p319) target = $region40
      $region39: #{gigachad_forward.7} parent=5 // pred_region
        %s323 = ssub.s32 %s25, 1
        %s324 = sand.u32 %s52, 1
        %s325 = scalar_lea.sflag [#allocation3], %s324
        %s326 = sand.u32 %s52, 1
        %s327 = smul.addr %s326, 8
        %s328 = scalar_lea.vmem [#allocation2], %s327
        // Predicated region
        $region41: #{gigachad_forward.7} parent=39 // pred_check
          %p329 = pneg %p65
        $region42: #{gigachad_forward.7} parent=39 // pred_check_branch
          %331 = sbr.rel (%p329) target = $region44
        $region43: #{gigachad_forward.7} parent=39 // pred_region
          %332 = dma.done %s325, 128
        $region44: #{gigachad_forward.7} parent=39 // pred_fallthru
          _
        // Predicated region
        $region45: #{gigachad_forward.7} parent=39 // pred_check
          %p333 = pneg %p86
        $region46: #{gigachad_forward.7} parent=39 // pred_check_branch
          %335 = sbr.rel (%p333) target = $region48
        $region47: #{gigachad_forward.7} parent=39 // pred_region
          %336 = dma.done [#allocation6], 16
        $region48: #{gigachad_forward.7} parent=39 // pred_fallthru
          _
        // Predicated region
        $region49: #{gigachad_forward.7} parent=39 // pred_check
          %p337 = pneg %p107
        $region50: #{gigachad_forward.7} parent=39 // pred_check_branch
          %339 = sbr.rel (%p337) target = $region52
        $region51: #{gigachad_forward.7} parent=39 // pred_region
          %340 = dma.done [#allocation6], 16
        $region52: #{gigachad_forward.7} parent=39 // pred_fallthru
          _
        // Predicated region
        $region53: #{gigachad_forward.7} parent=39 // pred_check
          %p341 = pneg %p128
        $region54: #{gigachad_forward.7} parent=39 // pred_check_branch
          %343 = sbr.rel (%p341) target = $region56
        $region55: #{gigachad_forward.7} parent=39 // pred_region
          %344 = dma.done [#allocation9], 256
        $region56: #{gigachad_forward.7} parent=39 // pred_fallthru
          _
        // Predicated region
        $region57: #{gigachad_forward.7} parent=39 // pred_check
          %p345 = pneg %p149
        $region58: #{gigachad_forward.7} parent=39 // pred_check_branch
          %347 = sbr.rel (%p345) target = $region60
        $region59: #{gigachad_forward.7} parent=39 // pred_region
          %348 = dma.done [#allocation9], 16
        $region60: #{gigachad_forward.7} parent=39 // pred_fallthru
          _
        %s349 = sand.u32 %s52, 1
        %s350 = scalar_lea.sflag [#allocation3], %s349
        %s351 = sand.u32 %s52, 1
        %s352 = smul.addr %s351, 8
        %s353 = scalar_lea.vmem [#allocation2], %s352
        %p354 = pneg %p65
        %p355 = pneg %p62
        %p356 = pneg %p86
        %p357 = pneg %p83
        %p358 = pneg %p107
        %p359 = pneg %p104
        %p360 = pneg %p128
        %p361 = pneg %p125
        %p362 = pneg %p149
        %p363 = pneg %p146
        %p364 = pneg %p177
        %p365 = pneg %p174
        %s366 = sand.u32 %s164, 1
        %s367 = scalar_lea.sflag [#allocation4], %s366
        %s368 = sand.u32 %s164, 1
        %s369 = smul.addr %s368, 4
        %s370 = scalar_lea.vmem [#allocation11], %s369
        %p371 = pneg %p205
        %p372 = pneg %p202
        %s373 = sand.u32 %s30, 1
        %s374 = scalar_lea.sflag [#allocation13], %s373
        %s375 = sand.u32 %s192, 1
        %s376 = smul.addr %s375, 4
        %s377 = scalar_lea.vmem [#allocation12], %s376
        %p378 = pneg %p233
        %p379 = pneg %p230
        %s380 = sand.u32 %s30, 1
        %s381 = scalar_lea.sflag [#allocation13], %s380
        %s382 = sand.u32 %s220, 1
        %s383 = smul.addr %s382, 4
        %s384 = scalar_lea.vmem [#allocation14], %s383
        %v386 = vld [vmem:[%s328] sm:$0xff]
        %v387 = vld [vmem:[#allocation5] sm:$0x1]
        %v388 = vld [vmem:[#allocation7] sm:$0x1]
        %vm389 = vcmask 261120
        %v390 = vsel %vm389, %v386, 0.0
        %391 = vadd.xlane.f32.xlu0 %v390
        %v392 = vpop.xlane.xlu0 %391
        %v393 = vrcp.pop 32.0
        %v394 = vmul.f32 %v392, %v393
        %v395 = vsub.f32 %v386, %v394
        %v396 = vmul.f32 %v395, %v395
        %v397 = vsel %vm389, %v396, 0.0
        %398 = vadd.xlane.f32.xlu0 %v397
        %v399 = vpop.xlane.xlu0 %398
        %v400 = vmul.f32 %v399, %v393
        %v401 = vadd.f32 %v400, 1e-05
        %v402 = vrsqrt.pop %v401
        %v403 = vmul.f32 %v395, %v402
        %v405 = vlaneseq
        %v406 = vshrl.u32 %v405, 7
        %v407 = vsub.s32 0, %v406
        %v408 = vrot.slane %v387, %v407
        %v410 = vmul.f32 %v403, %v408
        %v412 = vlaneseq
        %v413 = vshrl.u32 %v412, 7
        %v414 = vsub.s32 0, %v413
        %v415 = vrot.slane %v388, %v414
        %v417 = vadd.f32 %v410, %v415
        %v418 = vpack.c.bf16 %v417, %v417
        %v419 = vld [vmem:[#allocation8] sm:$0xf]
        %v420 = vld [vmem:[#allocation8 + $0x4] sm:$0xf]
        %v421 = vld [vmem:[#allocation8 + $0x8] sm:$0xf]
        %v422 = vld [vmem:[#allocation8 + $0xc] sm:$0xf]
        %v423 = vld [vmem:[#allocation10] sm:$0x1]
        %v425 = vlaneseq
        %v426 = vshrl.u32 %v425, 7
        %v427 = vsub.s32 0, %v426
        %v428 = vrot.slane %v423, %v427
        %v434 = vunpack.c.l.b16 %v419
        %v435 = vunpack.c.l.b16 %v420
        %v436 = vunpack.c.l.b16 %v421
        %v437 = vunpack.c.l.b16 %v422
        %v438 = vpack.c.b16 %v435, %v434
        %v439 = vpack.c.b16 %v437, %v436
        %v443 = vsel %vm389, %v418, 0
        %445 = vmatprep.subr.bf16.mxu0 0
        %446 = vmatpush1.bf16.msra.mxu0 %v438
        %447 = vmatprep.subr.bf16.mxu0 0
        %448 = vmatpush1.bf16.msra.mxu0 %v439
        %449 = vmatprep.subr.bf16.mxu0 0
        %450 = vmatpush1.bf16.msra.mxu0 0
        %451 = vmatprep.subr.bf16.mxu0 0
        %452 = vmatpush1.bf16.msra.mxu0 0
        %453 = vmatprep.subr.bf16.mxu0 0
        %454 = vmatpush1.bf16.msra.mxu0 0
        %455 = vmatprep.subr.bf16.mxu0 0
        %456 = vmatpush1.bf16.msra.mxu0 0
        %457 = vmatprep.subr.bf16.mxu0 0
        %458 = vmatpush1.bf16.msra.mxu0 0
        %459 = vmatprep.subr.bf16.mxu0 0
        %460 = vmatpush1.bf16.msra.mxu0 0
        %461 = vmatprep.subr.bf16.mxu0 0
        %462 = vmatpush1.bf16.msra.mxu0 0
        %463 = vmatprep.subr.bf16.mxu0 0
        %464 = vmatpush1.bf16.msra.mxu0 0
        %465 = vmatprep.subr.bf16.mxu0 0
        %466 = vmatpush1.bf16.msra.mxu0 0
        %467 = vmatprep.subr.bf16.mxu0 0
        %468 = vmatpush1.bf16.msra.mxu0 0
        %469 = vmatprep.subr.bf16.mxu0 0
        %470 = vmatpush1.bf16.msra.mxu0 0
        %471 = vmatprep.subr.bf16.mxu0 0
        %472 = vmatpush1.bf16.msra.mxu0 0
        %473 = vmatprep.subr.bf16.mxu0 0
        %474 = vmatpush1.bf16.msra.mxu0 0
        %475 = vmatprep.subr.bf16.mxu0 0
        %476 = vmatpush1.bf16.msra.mxu0 0
        %477 = vmatprep.mubr.bf16.mxu0 0
        %478 = vmatmul.mubr.bf16.gmra.mrb[0].mxu0 %v443
        %v479 = vpop.f32.mrb[0].mxu0
        %v480 = vadd.f32 %v428, %v479
        %v481 = vpop.f32.mrb[0].mxu0
        %v482 = vpop.f32.mrb[0].mxu0
        %v483 = vpop.f32.mrb[0].mxu0
        %484 = vdwg.mxu0
        %v485 = vpack.c.bf16 %v480, %v480
        %vm486 = vcmask 257024
        %487 = vst.msk [vmem:[%s370] sm:$0xf] %vm486, %v485
        %v489 = vunpack.c.l.b16 %v485
        %v490 = vpack.c.b16 %v489, %v489
        %491 = vrot.lane.b32.xlu0 %v490, 96
        %v492 = vpop.permute.xlu0 %491
        %494 = vst.msk [vmem:[%s377] sm:$0xf] %vm486, %v492
        %495 = vrot.lane.b32.xlu0 %v490, 64
        %v496 = vpop.permute.xlu0 %495
        %498 = vst.msk [vmem:[%s384] sm:$0xf] %vm486, %v496
        %s499 = sand.u32 %s164, 1
        %s500 = scalar_lea.sflag [#allocation4], %s499
        %s501 = sand.u32 %s164, 1
        %s502 = smul.addr %s501, 4
        %s503 = scalar_lea.vmem [#allocation11], %s502
        %s504 = sand.u32 %s30, 1
        %s505 = scalar_lea.sflag [#allocation13], %s504
        %s506 = sand.u32 %s192, 1
        %s507 = smul.addr %s506, 4
        %s508 = scalar_lea.vmem [#allocation12], %s507
        %s509 = sand.u32 %s30, 1
        %s510 = scalar_lea.sflag [#allocation13], %s509
        %s511 = sand.u32 %s220, 1
        %s512 = smul.addr %s511, 4
        %s513 = scalar_lea.vmem [#allocation14], %s512
        // Predicated region
        $region61: #{gigachad_forward.7} parent=39 // pred_check
          %p514 = pneg %p174
        $region62: #{gigachad_forward.7} parent=39 // pred_check_branch
          %516 = sbr.rel (%p514) target = $region64
        $region63: #{gigachad_forward.7} parent=39 // pred_region
          %s518 = ssub.s32 64, 64
          %519 = vsyncadd %s500, %s518
          %s520 = sadd.s32 %s35, %s34
          %s521 = smul.addr %s520, 64
          %s522 = scalar_lea.hbm %s5, %s521
          %s524 = sshll.u32 %s503, 4
          %s525 = int_to_ptr.vmem [resolvable:$true] %s524
          %527 = dma.vmem_to_hbm [thread:$0]  %s525, 64, %s522, %s500
        $region64: #{gigachad_forward.7} parent=39 // pred_fallthru
          _
        // Predicated region
        $region65: #{gigachad_forward.7} parent=39 // pred_check
          %p528 = pneg %p202
        $region66: #{gigachad_forward.7} parent=39 // pred_check_branch
          %530 = sbr.rel (%p528) target = $region68
        $region67: #{gigachad_forward.7} parent=39 // pred_region
          %s532 = ssub.s32 64, 64
          %533 = vsyncadd %s505, %s532
          %s534 = sadd.s32 %s35, %s34
          %s535 = smul.addr %s534, 64
          %s536 = scalar_lea.hbm %s6, %s535
          %s538 = sshll.u32 %s508, 4
          %s539 = int_to_ptr.vmem [resolvable:$true] %s538
          %541 = dma.vmem_to_hbm [thread:$0]  %s539, 64, %s536, %s505
        $region68: #{gigachad_forward.7} parent=39 // pred_fallthru
          _
        // Predicated region
        $region69: #{gigachad_forward.7} parent=39 // pred_check
          %p542 = pneg %p230
        $region70: #{gigachad_forward.7} parent=39 // pred_check_branch
          %544 = sbr.rel (%p542) target = $region72
        $region71: #{gigachad_forward.7} parent=39 // pred_region
          %s546 = ssub.s32 64, 64
          %547 = vsyncadd %s510, %s546
          %s548 = sadd.s32 %s35, %s34
          %s549 = smul.addr %s548, 64
          %s550 = scalar_lea.hbm %s7, %s549
          %s552 = sshll.u32 %s513, 4
          %s553 = int_to_ptr.vmem [resolvable:$true] %s552
          %555 = dma.vmem_to_hbm [thread:$0]  %s553, 64, %s550, %s510
        $region72: #{gigachad_forward.7} parent=39 // pred_fallthru
          _
      $region40: #{gigachad_forward.7} parent=5 // pred_fallthru
        _
      %p556 = scmp.le.s32.totalorder 2, %s25
      // Predicated region
      $region73: #{gigachad_forward.7} parent=5 // pred_check
        %p557 = pneg %p556
      $region74: #{gigachad_forward.7} parent=5 // pred_check_branch
        %559 = sbr.rel (%p557) target = $region76
      $region75: #{gigachad_forward.7} parent=5 // pred_region
        %s560 = ssub.s32 %s25, 2
        // Predicated region
        $region77: #{gigachad_forward.7} parent=75 // pred_check
          %p561 = pneg %p180
        $region78: #{gigachad_forward.7} parent=75 // pred_check_branch
          %563 = sbr.rel (%p561) target = $region80
        $region79: #{gigachad_forward.7} parent=75 // pred_region
          %s564 = sand.u32 %s165, 1
          %s565 = scalar_lea.sflag [#allocation4], %s564
          %s566 = sand.u32 %s165, 1
          %s567 = smul.addr %s566, 4
          %s568 = scalar_lea.vmem [#allocation11], %s567
          %569 = dma.done %s565, 64
        $region80: #{gigachad_forward.7} parent=75 // pred_fallthru
          _
        // Predicated region
        $region81: #{gigachad_forward.7} parent=75 // pred_check
          %p570 = pneg %p208
        $region82: #{gigachad_forward.7} parent=75 // pred_check_branch
          %572 = sbr.rel (%p570) target = $region84
        $region83: #{gigachad_forward.7} parent=75 // pred_region
          %s573 = sand.u32 %s31, 1
          %s574 = scalar_lea.sflag [#allocation13], %s573
          %s575 = sand.u32 %s193, 1
          %s576 = smul.addr %s575, 4
          %s577 = scalar_lea.vmem [#allocation12], %s576
          %578 = dma.done %s574, 64
        $region84: #{gigachad_forward.7} parent=75 // pred_fallthru
          _
        // Predicated region
        $region85: #{gigachad_forward.7} parent=75 // pred_check
          %p579 = pneg %p236
        $region86: #{gigachad_forward.7} parent=75 // pred_check_branch
          %581 = sbr.rel (%p579) target = $region88
        $region87: #{gigachad_forward.7} parent=75 // pred_region
          %s582 = sand.u32 %s31, 1
          %s583 = scalar_lea.sflag [#allocation13], %s582
          %s584 = sand.u32 %s221, 1
          %s585 = smul.addr %s584, 4
          %s586 = scalar_lea.vmem [#allocation14], %s585
          %587 = dma.done %s583, 64
        $region88: #{gigachad_forward.7} parent=75 // pred_fallthru
          _
      $region76: #{gigachad_forward.7} parent=5 // pred_fallthru
        _
    $region6: #{gigachad_forward.7} parent=1 // loop_footer
      %s29 = sadd.s32 1, %s25
    $region7: #{gigachad_forward.7} parent=1 // loop_footer_branch
      %24 = sbr.rel target = $region3
    $region8: #{gigachad_forward.7} parent=1 // loop_exit
      _
    %588 = vsyncpa [#allocation3], 1
    %s589 = scalar_lea.sflag [#allocation3], 1
    %590 = vsyncpa %s589, 1
    %591 = vsyncpa [#allocation6], 1
    %592 = vsyncpa [#allocation9], 1
    %593 = vsyncpa [#allocation4], 1
    %s594 = scalar_lea.sflag [#allocation4], 1
    %595 = vsyncpa %s594, 1
    %596 = vsyncpa [#allocation13], 1
    %s597 = scalar_lea.sflag [#allocation13], 1
    %598 = vsyncpa %s597, 1

// kernel: gigachad_forward.9
$region0: #{gigachad_forward.9}
  #allocation0 [shape = 'u32[]', space=smem, size = 0x4, offset = 0x4, fixed_abs, tag = 'smem constant byte address 0x4 - core index']
  #allocation1 [shape = 'u32[144,128]{1,0:T(1,128)}', space=vmem, size = 0x12000, scoped, tag = 'internal scratch']
  %s0 = inlined_call_operand.hbm [shape: f32[2,8,32], index: 0, kind: input, shape index: {}]
  %s1 = inlined_call_operand.hbm [shape: bf16[2,8,32], index: 1, kind: input, shape index: {}]
  %s2 = inlined_call_operand.hbm [shape: bf16[32,32], index: 2, kind: input, shape index: {}]
  %s3 = inlined_call_operand.hbm [shape: f32[1,32], index: 3, kind: input, shape index: {}]
  %s4 = inlined_call_operand.hbm [shape: f32[1,32], index: 4, kind: input, shape index: {}]
  %s5 = inlined_call_operand.hbm [shape: f32[1,32], index: 5, kind: input, shape index: {}]
  %s6 = inlined_call_operand.hbm [shape: bf16[32,128], index: 6, kind: input, shape index: {}]
  %s7 = inlined_call_operand.hbm [shape: f32[1,128], index: 7, kind: input, shape index: {}]
  %s8 = inlined_call_operand.hbm [shape: bf16[128,32], index: 8, kind: input, shape index: {}]
  %s9 = inlined_call_operand.hbm [shape: f32[1,32], index: 9, kind: input, shape index: {}]
  %s10 = inlined_call_operand.hbm [shape: f32[2,8,32], index: 10, kind: output, shape index: {}]
  %s11 = sld [smem:[#allocation0]]
  $region113: #{gigachad_forward.9} parent=0
    _
  %s13 = ssub.s32 1, %s11
  %s14 = scalar_select 0, %s13, %s11
  $region1: #{gigachad_forward.9} parent=0
    #allocation2 [shape = 'u8[8192]{0}', space=vmem, size = 0x2000, scoped, tag = 'input window, operand 0']
    #allocation3 [shape = 's32[2]{0}', space=sflag, size = 0x8, scoped, tag = 'scoped memory for gigachad_forward.9']
    #allocation4 [shape = 's32[2]{0}', space=sflag, size = 0x8, scoped, tag = 'scoped memory for gigachad_forward.9']
    #allocation5 [shape = 'u8[4096]{0}', space=vmem, size = 0x1000, scoped, tag = 'input window, operand 1']
    #allocation6 [shape = 's32[2]{0}', space=sflag, size = 0x8, scoped, tag = 'scoped memory for gigachad_forward.9']
    #allocation7 [shape = 'u8[8192]{0}', space=vmem, size = 0x2000, scoped, tag = 'input window, operand 2, single buffered']
    #allocation8 [shape = 'u8[512]{0}', space=vmem, size = 0x400, scoped, tag = 'input window, operand 3, single buffered']
    #allocation9 [shape = 's32[1]{0}', space=sflag, size = 0x4, scoped, tag = 'scoped memory for gigachad_forward.9']
    #allocation10 [shape = 'u8[512]{0}', space=vmem, size = 0x400, scoped, tag = 'input window, operand 4, single buffered']
    #allocation11 [shape = 'u8[512]{0}', space=vmem, size = 0x400, scoped, tag = 'input window, operand 5, single buffered']
    #allocation12 [shape = 's32[1]{0}', space=sflag, size = 0x4, scoped, tag = 'scoped memory for gigachad_forward.9']
    #allocation13 [shape = 'u8[8192]{0}', space=vmem, size = 0x2000, scoped, tag = 'input window, operand 6, single buffered']
    #allocation14 [shape = 'u8[512]{0}', space=vmem, size = 0x400, scoped, tag = 'input window, operand 7, single buffered']
    #allocation15 [shape = 's32[1]{0}', space=sflag, size = 0x4, scoped, tag = 'scoped memory for gigachad_forward.9']
    #allocation16 [shape = 'u8[32768]{0}', space=vmem, size = 0x8000, scoped, tag = 'input window, operand 8, single buffered']
    #allocation17 [shape = 'u8[512]{0}', space=vmem, size = 0x400, scoped, tag = 'input window, operand 9, single buffered']
    #allocation18 [shape = 's32[1]{0}', space=sflag, size = 0x4, scoped, tag = 'scoped memory for gigachad_forward.9']
    #allocation19 [shape = 'u8[8192]{0}', space=vmem, size = 0x2000, scoped, tag = 'output window, operand 0']
    %15 = vsyncpa [#allocation3], 0
    %s16 = scalar_lea.sflag [#allocation3], 1
    %17 = vsyncpa %s16, 0
    %18 = vsyncpa [#allocation6], 0
    %s19 = scalar_lea.sflag [#allocation6], 1
    %20 = vsyncpa %s19, 0
    %21 = vsyncpa [#allocation9], 0
    %22 = vsyncpa [#allocation12], 0
    %23 = vsyncpa [#allocation15], 0
    %24 = vsyncpa [#allocation18], 0
    %25 = vsyncpa [#allocation4], 0
    %s26 = scalar_lea.sflag [#allocation4], 1
    %27 = vsyncpa %s26, 0
    loop: start=0, step=1, limit=4
    $region2: #{gigachad_forward.9} parent=1 // loop_pre_header
      _
    $region3: #{gigachad_forward.9} parent=1 // loop_header
      %s29 = sphi 0, %s33
      %p30 = scmp.ge.s32.totalorder %s29, 4
      %s36 = sphi 0, %s48
      %s37 = sphi 0, %s44
      %s38 = sphi 0, %s36
      %s39 = sphi 0, %s37
      %s40 = sphi 0, %s38
      %s41 = sphi 0, %s39
      %s53 = sphi 0, %s55
      %s56 = sphi 0, %s53
      %s57 = sphi 0, %s56
      %s73 = sphi 0, %s57
      %s81 = sphi 0, %s83
      %s84 = sphi 0, %s81
      %s85 = sphi 0, %s84
      %s101 = sphi 0, %s85
      %s105 = sphi 0, %s105
      %s107 = sphi 0, %s105
      %s108 = sphi 0, %s107
      %s122 = sphi 0, %s108
      %s126 = sphi 0, %s126
      %s128 = sphi 0, %s126
      %s129 = sphi 0, %s128
      %s143 = sphi 0, %s129
      %s147 = sphi 0, %s147
      %s149 = sphi 0, %s147
      %s150 = sphi 0, %s149
      %s164 = sphi 0, %s150
      %s168 = sphi 0, %s168
      %s170 = sphi 0, %s168
      %s171 = sphi 0, %s170
      %s185 = sphi 0, %s171
      %s189 = sphi 0, %s189
      %s191 = sphi 0, %s189
      %s192 = sphi 0, %s191
      %s206 = sphi 0, %s192
      %s210 = sphi 0, %s210
      %s212 = sphi 0, %s210
      %s213 = sphi 0, %s212
      %s227 = sphi 0, %s213
      %s231 = sphi 0, %s231
      %s233 = sphi 0, %s231
      %s234 = sphi 0, %s233
      %s248 = sphi 0, %s234
      %s252 = sphi 0, %s252
      %s254 = sphi 0, %s252
      %s255 = sphi 0, %s254
      %s269 = sphi 0, %s255
      %s277 = sphi 0, %s279
      %s280 = sphi 0, %s277
      %s281 = sphi 0, %s280
      %s297 = sphi 0, %s281
    $region4: #{gigachad_forward.9} parent=1 // loop_header_branch
      %32 = sbr.rel (%p30) target = $region8
    $region5: #{gigachad_forward.9} parent=1 // loop_body
      %s34 = ssub.s32 %s29, 1
      %s35 = ssub.s32 %s29, 2
      %s42 = sadd.s32 1, %s37
      %p43 = scmp.ge.s32.totalorder %s42, 1
      %s44 = scalar_select %p43, 0, %s42
      %s45 = sadd.s32 1, %s36
      %s46 = scalar_select %p43, %s45, %s36
      %p47 = scmp.ge.s32.totalorder %s46, 2
      %s48 = scalar_select %p47, 0, %s46
      %s49 = ssub.s32 %s36, %s48
      %s50 = ssub.s32 %s37, %s44
      %s51 = sor.u32 %s49, %s50
      %p52 = scmp.eq.s32.totalorder %s51, 0
      %s54 = sadd.s32 %s53, 1
      %s55 = scalar_select %p52, %s53, %s54
      %p58 = pneg %p52
      %p59 = scmp.eq.s32.totalorder %s29, 1
      %p60 = por %p58, %p59
      %p61 = scmp.ne.s32.totalorder %s53, %s56
      %p62 = scmp.eq.s32.totalorder %s29, 0
      %p63 = por %p61, %p62
      %p64 = scmp.ne.s32.totalorder %s53, %s56
      %p65 = scmp.eq.s32.totalorder %s34, 1
      %p66 = por %p64, %p65
      %p67 = scmp.ne.s32.totalorder %s56, %s57
      %p68 = scmp.eq.s32.totalorder %s34, 0
      %p69 = por %p67, %p68
      %p70 = scmp.ne.s32.totalorder %s56, %s57
      %p71 = scmp.eq.s32.totalorder %s35, 1
      %p72 = por %p70, %p71
      %p74 = scmp.ne.s32.totalorder %s57, %s73
      %p75 = scmp.eq.s32.totalorder %s35, 0
      %p76 = por %p74, %p75
      %s77 = ssub.s32 %s36, %s48
      %s78 = ssub.s32 %s37, %s44
      %s79 = sor.u32 %s77, %s78
      %p80 = scmp.eq.s32.totalorder %s79, 0
      %s82 = sadd.s32 %s81, 1
      %s83 = scalar_select %p80, %s81, %s82
      %p86 = pneg %p80
      %p87 = scmp.eq.s32.totalorder %s29, 1
      %p88 = por %p86, %p87
      %p89 = scmp.ne.s32.totalorder %s81, %s84
      %p90 = scmp.eq.s32.totalorder %s29, 0
      %p91 = por %p89, %p90
      %p92 = scmp.ne.s32.totalorder %s81, %s84
      %p93 = scmp.eq.s32.totalorder %s34, 1
      %p94 = por %p92, %p93
      %p95 = scmp.ne.s32.totalorder %s84, %s85
      %p96 = scmp.eq.s32.totalorder %s34, 0
      %p97 = por %p95, %p96
      %p98 = scmp.ne.s32.totalorder %s84, %s85
      %p99 = scmp.eq.s32.totalorder %s35, 1
      %p100 = por %p98, %p99
      %p102 = scmp.ne.s32.totalorder %s85, %s101
      %p103 = scmp.eq.s32.totalorder %s35, 0
      %p104 = por %p102, %p103
      %s106 = sadd.s32 %s105, 1
      %p109 = scmp.eq.s32.totalorder %s29, 1
      %p110 = scmp.ne.s32.totalorder %s105, %s107
      %p111 = scmp.eq.s32.totalorder %s29, 0
      %p112 = por %p110, %p111
      %p113 = scmp.ne.s32.totalorder %s105, %s107
      %p114 = scmp.eq.s32.totalorder %s34, 1
      %p115 = por %p113, %p114
      %p116 = scmp.ne.s32.totalorder %s107, %s108
      %p117 = scmp.eq.s32.totalorder %s34, 0
      %p118 = por %p116, %p117
      %p119 = scmp.ne.s32.totalorder %s107, %s108
      %p120 = scmp.eq.s32.totalorder %s35, 1
      %p121 = por %p119, %p120
      %p123 = scmp.ne.s32.totalorder %s108, %s122
      %p124 = scmp.eq.s32.totalorder %s35, 0
      %p125 = por %p123, %p124
      %s127 = sadd.s32 %s126, 1
      %p130 = scmp.eq.s32.totalorder %s29, 1
      %p131 = scmp.ne.s32.totalorder %s126, %s128
      %p132 = scmp.eq.s32.totalorder %s29, 0
      %p133 = por %p131, %p132
      %p134 = scmp.ne.s32.totalorder %s126, %s128
      %p135 = scmp.eq.s32.totalorder %s34, 1
      %p136 = por %p134, %p135
      %p137 = scmp.ne.s32.totalorder %s128, %s129
      %p138 = scmp.eq.s32.totalorder %s34, 0
      %p139 = por %p137, %p138
      %p140 = scmp.ne.s32.totalorder %s128, %s129
      %p141 = scmp.eq.s32.totalorder %s35, 1
      %p142 = por %p140, %p141
      %p144 = scmp.ne.s32.totalorder %s129, %s143
      %p145 = scmp.eq.s32.totalorder %s35, 0
      %p146 = por %p144, %p145
      %s148 = sadd.s32 %s147, 1
      %p151 = scmp.eq.s32.totalorder %s29, 1
      %p152 = scmp.ne.s32.totalorder %s147, %s149
      %p153 = scmp.eq.s32.totalorder %s29, 0
      %p154 = por %p152, %p153
      %p155 = scmp.ne.s32.totalorder %s147, %s149
      %p156 = scmp.eq.s32.totalorder %s34, 1
      %p157 = por %p155, %p156
      %p158 = scmp.ne.s32.totalorder %s149, %s150
      %p159 = scmp.eq.s32.totalorder %s34, 0
      %p160 = por %p158, %p159
      %p161 = scmp.ne.s32.totalorder %s149, %s150
      %p162 = scmp.eq.s32.totalorder %s35, 1
      %p163 = por %p161, %p162
      %p165 = scmp.ne.s32.totalorder %s150, %s164
      %p166 = scmp.eq.s32.totalorder %s35, 0
      %p167 = por %p165, %p166
      %s169 = sadd.s32 %s168, 1
      %p172 = scmp.eq.s32.totalorder %s29, 1
      %p173 = scmp.ne.s32.totalorder %s168, %s170
      %p174 = scmp.eq.s32.totalorder %s29, 0
      %p175 = por %p173, %p174
      %p176 = scmp.ne.s32.totalorder %s168, %s170
      %p177 = scmp.eq.s32.totalorder %s34, 1
      %p178 = por %p176, %p177
      %p179 = scmp.ne.s32.totalorder %s170, %s171
      %p180 = scmp.eq.s32.totalorder %s34, 0
      %p181 = por %p179, %p180
      %p182 = scmp.ne.s32.totalorder %s170, %s171
      %p183 = scmp.eq.s32.totalorder %s35, 1
      %p184 = por %p182, %p183
      %p186 = scmp.ne.s32.totalorder %s171, %s185
      %p187 = scmp.eq.s32.totalorder %s35, 0
      %p188 = por %p186, %p187
      %s190 = sadd.s32 %s189, 1
      %p193 = scmp.eq.s32.totalorder %s29, 1
      %p194 = scmp.ne.s32.totalorder %s189, %s191
      %p195 = scmp.eq.s32.totalorder %s29, 0
      %p196 = por %p194, %p195
      %p197 = scmp.ne.s32.totalorder %s189, %s191
      %p198 = scmp.eq.s32.totalorder %s34, 1
      %p199 = por %p197, %p198
      %p200 = scmp.ne.s32.totalorder %s191, %s192
      %p201 = scmp.eq.s32.totalorder %s34, 0
      %p202 = por %p200, %p201
      %p203 = scmp.ne.s32.totalorder %s191, %s192
      %p204 = scmp.eq.s32.totalorder %s35, 1
      %p205 = por %p203, %p204
      %p207 = scmp.ne.s32.totalorder %s192, %s206
      %p208 = scmp.eq.s32.totalorder %s35, 0
      %p209 = por %p207, %p208
      %s211 = sadd.s32 %s210, 1
      %p214 = scmp.eq.s32.totalorder %s29, 1
      %p215 = scmp.ne.s32.totalorder %s210, %s212
      %p216 = scmp.eq.s32.totalorder %s29, 0
      %p217 = por %p215, %p216
      %p218 = scmp.ne.s32.totalorder %s210, %s212
      %p219 = scmp.eq.s32.totalorder %s34, 1
      %p220 = por %p218, %p219
      %p221 = scmp.ne.s32.totalorder %s212, %s213
      %p222 = scmp.eq.s32.totalorder %s34, 0
      %p223 = por %p221, %p222
      %p224 = scmp.ne.s32.totalorder %s212, %s213
      %p225 = scmp.eq.s32.totalorder %s35, 1
      %p226 = por %p224, %p225
      %p228 = scmp.ne.s32.totalorder %s213, %s227
      %p229 = scmp.eq.s32.totalorder %s35, 0
      %p230 = por %p228, %p229
      %s232 = sadd.s32 %s231, 1
      %p235 = scmp.eq.s32.totalorder %s29, 1
      %p236 = scmp.ne.s32.totalorder %s231, %s233
      %p237 = scmp.eq.s32.totalorder %s29, 0
      %p238 = por %p236, %p237
      %p239 = scmp.ne.s32.totalorder %s231, %s233
      %p240 = scmp.eq.s32.totalorder %s34, 1
      %p241 = por %p239, %p240
      %p242 = scmp.ne.s32.totalorder %s233, %s234
      %p243 = scmp.eq.s32.totalorder %s34, 0
      %p244 = por %p242, %p243
      %p245 = scmp.ne.s32.totalorder %s233, %s234
      %p246 = scmp.eq.s32.totalorder %s35, 1
      %p247 = por %p245, %p246
      %p249 = scmp.ne.s32.totalorder %s234, %s248
      %p250 = scmp.eq.s32.totalorder %s35, 0
      %p251 = por %p249, %p250
      %s253 = sadd.s32 %s252, 1
      %p256 = scmp.eq.s32.totalorder %s29, 1
      %p257 = scmp.ne.s32.totalorder %s252, %s254
      %p258 = scmp.eq.s32.totalorder %s29, 0
      %p259 = por %p257, %p258
      %p260 = scmp.ne.s32.totalorder %s252, %s254
      %p261 = scmp.eq.s32.totalorder %s34, 1
      %p262 = por %p260, %p261
      %p263 = scmp.ne.s32.totalorder %s254, %s255
      %p264 = scmp.eq.s32.totalorder %s34, 0
      %p265 = por %p263, %p264
      %p266 = scmp.ne.s32.totalorder %s254, %s255
      %p267 = scmp.eq.s32.totalorder %s35, 1
      %p268 = por %p266, %p267
      %p270 = scmp.ne.s32.totalorder %s255, %s269
      %p271 = scmp.eq.s32.totalorder %s35, 0
      %p272 = por %p270, %p271
      %s273 = ssub.s32 %s36, %s48
      %s274 = ssub.s32 %s37, %s44
      %s275 = sor.u32 %s273, %s274
      %p276 = scmp.eq.s32.totalorder %s275, 0
      %s278 = sadd.s32 %s277, 1
      %s279 = scalar_select %p276, %s277, %s278
      %p282 = pneg %p276
      %p283 = scmp.eq.s32.totalorder %s29, 1
      %p284 = por %p282, %p283
      %p285 = scmp.ne.s32.totalorder %s277, %s280
      %p286 = scmp.eq.s32.totalorder %s29, 0
      %p287 = por %p285, %p286
      %p288 = scmp.ne.s32.totalorder %s277, %s280
      %p289 = scmp.eq.s32.totalorder %s34, 1
      %p290 = por %p288, %p289
      %p291 = scmp.ne.s32.totalorder %s280, %s281
      %p292 = scmp.eq.s32.totalorder %s34, 0
      %p293 = por %p291, %p292
      %p294 = scmp.ne.s32.totalorder %s280, %s281
      %p295 = scmp.eq.s32.totalorder %s35, 1
      %p296 = por %p294, %p295
      %p298 = scmp.ne.s32.totalorder %s281, %s297
      %p299 = scmp.eq.s32.totalorder %s35, 0
      %p300 = por %p298, %p299
      %p301 = scmp.le.s32.totalorder 1, %s29
      %p302 = scmp.lt.s32.totalorder %s29, 3
      %p303 = pnand %p301, %p302
      %p304 = pneg %p303
      // Predicated region
      $region9: #{gigachad_forward.9} parent=5 // pred_check
        _
      $region10: #{gigachad_forward.9} parent=5 // pred_check_branch
        %306 = sbr.rel (%p303) target = $region12
      $region11: #{gigachad_forward.9} parent=5 // pred_region
        %s307 = ssub.s32 %s29, 1
        // Predicated region
        $region13: #{gigachad_forward.9} parent=11 // pred_check
          %p308 = pneg %p118
        $region14: #{gigachad_forward.9} parent=11 // pred_check_branch
          %310 = sbr.rel (%p308) target = $region16
        $region15: #{gigachad_forward.9} parent=11 // pred_region
          %s312 = ssub.s32 256, 256
          %313 = vsyncadd [#allocation6], %s312
          %s314 = sshll.u32 [#allocation7], 4
          %s315 = int_to_ptr.vmem [resolvable:$true] %s314
          %320 = dma.hbm_to_vmem [thread:$0]  %s2, 256, %s315, [#allocation6], 64, 64, 4
        $region16: #{gigachad_forward.9} parent=11 // pred_fallthru
          _
        // Predicated region
        $region17: #{gigachad_forward.9} parent=11 // pred_check
          %p321 = pneg %p139
        $region18: #{gigachad_forward.9} parent=11 // pred_check_branch
          %323 = sbr.rel (%p321) target = $region20
        $region19: #{gigachad_forward.9} parent=11 // pred_region
          %s325 = ssub.s32 16, 16
          %326 = vsyncadd [#allocation9], %s325
          %s328 = sshll.u32 [#allocation8], 4
          %s329 = int_to_ptr.vmem [resolvable:$true] %s328
          %331 = dma.hbm_to_vmem [thread:$0]  %s3, 16, %s329, [#allocation9]
        $region20: #{gigachad_forward.9} parent=11 // pred_fallthru
          _
        // Predicated region
        $region21: #{gigachad_forward.9} parent=11 // pred_check
          %p332 = pneg %p160
        $region22: #{gigachad_forward.9} parent=11 // pred_check_branch
          %334 = sbr.rel (%p332) target = $region24
        $region23: #{gigachad_forward.9} parent=11 // pred_region
          %s336 = ssub.s32 16, 16
          %337 = vsyncadd [#allocation9], %s336
          %s339 = sshll.u32 [#allocation10], 4
          %s340 = int_to_ptr.vmem [resolvable:$true] %s339
          %342 = dma.hbm_to_vmem [thread:$0]  %s4, 16, %s340, [#allocation9]
        $region24: #{gigachad_forward.9} parent=11 // pred_fallthru
          _
        // Predicated region
        $region25: #{gigachad_forward.9} parent=11 // pred_check
          %p343 = pneg %p181
        $region26: #{gigachad_forward.9} parent=11 // pred_check_branch
          %345 = sbr.rel (%p343) target = $region28
        $region27: #{gigachad_forward.9} parent=11 // pred_region
          %s347 = ssub.s32 16, 16
          %348 = vsyncadd [#allocation12], %s347
          %s350 = sshll.u32 [#allocation11], 4
          %s351 = int_to_ptr.vmem [resolvable:$true] %s350
          %353 = dma.hbm_to_vmem [thread:$0]  %s5, 16, %s351, [#allocation12]
        $region28: #{gigachad_forward.9} parent=11 // pred_fallthru
          _
        // Predicated region
        $region29: #{gigachad_forward.9} parent=11 // pred_check
          %p354 = pneg %p202
        $region30: #{gigachad_forward.9} parent=11 // pred_check_branch
          %356 = sbr.rel (%p354) target = $region32
        $region31: #{gigachad_forward.9} parent=11 // pred_region
          %s358 = ssub.s32 256, 256
          %359 = vsyncadd [#allocation12], %s358
          %s360 = sshll.u32 [#allocation13], 4
          %s361 = int_to_ptr.vmem [resolvable:$true] %s360
          %366 = dma.hbm_to_vmem [thread:$0]  %s6, 256, %s361, [#allocation12], 64, 64, 4
        $region32: #{gigachad_forward.9} parent=11 // pred_fallthru
          _
        // Predicated region
        $region33: #{gigachad_forward.9} parent=11 // pred_check
          %p367 = pneg %p223
        $region34: #{gigachad_forward.9} parent=11 // pred_check_branch
          %369 = sbr.rel (%p367) target = $region36
        $region35: #{gigachad_forward.9} parent=11 // pred_region
          %s371 = ssub.s32 16, 16
          %372 = vsyncadd [#allocation15], %s371
          %s374 = sshll.u32 [#allocation14], 4
          %s375 = int_to_ptr.vmem [resolvable:$true] %s374
          %377 = dma.hbm_to_vmem [thread:$0]  %s7, 16, %s375, [#allocation15]
        $region36: #{gigachad_forward.9} parent=11 // pred_fallthru
          _
        // Predicated region
        $region37: #{gigachad_forward.9} parent=11 // pred_check
          %p378 = pneg %p244
        $region38: #{gigachad_forward.9} parent=11 // pred_check_branch
          %380 = sbr.rel (%p378) target = $region40
        $region39: #{gigachad_forward.9} parent=11 // pred_region
          %s382 = ssub.s32 1024, 1024
          %383 = vsyncadd [#allocation15], %s382
          %s384 = sshll.u32 [#allocation16], 4
          %s385 = int_to_ptr.vmem [resolvable:$true] %s384
          %390 = dma.hbm_to_vmem [thread:$0]  %s8, 1024, %s385, [#allocation15], 64, 64, 4
        $region40: #{gigachad_forward.9} parent=11 // pred_fallthru
          _
        // Predicated region
        $region41: #{gigachad_forward.9} parent=11 // pred_check
          %p391 = pneg %p265
        $region42: #{gigachad_forward.9} parent=11 // pred_check_branch
          %393 = sbr.rel (%p391) target = $region44
        $region43: #{gigachad_forward.9} parent=11 // pred_region
          %s395 = ssub.s32 16, 16
          %396 = vsyncadd [#allocation18], %s395
          %s398 = sshll.u32 [#allocation17], 4
          %s399 = int_to_ptr.vmem [resolvable:$true] %s398
          %401 = dma.hbm_to_vmem [thread:$0]  %s9, 16, %s399, [#allocation18]
        $region44: #{gigachad_forward.9} parent=11 // pred_fallthru
          _
      $region12: #{gigachad_forward.9} parent=5 // pred_fallthru
        _
      %p402 = scmp.lt.s32.totalorder %s29, 2
      // Predicated region
      $region45: #{gigachad_forward.9} parent=5 // pred_check
        %p403 = pneg %p402
      $region46: #{gigachad_forward.9} parent=5 // pred_check_branch
        %405 = sbr.rel (%p403) target = $region48
      $region47: #{gigachad_forward.9} parent=5 // pred_region
        // Predicated region
        $region49: #{gigachad_forward.9} parent=47 // pred_check
          %p406 = pneg %p63
        $region50: #{gigachad_forward.9} parent=47 // pred_check_branch
          %408 = sbr.rel (%p406) target = $region52
        $region51: #{gigachad_forward.9} parent=47 // pred_region
          %s409 = sand.u32 %s53, 1
          %s410 = scalar_lea.sflag [#allocation3], %s409
          %s411 = sand.u32 %s53, 1
          %s412 = smul.addr %s411, 8
          %s413 = scalar_lea.vmem [#allocation2], %s412
          %s415 = ssub.s32 128, 128
          %416 = vsyncadd %s410, %s415
          %s417 = sadd.s32 %s37, %s36
          %s418 = smul.addr %s417, 128
          %s419 = scalar_lea.hbm %s0, %s418
          %s421 = sshll.u32 %s413, 4
          %s422 = int_to_ptr.vmem [resolvable:$true] %s421
          %424 = dma.hbm_to_vmem [thread:$0]  %s419, 128, %s422, %s410
        $region52: #{gigachad_forward.9} parent=47 // pred_fallthru
          _
        // Predicated region
        $region53: #{gigachad_forward.9} parent=47 // pred_check
          %p425 = pneg %p91
        $region54: #{gigachad_forward.9} parent=47 // pred_check_branch
          %427 = sbr.rel (%p425) target = $region56
        $region55: #{gigachad_forward.9} parent=47 // pred_region
          %s428 = sand.u32 %s29, 1
          %s429 = scalar_lea.sflag [#allocation6], %s428
          %s430 = sand.u32 %s81, 1
          %s431 = smul.addr %s430, 4
          %s432 = scalar_lea.vmem [#allocation5], %s431
          %s434 = ssub.s32 64, 64
          %435 = vsyncadd %s429, %s434
          %s436 = sadd.s32 %s37, %s36
          %s437 = smul.addr %s436, 64
          %s438 = scalar_lea.hbm %s1, %s437
          %s440 = sshll.u32 %s432, 4
          %s441 = int_to_ptr.vmem [resolvable:$true] %s440
          %443 = dma.hbm_to_vmem [thread:$0]  %s438, 64, %s441, %s429
        $region56: #{gigachad_forward.9} parent=47 // pred_fallthru
          _
      $region48: #{gigachad_forward.9} parent=5 // pred_fallthru
        _
      %p444 = scmp.le.s32.totalorder 1, %s29
      %p445 = scmp.lt.s32.totalorder %s29, 3
      %p446 = pnand %p444, %p445
      %p447 = pneg %p446
      // Predicated region
      $region57: #{gigachad_forward.9} parent=5 // pred_check
        _
      $region58: #{gigachad_forward.9} parent=5 // pred_check_branch
        %449 = sbr.rel (%p446) target = $region60
      $region59: #{gigachad_forward.9} parent=5 // pred_region
        %s450 = ssub.s32 %s29, 1
        %s451 = sand.u32 %s56, 1
        %s452 = scalar_lea.sflag [#allocation3], %s451
        %s453 = sand.u32 %s56, 1
        %s454 = smul.addr %s453, 8
        %s455 = scalar_lea.vmem [#allocation2], %s454
        // Predicated region
        $region61: #{gigachad_forward.9} parent=59 // pred_check
          %p456 = pneg %p69
        $region62: #{gigachad_forward.9} parent=59 // pred_check_branch
          %458 = sbr.rel (%p456) target = $region64
        $region63: #{gigachad_forward.9} parent=59 // pred_region
          %459 = dma.done %s452, 128
        $region64: #{gigachad_forward.9} parent=59 // pred_fallthru
          _
        %s460 = sand.u32 %s34, 1
        %s461 = scalar_lea.sflag [#allocation6], %s460
        %s462 = sand.u32 %s84, 1
        %s463 = smul.addr %s462, 4
        %s464 = scalar_lea.vmem [#allocation5], %s463
        // Predicated region
        $region65: #{gigachad_forward.9} parent=59 // pred_check
          %p465 = pneg %p97
        $region66: #{gigachad_forward.9} parent=59 // pred_check_branch
          %467 = sbr.rel (%p465) target = $region68
        $region67: #{gigachad_forward.9} parent=59 // pred_region
          %468 = dma.done %s461, 64
        $region68: #{gigachad_forward.9} parent=59 // pred_fallthru
          _
        // Predicated region
        $region69: #{gigachad_forward.9} parent=59 // pred_check
          %p469 = pneg %p118
        $region70: #{gigachad_forward.9} parent=59 // pred_check_branch
          %471 = sbr.rel (%p469) target = $region72
        $region71: #{gigachad_forward.9} parent=59 // pred_region
          %472 = dma.done [#allocation6], 256
        $region72: #{gigachad_forward.9} parent=59 // pred_fallthru
          _
        // Predicated region
        $region73: #{gigachad_forward.9} parent=59 // pred_check
          %p473 = pneg %p139
        $region74: #{gigachad_forward.9} parent=59 // pred_check_branch
          %475 = sbr.rel (%p473) target = $region76
        $region75: #{gigachad_forward.9} parent=59 // pred_region
          %476 = dma.done [#allocation9], 16
        $region76: #{gigachad_forward.9} parent=59 // pred_fallthru
          _
        // Predicated region
        $region77: #{gigachad_forward.9} parent=59 // pred_check
          %p477 = pneg %p160
        $region78: #{gigachad_forward.9} parent=59 // pred_check_branch
          %479 = sbr.rel (%p477) target = $region80
        $region79: #{gigachad_forward.9} parent=59 // pred_region
          %480 = dma.done [#allocation9], 16
        $region80: #{gigachad_forward.9} parent=59 // pred_fallthru
          _
        // Predicated region
        $region81: #{gigachad_forward.9} parent=59 // pred_check
          %p481 = pneg %p181
        $region82: #{gigachad_forward.9} parent=59 // pred_check_branch
          %483 = sbr.rel (%p481) target = $region84
        $region83: #{gigachad_forward.9} parent=59 // pred_region
          %484 = dma.done [#allocation12], 16
        $region84: #{gigachad_forward.9} parent=59 // pred_fallthru
          _
        // Predicated region
        $region85: #{gigachad_forward.9} parent=59 // pred_check
          %p485 = pneg %p202
        $region86: #{gigachad_forward.9} parent=59 // pred_check_branch
          %487 = sbr.rel (%p485) target = $region88
        $region87: #{gigachad_forward.9} parent=59 // pred_region
          %488 = dma.done [#allocation12], 256
        $region88: #{gigachad_forward.9} parent=59 // pred_fallthru
          _
        // Predicated region
        $region89: #{gigachad_forward.9} parent=59 // pred_check
          %p489 = pneg %p223
        $region90: #{gigachad_forward.9} parent=59 // pred_check_branch
          %491 = sbr.rel (%p489) target = $region92
        $region91: #{gigachad_forward.9} parent=59 // pred_region
          %492 = dma.done [#allocation15], 16
        $region92: #{gigachad_forward.9} parent=59 // pred_fallthru
          _
        // Predicated region
        $region93: #{gigachad_forward.9} parent=59 // pred_check
          %p493 = pneg %p244
        $region94: #{gigachad_forward.9} parent=59 // pred_check_branch
          %495 = sbr.rel (%p493) target = $region96
        $region95: #{gigachad_forward.9} parent=59 // pred_region
          %496 = dma.done [#allocation15], 1024
        $region96: #{gigachad_forward.9} parent=59 // pred_fallthru
          _
        // Predicated region
        $region97: #{gigachad_forward.9} parent=59 // pred_check
          %p497 = pneg %p265
        $region98: #{gigachad_forward.9} parent=59 // pred_check_branch
          %499 = sbr.rel (%p497) target = $region100
        $region99: #{gigachad_forward.9} parent=59 // pred_region
          %500 = dma.done [#allocation18], 16
        $region100: #{gigachad_forward.9} parent=59 // pred_fallthru
          _
        %s501 = sand.u32 %s56, 1
        %s502 = scalar_lea.sflag [#allocation3], %s501
        %s503 = sand.u32 %s56, 1
        %s504 = smul.addr %s503, 8
        %s505 = scalar_lea.vmem [#allocation2], %s504
        %p506 = pneg %p69
        %p507 = pneg %p66
        %s508 = sand.u32 %s34, 1
        %s509 = scalar_lea.sflag [#allocation6], %s508
        %s510 = sand.u32 %s84, 1
        %s511 = smul.addr %s510, 4
        %s512 = scalar_lea.vmem [#allocation5], %s511
        %p513 = pneg %p97
        %p514 = pneg %p94
        %p515 = pneg %p118
        %p516 = pneg %p115
        %p517 = pneg %p139
        %p518 = pneg %p136
        %p519 = pneg %p160
        %p520 = pneg %p157
        %p521 = pneg %p181
        %p522 = pneg %p178
        %p523 = pneg %p202
        %p524 = pneg %p199
        %p525 = pneg %p223
        %p526 = pneg %p220
        %p527 = pneg %p244
        %p528 = pneg %p241
        %p529 = pneg %p265
        %p530 = pneg %p262
        %p531 = pneg %p293
        %p532 = pneg %p290
        %s533 = sand.u32 %s280, 1
        %s534 = scalar_lea.sflag [#allocation4], %s533
        %s535 = sand.u32 %s280, 1
        %s536 = smul.addr %s535, 8
        %s537 = scalar_lea.vmem [#allocation19], %s536
        %v539 = vld [vmem:[%s455] sm:$0xff]
        %v540 = vld [vmem:[%s464] sm:$0xf]
        %v541 = vld [vmem:[#allocation7] sm:$0xf]
        %v542 = vld [vmem:[#allocation7 + $0x4] sm:$0xf]
        %v543 = vld [vmem:[#allocation7 + $0x8] sm:$0xf]
        %v544 = vld [vmem:[#allocation7 + $0xc] sm:$0xf]
        %v549 = vunpack.c.l.b16 %v541
        %v550 = vunpack.c.l.b16 %v542
        %v551 = vunpack.c.l.b16 %v543
        %v552 = vunpack.c.l.b16 %v544
        %v553 = vpack.c.b16 %v550, %v549
        %v554 = vpack.c.b16 %v552, %v551
        %vm557 = vcmask 261120
        %v559 = vsel %vm557, %v540, 0
        %561 = vmatprep.subr.bf16.mxu0 0
        %562 = vmatpush1.bf16.msra.mxu0 %v553
        %563 = vmatprep.subr.bf16.mxu0 0
        %564 = vmatpush1.bf16.msra.mxu0 %v554
        %565 = vmatprep.subr.bf16.mxu0 0
        %566 = vmatpush1.bf16.msra.mxu0 0
        %567 = vmatprep.subr.bf16.mxu0 0
        %568 = vmatpush1.bf16.msra.mxu0 0
        %569 = vmatprep.subr.bf16.mxu0 0
        %570 = vmatpush1.bf16.msra.mxu0 0
        %571 = vmatprep.subr.bf16.mxu0 0
        %572 = vmatpush1.bf16.msra.mxu0 0
        %573 = vmatprep.subr.bf16.mxu0 0
        %574 = vmatpush1.bf16.msra.mxu0 0
        %575 = vmatprep.subr.bf16.mxu0 0
        %576 = vmatpush1.bf16.msra.mxu0 0
        %577 = vmatprep.subr.bf16.mxu0 0
        %578 = vmatpush1.bf16.msra.mxu0 0
        %579 = vmatprep.subr.bf16.mxu0 0
        %580 = vmatpush1.bf16.msra.mxu0 0
        %581 = vmatprep.subr.bf16.mxu0 0
        %582 = vmatpush1.bf16.msra.mxu0 0
        %583 = vmatprep.subr.bf16.mxu0 0
        %584 = vmatpush1.bf16.msra.mxu0 0
        %585 = vmatprep.subr.bf16.mxu0 0
        %586 = vmatpush1.bf16.msra.mxu0 0
        %587 = vmatprep.subr.bf16.mxu0 0
        %588 = vmatpush1.bf16.msra.mxu0 0
        %589 = vmatprep.subr.bf16.mxu0 0
        %590 = vmatpush1.bf16.msra.mxu0 0
        %591 = vmatprep.subr.bf16.mxu0 0
        %592 = vmatpush1.bf16.msra.mxu0 0
        %593 = vmatprep.mubr.bf16.mxu0 0
        %594 = vmatmul.mubr.bf16.gmra.mrb[0].mxu0 %v559
        %v595 = vpop.f32.mrb[0].mxu0
        %v596 = vadd.f32 0.0, %v595
        %v597 = vpop.f32.mrb[0].mxu0
        %v598 = vpop.f32.mrb[0].mxu0
        %v599 = vpop.f32.mrb[0].mxu0
        %600 = vdwg.mxu0
        %v601 = vadd.f32 %v539, %v596
        %v602 = vld [vmem:[#allocation8] sm:$0x1]
        %v604 = vlaneseq
        %v605 = vshrl.u32 %v604, 7
        %v606 = vsub.s32 0, %v605
        %v607 = vrot.slane %v602, %v606
        %v609 = vadd.f32 %v601, %v607
        %v610 = vld [vmem:[#allocation10] sm:$0x1]
        %v611 = vld [vmem:[#allocation11] sm:$0x1]
        %v612 = vsel %vm557, %v609, 0.0
        %613 = vadd.xlane.f32.xlu0 %v612
        %v614 = vpop.xlane.xlu0 %613
        %v615 = vrcp.pop 32.0
        %v616 = vmul.f32 %v614, %v615
        %v617 = vsub.f32 %v609, %v616
        %v618 = vmul.f32 %v617, %v617
        %v619 = vsel %vm557, %v618, 0.0
        %620 = vadd.xlane.f32.xlu0 %v619
        %v621 = vpop.xlane.xlu0 %620
        %v622 = vmul.f32 %v621, %v615
        %v623 = vadd.f32 %v622, 1e-05
        %v624 = vrsqrt.pop %v623
        %v625 = vmul.f32 %v617, %v624
        %v627 = vlaneseq
        %v628 = vshrl.u32 %v627, 7
        %v629 = vsub.s32 0, %v628
        %v630 = vrot.slane %v610, %v629
        %v632 = vmul.f32 %v625, %v630
        %v634 = vlaneseq
        %v635 = vshrl.u32 %v634, 7
        %v636 = vsub.s32 0, %v635
        %v637 = vrot.slane %v611, %v636
        %v639 = vadd.f32 %v632, %v637
        %v640 = vpack.c.bf16 %v639, %v639
        %v641 = vld [vmem:[#allocation13] sm:$0xf]
        %v642 = vld [vmem:[#allocation13 + $0x4] sm:$0xf]
        %v643 = vld [vmem:[#allocation13 + $0x8] sm:$0xf]
        %v644 = vld [vmem:[#allocation13 + $0xc] sm:$0xf]
        %v645 = vld [vmem:[#allocation14] sm:$0x1]
        %v647 = vlaneseq
        %v648 = vshrl.u32 %v647, 7
        %v649 = vsub.s32 0, %v648
        %v650 = vrot.slane %v645, %v649
        %v656 = vunpack.c.l.b16 %v641
        %v657 = vunpack.c.l.b16 %v642
        %v658 = vunpack.c.l.b16 %v643
        %v659 = vunpack.c.l.b16 %v644
        %v660 = vpack.c.b16 %v657, %v656
        %v661 = vpack.c.b16 %v659, %v658
        %v665 = vsel %vm557, %v640, 0
        %667 = vmatprep.subr.bf16.mxu0 0
        %668 = vmatpush1.bf16.msra.mxu0 %v660
        %669 = vmatprep.subr.bf16.mxu0 0
        %670 = vmatpush1.bf16.msra.mxu0 %v661
        %671 = vmatprep.subr.bf16.mxu0 0
        %672 = vmatpush1.bf16.msra.mxu0 0
        %673 = vmatprep.subr.bf16.mxu0 0
        %674 = vmatpush1.bf16.msra.mxu0 0
        %675 = vmatprep.subr.bf16.mxu0 0
        %676 = vmatpush1.bf16.msra.mxu0 0
        %677 = vmatprep.subr.bf16.mxu0 0
        %678 = vmatpush1.bf16.msra.mxu0 0
        %679 = vmatprep.subr.bf16.mxu0 0
        %680 = vmatpush1.bf16.msra.mxu0 0
        %681 = vmatprep.subr.bf16.mxu0 0
        %682 = vmatpush1.bf16.msra.mxu0 0
        %683 = vmatprep.subr.bf16.mxu0 0
        %684 = vmatpush1.bf16.msra.mxu0 0
        %685 = vmatprep.subr.bf16.mxu0 0
        %686 = vmatpush1.bf16.msra.mxu0 0
        %687 = vmatprep.subr.bf16.mxu0 0
        %688 = vmatpush1.bf16.msra.mxu0 0
        %689 = vmatprep.subr.bf16.mxu0 0
        %690 = vmatpush1.bf16.msra.mxu0 0
        %691 = vmatprep.subr.bf16.mxu0 0
        %692 = vmatpush1.bf16.msra.mxu0 0
        %693 = vmatprep.subr.bf16.mxu0 0
        %694 = vmatpush1.bf16.msra.mxu0 0
        %695 = vmatprep.subr.bf16.mxu0 0
        %696 = vmatpush1.bf16.msra.mxu0 0
        %697 = vmatprep.subr.bf16.mxu0 0
        %698 = vmatpush1.bf16.msra.mxu0 0
        %699 = vmatprep.mubr.bf16.mxu0 0
        %700 = vmatmul.mubr.bf16.gmra.mrb[0].mxu0 %v665
        %v701 = vpop.f32.mrb[0].mxu0
        %v702 = vadd.f32 %v650, %v701
        %v703 = vpop.f32.mrb[0].mxu0
        %v704 = vpop.f32.mrb[0].mxu0
        %v705 = vpop.f32.mrb[0].mxu0
        %706 = vdwg.mxu0
        %v707 = vmul.f32 %v702, 0.5
        %v708 = vmul.f32 %v702, 0.044715
        %v709 = vmul.f32 %v708, %v702
        %v710 = vmul.f32 %v709, %v702
        %v711 = vadd.f32 %v702, %v710
        %v712 = vmul.f32 %v711, 0.7978846
        %v713 = vtanh.pop %v712
        %v714 = vadd.f32 %v713, 1.0
        %v715 = vmul.f32 %v707, %v714
        %v716 = vpack.c.bf16 %v715, %v715
        %v717 = vld [vmem:[#allocation16] sm:$0xf]
        %v718 = vld [vmem:[#allocation16 + $0x4] sm:$0xf]
        %v719 = vld [vmem:[#allocation16 + $0x8] sm:$0xf]
        %v720 = vld [vmem:[#allocation16 + $0xc] sm:$0xf]
        %v721 = vld [vmem:[#allocation16 + $0x10] sm:$0xf]
        %v722 = vld [vmem:[#allocation16 + $0x14] sm:$0xf]
        %v723 = vld [vmem:[#allocation16 + $0x18] sm:$0xf]
        %v724 = vld [vmem:[#allocation16 + $0x1c] sm:$0xf]
        %v725 = vld [vmem:[#allocation16 + $0x20] sm:$0xf]
        %v726 = vld [vmem:[#allocation16 + $0x24] sm:$0xf]
        %v727 = vld [vmem:[#allocation16 + $0x28] sm:$0xf]
        %v728 = vld [vmem:[#allocation16 + $0x2c] sm:$0xf]
        %v729 = vld [vmem:[#allocation16 + $0x30] sm:$0xf]
        %v730 = vld [vmem:[#allocation16 + $0x34] sm:$0xf]
        %v731 = vld [vmem:[#allocation16 + $0x38] sm:$0xf]
        %v732 = vld [vmem:[#allocation16 + $0x3c] sm:$0xf]
        %v749 = vunpack.c.l.b16 %v717
        %v750 = vunpack.c.l.b16 %v718
        %v751 = vunpack.c.l.b16 %v719
        %v752 = vunpack.c.l.b16 %v720
        %v753 = vunpack.c.l.b16 %v721
        %v754 = vunpack.c.l.b16 %v722
        %v755 = vunpack.c.l.b16 %v723
        %v756 = vunpack.c.l.b16 %v724
        %v757 = vunpack.c.l.b16 %v725
        %v758 = vunpack.c.l.b16 %v726
        %v759 = vunpack.c.l.b16 %v727
        %v760 = vunpack.c.l.b16 %v728
        %v761 = vunpack.c.l.b16 %v729
        %v762 = vunpack.c.l.b16 %v730
        %v763 = vunpack.c.l.b16 %v731
        %v764 = vunpack.c.l.b16 %v732
        %v765 = vpack.c.b16 %v750, %v749
        %v766 = vpack.c.b16 %v752, %v751
        %v767 = vpack.c.b16 %v754, %v753
        %v768 = vpack.c.b16 %v756, %v755
        %v769 = vpack.c.b16 %v758, %v757
        %v770 = vpack.c.b16 %v760, %v759
        %v771 = vpack.c.b16 %v762, %v761
        %v772 = vpack.c.b16 %v764, %v763
        %781 = vmatprep.subr.bf16.mxu0 0
        %782 = vmatpush1.bf16.msra.mxu0 %v765
        %783 = vmatprep.subr.bf16.mxu0 0
        %784 = vmatpush1.bf16.msra.mxu0 %v766
        %785 = vmatprep.subr.bf16.mxu0 0
        %786 = vmatpush1.bf16.msra.mxu0 %v767
        %787 = vmatprep.subr.bf16.mxu0 0
        %788 = vmatpush1.bf16.msra.mxu0 %v768
        %789 = vmatprep.subr.bf16.mxu0 0
        %790 = vmatpush1.bf16.msra.mxu0 %v769
        %791 = vmatprep.subr.bf16.mxu0 0
        %792 = vmatpush1.bf16.msra.mxu0 %v770
        %793 = vmatprep.subr.bf16.mxu0 0
        %794 = vmatpush1.bf16.msra.mxu0 %v771
        %795 = vmatprep.subr.bf16.mxu0 0
        %796 = vmatpush1.bf16.msra.mxu0 %v772
        %797 = vmatprep.subr.bf16.mxu0 0
        %798 = vmatpush1.bf16.msra.mxu0 0
        %799 = vmatprep.subr.bf16.mxu0 0
        %800 = vmatpush1.bf16.msra.mxu0 0
        %801 = vmatprep.subr.bf16.mxu0 0
        %802 = vmatpush1.bf16.msra.mxu0 0
        %803 = vmatprep.subr.bf16.mxu0 0
        %804 = vmatpush1.bf16.msra.mxu0 0
        %805 = vmatprep.subr.bf16.mxu0 0
        %806 = vmatpush1.bf16.msra.mxu0 0
        %807 = vmatprep.subr.bf16.mxu0 0
        %808 = vmatpush1.bf16.msra.mxu0 0
        %809 = vmatprep.subr.bf16.mxu0 0
        %810 = vmatpush1.bf16.msra.mxu0 0
        %811 = vmatprep.subr.bf16.mxu0 0
        %812 = vmatpush1.bf16.msra.mxu0 0
        %813 = vmatprep.mubr.bf16.mxu0 0
        %814 = vmatmul.mubr.bf16.gmra.mrb[0].mxu0 %v716
        %v815 = vpop.f32.mrb[0].mxu0
        %v816 = vadd.f32 0.0, %v815
        %v817 = vpop.f32.mrb[0].mxu0
        %v818 = vpop.f32.mrb[0].mxu0
        %v819 = vpop.f32.mrb[0].mxu0
        %820 = vdwg.mxu0
        %v821 = vadd.f32 %v609, %v816
        %v822 = vld [vmem:[#allocation17] sm:$0x1]
        %v824 = vlaneseq
        %v825 = vshrl.u32 %v824, 7
        %v826 = vsub.s32 0, %v825
        %v827 = vrot.slane %v822, %v826
        %v829 = vadd.f32 %v821, %v827
        %830 = vst.msk [vmem:[%s537] sm:$0xff] %vm557, %v829
        %s831 = sand.u32 %s280, 1
        %s832 = scalar_lea.sflag [#allocation4], %s831
        %s833 = sand.u32 %s280, 1
        %s834 = smul.addr %s833, 8
        %s835 = scalar_lea.vmem [#allocation19], %s834
        // Predicated region
        $region101: #{gigachad_forward.9} parent=59 // pred_check
          %p836 = pneg %p290
        $region102: #{gigachad_forward.9} parent=59 // pred_check_branch
          %838 = sbr.rel (%p836) target = $region104
        $region103: #{gigachad_forward.9} parent=59 // pred_region
          %s840 = ssub.s32 128, 128
          %841 = vsyncadd %s832, %s840
          %s842 = sadd.s32 %s39, %s38
          %s843 = smul.addr %s842, 128
          %s844 = scalar_lea.hbm %s10, %s843
          %s846 = sshll.u32 %s835, 4
          %s847 = int_to_ptr.vmem [resolvable:$true] %s846
          %849 = dma.vmem_to_hbm [thread:$0]  %s847, 128, %s844, %s832
        $region104: #{gigachad_forward.9} parent=59 // pred_fallthru
          _
      $region60: #{gigachad_forward.9} parent=5 // pred_fallthru
        _
      %p850 = scmp.le.s32.totalorder 2, %s29
      // Predicated region
      $region105: #{gigachad_forward.9} parent=5 // pred_check
        %p851 = pneg %p850
      $region106: #{gigachad_forward.9} parent=5 // pred_check_branch
        %853 = sbr.rel (%p851) target = $region108
      $region107: #{gigachad_forward.9} parent=5 // pred_region
        %s854 = ssub.s32 %s29, 2
        // Predicated region
        $region109: #{gigachad_forward.9} parent=107 // pred_check
          %p855 = pneg %p296
        $region110: #{gigachad_forward.9} parent=107 // pred_check_branch
          %857 = sbr.rel (%p855) target = $region112
        $region111: #{gigachad_forward.9} parent=107 // pred_region
          %s858 = sand.u32 %s281, 1
          %s859 = scalar_lea.sflag [#allocation4], %s858
          %s860 = sand.u32 %s281, 1
          %s861 = smul.addr %s860, 8
          %s862 = scalar_lea.vmem [#allocation19], %s861
          %863 = dma.done %s859, 128
        $region112: #{gigachad_forward.9} parent=107 // pred_fallthru
          _
      $region108: #{gigachad_forward.9} parent=5 // pred_fallthru
        _
    $region6: #{gigachad_forward.9} parent=1 // loop_footer
      %s33 = sadd.s32 1, %s29
    $region7: #{gigachad_forward.9} parent=1 // loop_footer_branch
      %28 = sbr.rel target = $region3
    $region8: #{gigachad_forward.9} parent=1 // loop_exit
      _
    %864 = vsyncpa [#allocation3], 1
    %s865 = scalar_lea.sflag [#allocation3], 1
    %866 = vsyncpa %s865, 1
    %867 = vsyncpa [#allocation6], 1
    %s868 = scalar_lea.sflag [#allocation6], 1
    %869 = vsyncpa %s868, 1
    %870 = vsyncpa [#allocation9], 1
    %871 = vsyncpa [#allocation12], 1
    %872 = vsyncpa [#allocation15], 1
    %873 = vsyncpa [#allocation18], 1
    %874 = vsyncpa [#allocation4], 1
    %s875 = scalar_lea.sflag [#allocation4], 1
    %876 = vsyncpa %s875, 1

// kernel: gigachad_forward.8
$region0: #{gigachad_forward.8}
  #allocation0 [shape = 'u32[]', space=smem, size = 0x4, offset = 0x4, fixed_abs, tag = 'smem constant byte address 0x4 - core index']
  #allocation1 [shape = 'u32[144,128]{1,0:T(1,128)}', space=vmem, size = 0x12000, scoped, tag = 'internal scratch']
  #allocation2 [shape = 'f32[4,8,1]{2,1,0:T(8,128)}', space=vmem, size = 0x4000, scoped, tag = 'scratch operand']
  #allocation3 [shape = 'f32[4,8,1]{2,1,0:T(8,128)}', space=vmem, size = 0x4000, scoped, tag = 'scratch operand']
  #allocation4 [shape = 'f32[4,8,8]{2,1,0:T(8,128)}', space=vmem, size = 0x4000, scoped, tag = 'scratch operand']
  %s0 = inlined_call_operand.hbm [shape: bf16[2,8,32], index: 0, kind: input, shape index: {}]
  %s1 = inlined_call_operand.hbm [shape: bf16[2,8,32], index: 1, kind: input, shape index: {}]
  %s2 = inlined_call_operand.hbm [shape: bf16[2,8,32], index: 2, kind: input, shape index: {}]
  %s3 = inlined_call_operand.hbm [shape: bf16[2,8,32], index: 3, kind: output, shape index: {}]
  %s4 = sld [smem:[#allocation0]]
  $region69: #{gigachad_forward.8} parent=0
    _
  %s6 = ssub.s32 1, %s4
  %s7 = scalar_select 0, %s6, %s4
  $region1: #{gigachad_forward.8} parent=0
    #allocation5 [shape = 'u8[4096]{0}', space=vmem, size = 0x1000, scoped, tag = 'input window, operand 0']
    #allocation6 [shape = 's32[2]{0}', space=sflag, size = 0x8, scoped, tag = 'scoped memory for gigachad_forward.8']
    #allocation7 [shape = 's32[2]{0}', space=sflag, size = 0x8, scoped, tag = 'scoped memory for gigachad_forward.8']
    #allocation8 [shape = 'u8[4096]{0}', space=vmem, size = 0x1000, scoped, tag = 'input window, operand 1']
    #allocation9 [shape = 's32[2]{0}', space=sflag, size = 0x8, scoped, tag = 'scoped memory for gigachad_forward.8']
    #allocation10 [shape = 'u8[4096]{0}', space=vmem, size = 0x1000, scoped, tag = 'input window, operand 2']
    #allocation11 [shape = 'u8[4096]{0}', space=vmem, size = 0x1000, scoped, tag = 'output window, operand 0']
    %8 = vsyncpa [#allocation6], 0
    %s9 = scalar_lea.sflag [#allocation6], 1
    %10 = vsyncpa %s9, 0
    %11 = vsyncpa [#allocation9], 0
    %s12 = scalar_lea.sflag [#allocation9], 1
    %13 = vsyncpa %s12, 0
    %14 = vsyncpa [#allocation7], 0
    %s15 = scalar_lea.sflag [#allocation7], 1
    %16 = vsyncpa %s15, 0
    loop: start=0, step=1, limit=4
    $region2: #{gigachad_forward.8} parent=1 // loop_pre_header
      _
    $region3: #{gigachad_forward.8} parent=1 // loop_header
      %s18 = sphi 0, %s22
      %p19 = scmp.ge.s32.totalorder %s18, 4
      %s25 = sphi 0, %s51
      %s26 = sphi 0, %s47
      %s27 = sphi 0, %s43
      %s28 = sphi 0, %s39
      %s29 = sphi 0, %s25
      %s30 = sphi 0, %s26
      %s31 = sphi 0, %s27
      %s32 = sphi 0, %s28
      %s33 = sphi 0, %s29
      %s34 = sphi 0, %s30
      %s35 = sphi 0, %s31
      %s36 = sphi 0, %s32
      %s58 = sphi 0, %s60
      %s61 = sphi 0, %s58
      %s62 = sphi 0, %s61
      %s78 = sphi 0, %s62
      %s92 = sphi 0, %s94
      %s95 = sphi 0, %s92
      %s96 = sphi 0, %s95
      %s112 = sphi 0, %s96
      %s126 = sphi 0, %s128
      %s129 = sphi 0, %s126
      %s130 = sphi 0, %s129
      %s146 = sphi 0, %s130
      %s156 = sphi 0, %s158
      %s159 = sphi 0, %s156
      %s160 = sphi 0, %s159
      %s176 = sphi 0, %s160
    $region4: #{gigachad_forward.8} parent=1 // loop_header_branch
      %21 = sbr.rel (%p19) target = $region8
    $region5: #{gigachad_forward.8} parent=1 // loop_body
      %s23 = ssub.s32 %s18, 1
      %s24 = ssub.s32 %s18, 2
      %s37 = sadd.s32 1, %s28
      %p38 = scmp.ge.s32.totalorder %s37, 1
      %s39 = scalar_select %p38, 0, %s37
      %s40 = sadd.s32 1, %s27
      %s41 = scalar_select %p38, %s40, %s27
      %p42 = scmp.ge.s32.totalorder %s41, 1
      %s43 = scalar_select %p42, 0, %s41
      %s44 = sadd.s32 1, %s26
      %s45 = scalar_select %p42, %s44, %s26
      %p46 = scmp.ge.s32.totalorder %s45, 1
      %s47 = scalar_select %p46, 0, %s45
      %s48 = sadd.s32 1, %s25
      %s49 = scalar_select %p46, %s48, %s25
      %p50 = scmp.ge.s32.totalorder %s49, 2
      %s51 = scalar_select %p50, 0, %s49
      %s52 = ssub.s32 %s25, %s51
      %s53 = ssub.s32 %s27, %s43
      %s54 = sor.u32 %s52, %s53
      %s55 = ssub.s32 %s26, %s47
      %s56 = sor.u32 %s54, %s55
      %p57 = scmp.eq.s32.totalorder %s56, 0
      %s59 = sadd.s32 %s58, 1
      %s60 = scalar_select %p57, %s58, %s59
      %p63 = pneg %p57
      %p64 = scmp.eq.s32.totalorder %s18, 1
      %p65 = por %p63, %p64
      %p66 = scmp.ne.s32.totalorder %s58, %s61
      %p67 = scmp.eq.s32.totalorder %s18, 0
      %p68 = por %p66, %p67
      %p69 = scmp.ne.s32.totalorder %s58, %s61
      %p70 = scmp.eq.s32.totalorder %s23, 1
      %p71 = por %p69, %p70
      %p72 = scmp.ne.s32.totalorder %s61, %s62
      %p73 = scmp.eq.s32.totalorder %s23, 0
      %p74 = por %p72, %p73
      %p75 = scmp.ne.s32.totalorder %s61, %s62
      %p76 = scmp.eq.s32.totalorder %s24, 1
      %p77 = por %p75, %p76
      %p79 = scmp.ne.s32.totalorder %s62, %s78
      %p80 = scmp.eq.s32.totalorder %s24, 0
      %p81 = por %p79, %p80
      %p82 = scmp.lt.s32.totalorder %s28, %s27
      %s83 = scalar_select %p82, %s28, %s27
      %p84 = scmp.lt.s32.totalorder %s39, %s43
      %s85 = scalar_select %p84, %s39, %s43
      %s86 = ssub.s32 %s25, %s51
      %s87 = ssub.s32 %s83, %s85
      %s88 = sor.u32 %s86, %s87
      %s89 = ssub.s32 %s26, %s47
      %s90 = sor.u32 %s88, %s89
      %p91 = scmp.eq.s32.totalorder %s90, 0
      %s93 = sadd.s32 %s92, 1
      %s94 = scalar_select %p91, %s92, %s93
      %p97 = pneg %p91
      %p98 = scmp.eq.s32.totalorder %s18, 1
      %p99 = por %p97, %p98
      %p100 = scmp.ne.s32.totalorder %s92, %s95
      %p101 = scmp.eq.s32.totalorder %s18, 0
      %p102 = por %p100, %p101
      %p103 = scmp.ne.s32.totalorder %s92, %s95
      %p104 = scmp.eq.s32.totalorder %s23, 1
      %p105 = por %p103, %p104
      %p106 = scmp.ne.s32.totalorder %s95, %s96
      %p107 = scmp.eq.s32.totalorder %s23, 0
      %p108 = por %p106, %p107
      %p109 = scmp.ne.s32.totalorder %s95, %s96
      %p110 = scmp.eq.s32.totalorder %s24, 1
      %p111 = por %p109, %p110
      %p113 = scmp.ne.s32.totalorder %s96, %s112
      %p114 = scmp.eq.s32.totalorder %s24, 0
      %p115 = por %p113, %p114
      %p116 = scmp.lt.s32.totalorder %s28, %s27
      %s117 = scalar_select %p116, %s28, %s27
      %p118 = scmp.lt.s32.totalorder %s39, %s43
      %s119 = scalar_select %p118, %s39, %s43
      %s120 = ssub.s32 %s25, %s51
      %s121 = ssub.s32 %s117, %s119
      %s122 = sor.u32 %s120, %s121
      %s123 = ssub.s32 %s26, %s47
      %s124 = sor.u32 %s122, %s123
      %p125 = scmp.eq.s32.totalorder %s124, 0
      %s127 = sadd.s32 %s126, 1
      %s128 = scalar_select %p125, %s126, %s127
      %p131 = pneg %p125
      %p132 = scmp.eq.s32.totalorder %s18, 1
      %p133 = por %p131, %p132
      %p134 = scmp.ne.s32.totalorder %s126, %s129
      %p135 = scmp.eq.s32.totalorder %s18, 0
      %p136 = por %p134, %p135
      %p137 = scmp.ne.s32.totalorder %s126, %s129
      %p138 = scmp.eq.s32.totalorder %s23, 1
      %p139 = por %p137, %p138
      %p140 = scmp.ne.s32.totalorder %s129, %s130
      %p141 = scmp.eq.s32.totalorder %s23, 0
      %p142 = por %p140, %p141
      %p143 = scmp.ne.s32.totalorder %s129, %s130
      %p144 = scmp.eq.s32.totalorder %s24, 1
      %p145 = por %p143, %p144
      %p147 = scmp.ne.s32.totalorder %s130, %s146
      %p148 = scmp.eq.s32.totalorder %s24, 0
      %p149 = por %p147, %p148
      %s150 = ssub.s32 %s25, %s51
      %s151 = ssub.s32 %s27, %s43
      %s152 = sor.u32 %s150, %s151
      %s153 = ssub.s32 %s26, %s47
      %s154 = sor.u32 %s152, %s153
      %p155 = scmp.eq.s32.totalorder %s154, 0
      %s157 = sadd.s32 %s156, 1
      %s158 = scalar_select %p155, %s156, %s157
      %p161 = pneg %p155
      %p162 = scmp.eq.s32.totalorder %s18, 1
      %p163 = por %p161, %p162
      %p164 = scmp.ne.s32.totalorder %s156, %s159
      %p165 = scmp.eq.s32.totalorder %s18, 0
      %p166 = por %p164, %p165
      %p167 = scmp.ne.s32.totalorder %s156, %s159
      %p168 = scmp.eq.s32.totalorder %s23, 1
      %p169 = por %p167, %p168
      %p170 = scmp.ne.s32.totalorder %s159, %s160
      %p171 = scmp.eq.s32.totalorder %s23, 0
      %p172 = por %p170, %p171
      %p173 = scmp.ne.s32.totalorder %s159, %s160
      %p174 = scmp.eq.s32.totalorder %s24, 1
      %p175 = por %p173, %p174
      %p177 = scmp.ne.s32.totalorder %s160, %s176
      %p178 = scmp.eq.s32.totalorder %s24, 0
      %p179 = por %p177, %p178
      %p180 = scmp.le.s32.totalorder 1, %s18
      %p181 = scmp.lt.s32.totalorder %s18, 3
      %p182 = pnand %p180, %p181
      %p183 = pneg %p182
      // Predicated region
      $region9: #{gigachad_forward.8} parent=5 // pred_check
        _
      $region10: #{gigachad_forward.8} parent=5 // pred_check_branch
        %185 = sbr.rel (%p182) target = $region12
      $region11: #{gigachad_forward.8} parent=5 // pred_region
        %s186 = ssub.s32 %s18, 1
      $region12: #{gigachad_forward.8} parent=5 // pred_fallthru
        _
      %p187 = scmp.lt.s32.totalorder %s18, 2
      // Predicated region
      $region13: #{gigachad_forward.8} parent=5 // pred_check
        %p188 = pneg %p187
      $region14: #{gigachad_forward.8} parent=5 // pred_check_branch
        %190 = sbr.rel (%p188) target = $region16
      $region15: #{gigachad_forward.8} parent=5 // pred_region
        // Predicated region
        $region17: #{gigachad_forward.8} parent=15 // pred_check
          %p191 = pneg %p68
        $region18: #{gigachad_forward.8} parent=15 // pred_check_branch
          %193 = sbr.rel (%p191) target = $region20
        $region19: #{gigachad_forward.8} parent=15 // pred_region
          %s194 = sand.u32 %s58, 1
          %s195 = scalar_lea.sflag [#allocation6], %s194
          %s196 = sand.u32 %s58, 1
          %s197 = smul.addr %s196, 4
          %s198 = scalar_lea.vmem [#allocation5], %s197
          %s200 = ssub.s32 64, 64
          %201 = vsyncadd %s195, %s200
          %s202 = sadd.s32 %s26, %s27
          %s203 = sadd.s32 %s202, %s25
          %s204 = smul.addr %s203, 64
          %s205 = scalar_lea.hbm %s0, %s204
          %s207 = sshll.u32 %s198, 4
          %s208 = int_to_ptr.vmem [resolvable:$true] %s207
          %210 = dma.hbm_to_vmem [thread:$0]  %s205, 64, %s208, %s195
        $region20: #{gigachad_forward.8} parent=15 // pred_fallthru
          _
        // Predicated region
        $region21: #{gigachad_forward.8} parent=15 // pred_check
          %p211 = pneg %p102
        $region22: #{gigachad_forward.8} parent=15 // pred_check_branch
          %213 = sbr.rel (%p211) target = $region24
        $region23: #{gigachad_forward.8} parent=15 // pred_region
          %s214 = sand.u32 %s18, 1
          %s215 = scalar_lea.sflag [#allocation9], %s214
          %s216 = sand.u32 %s92, 1
          %s217 = smul.addr %s216, 4
          %s218 = scalar_lea.vmem [#allocation8], %s217
          %p219 = scmp.lt.s32.totalorder %s28, %s27
          %s220 = scalar_select %p219, %s28, %s27
          %s222 = ssub.s32 64, 64
          %223 = vsyncadd %s215, %s222
          %s224 = sadd.s32 %s26, %s220
          %s225 = sadd.s32 %s224, %s25
          %s226 = smul.addr %s225, 64
          %s227 = scalar_lea.hbm %s1, %s226
          %s229 = sshll.u32 %s218, 4
          %s230 = int_to_ptr.vmem [resolvable:$true] %s229
          %232 = dma.hbm_to_vmem [thread:$0]  %s227, 64, %s230, %s215
        $region24: #{gigachad_forward.8} parent=15 // pred_fallthru
          _
        // Predicated region
        $region25: #{gigachad_forward.8} parent=15 // pred_check
          %p233 = pneg %p136
        $region26: #{gigachad_forward.8} parent=15 // pred_check_branch
          %235 = sbr.rel (%p233) target = $region28
        $region27: #{gigachad_forward.8} parent=15 // pred_region
          %s236 = sand.u32 %s18, 1
          %s237 = scalar_lea.sflag [#allocation9], %s236
          %s238 = sand.u32 %s126, 1
          %s239 = smul.addr %s238, 4
          %s240 = scalar_lea.vmem [#allocation10], %s239
          %p241 = scmp.lt.s32.totalorder %s28, %s27
          %s242 = scalar_select %p241, %s28, %s27
          %s244 = ssub.s32 64, 64
          %245 = vsyncadd %s237, %s244
          %s246 = sadd.s32 %s26, %s242
          %s247 = sadd.s32 %s246, %s25
          %s248 = smul.addr %s247, 64
          %s249 = scalar_lea.hbm %s2, %s248
          %s251 = sshll.u32 %s240, 4
          %s252 = int_to_ptr.vmem [resolvable:$true] %s251
          %254 = dma.hbm_to_vmem [thread:$0]  %s249, 64, %s252, %s237
        $region28: #{gigachad_forward.8} parent=15 // pred_fallthru
          _
      $region16: #{gigachad_forward.8} parent=5 // pred_fallthru
        _
      %p255 = scmp.le.s32.totalorder 1, %s18
      %p256 = scmp.lt.s32.totalorder %s18, 3
      %p257 = pnand %p255, %p256
      %p258 = pneg %p257
      // Predicated region
      $region29: #{gigachad_forward.8} parent=5 // pred_check
        _
      $region30: #{gigachad_forward.8} parent=5 // pred_check_branch
        %260 = sbr.rel (%p257) target = $region32
      $region31: #{gigachad_forward.8} parent=5 // pred_region
        %s261 = ssub.s32 %s18, 1
        %s262 = sand.u32 %s61, 1
        %s263 = scalar_lea.sflag [#allocation6], %s262
        %s264 = sand.u32 %s61, 1
        %s265 = smul.addr %s264, 4
        %s266 = scalar_lea.vmem [#allocation5], %s265
        // Predicated region
        $region33: #{gigachad_forward.8} parent=31 // pred_check
          %p267 = pneg %p74
        $region34: #{gigachad_forward.8} parent=31 // pred_check_branch
          %269 = sbr.rel (%p267) target = $region36
        $region35: #{gigachad_forward.8} parent=31 // pred_region
          %270 = dma.done %s263, 64
        $region36: #{gigachad_forward.8} parent=31 // pred_fallthru
          _
        %s271 = sand.u32 %s23, 1
        %s272 = scalar_lea.sflag [#allocation9], %s271
        %s273 = sand.u32 %s95, 1
        %s274 = smul.addr %s273, 4
        %s275 = scalar_lea.vmem [#allocation8], %s274
        // Predicated region
        $region37: #{gigachad_forward.8} parent=31 // pred_check
          %p276 = pneg %p108
        $region38: #{gigachad_forward.8} parent=31 // pred_check_branch
          %278 = sbr.rel (%p276) target = $region40
        $region39: #{gigachad_forward.8} parent=31 // pred_region
          %279 = dma.done %s272, 64
        $region40: #{gigachad_forward.8} parent=31 // pred_fallthru
          _
        %s280 = sand.u32 %s23, 1
        %s281 = scalar_lea.sflag [#allocation9], %s280
        %s282 = sand.u32 %s129, 1
        %s283 = smul.addr %s282, 4
        %s284 = scalar_lea.vmem [#allocation10], %s283
        // Predicated region
        $region41: #{gigachad_forward.8} parent=31 // pred_check
          %p285 = pneg %p142
        $region42: #{gigachad_forward.8} parent=31 // pred_check_branch
          %287 = sbr.rel (%p285) target = $region44
        $region43: #{gigachad_forward.8} parent=31 // pred_region
          %288 = dma.done %s281, 64
        $region44: #{gigachad_forward.8} parent=31 // pred_fallthru
          _
        %s289 = sand.u32 %s61, 1
        %s290 = scalar_lea.sflag [#allocation6], %s289
        %s291 = sand.u32 %s61, 1
        %s292 = smul.addr %s291, 4
        %s293 = scalar_lea.vmem [#allocation5], %s292
        %p294 = pneg %p74
        %p295 = pneg %p71
        %s296 = sand.u32 %s23, 1
        %s297 = scalar_lea.sflag [#allocation9], %s296
        %s298 = sand.u32 %s95, 1
        %s299 = smul.addr %s298, 4
        %s300 = scalar_lea.vmem [#allocation8], %s299
        %p301 = pneg %p108
        %p302 = pneg %p105
        %s303 = sand.u32 %s23, 1
        %s304 = scalar_lea.sflag [#allocation9], %s303
        %s305 = sand.u32 %s129, 1
        %s306 = smul.addr %s305, 4
        %s307 = scalar_lea.vmem [#allocation10], %s306
        %p308 = pneg %p142
        %p309 = pneg %p139
        %p310 = pneg %p172
        %p311 = pneg %p169
        %s312 = sand.u32 %s159, 1
        %s313 = scalar_lea.sflag [#allocation7], %s312
        %s314 = sand.u32 %s159, 1
        %s315 = smul.addr %s314, 4
        %s316 = scalar_lea.vmem [#allocation11], %s315
        %p317 = scmp.lt.s32.totalorder %s32, %s31
        %s318 = scalar_select %p317, %s32, %s31
        %p319 = scmp.lt.s32.totalorder %s32, %s31
        %s320 = scalar_select %p319, %s32, %s31
        %p322 = scmp.eq.s32.totalorder %s32, 0
        // Predicated region
        $region45: #{gigachad_forward.8} parent=31 // pred_check
          %p323 = pneg %p322
        $region46: #{gigachad_forward.8} parent=31 // pred_check_branch
          %325 = sbr.rel (%p323) target = $region48
        $region47: #{gigachad_forward.8} parent=31 // pred_region
          %vm326 = vcmask 7168
          %327 = vst.msk [vmem:[#allocation2] sm:$0xff] %vm326, -1e+30
          %328 = vst.msk [vmem:[#allocation2 + $0x8] sm:$0xff] %vm326, -1e+30
          %329 = vst.msk [vmem:[#allocation2 + $0x10] sm:$0xff] %vm326, -1e+30
          %330 = vst.msk [vmem:[#allocation2 + $0x18] sm:$0xff] %vm326, -1e+30
          %331 = vst.msk [vmem:[#allocation3] sm:$0xff] %vm326, 0.0
          %332 = vst.msk [vmem:[#allocation3 + $0x8] sm:$0xff] %vm326, 0.0
          %333 = vst.msk [vmem:[#allocation3 + $0x10] sm:$0xff] %vm326, 0.0
          %334 = vst.msk [vmem:[#allocation3 + $0x18] sm:$0xff] %vm326, 0.0
          %vm335 = vcmask 64512
          %336 = vst.msk [vmem:[#allocation4] sm:$0xff] %vm335, 0.0
          %337 = vst.msk [vmem:[#allocation4 + $0x8] sm:$0xff] %vm335, 0.0
          %338 = vst.msk [vmem:[#allocation4 + $0x10] sm:$0xff] %vm335, 0.0
          %339 = vst.msk [vmem:[#allocation4 + $0x18] sm:$0xff] %vm335, 0.0
        $region48: #{gigachad_forward.8} parent=31 // pred_fallthru
          _
        %p340 = scmp.le.s32.totalorder %s32, %s31
        // Predicated region
        $region49: #{gigachad_forward.8} parent=31 // pred_check
          %p341 = pneg %p340
        $region50: #{gigachad_forward.8} parent=31 // pred_check_branch
          %343 = sbr.rel (%p341) target = $region52
        $region51: #{gigachad_forward.8} parent=31 // pred_region
          %v344 = vld [vmem:[%s266] sm:$0xf]
          %346 = vrot.lane.b32.xlu0 %v344, 120
          %v347 = vpop.permute.xlu0 %346
          %348 = vrot.lane.b32.xlu0 %v344, 112
          %v349 = vpop.permute.xlu0 %348
          %350 = vrot.lane.b32.xlu0 %v344, 104
          %v351 = vpop.permute.xlu0 %350
          %v354 = vpack.i.b16 %v347, %v344
          %v355 = vshrl.u32 %v344, 16
          %v356 = vshrl.u32 %v347, 16
          %v357 = vpack.i.b16 %v356, %v355
          %v360 = vpack.i.b16 %v351, %v349
          %v361 = vshrl.u32 %v349, 16
          %v362 = vshrl.u32 %v351, 16
          %v363 = vpack.i.b16 %v362, %v361
          %v366 = vunpack.c.l.s4 1983009808
          %v367 = vunpack.c.0.s8 %v366
          %v368 = vlaneseq
          %v369 = vshrl.u32 %v368, 7
          %v370 = vsub.s32 %v367, %v369
          %v371 = vrot.slane %v354, %v370
          %v374 = vunpack.c.l.s4 1983009808
          %v375 = vunpack.c.0.s8 %v374
          %v376 = vlaneseq
          %v377 = vshrl.u32 %v376, 7
          %v378 = vsub.s32 %v375, %v377
          %v379 = vrot.slane %v360, %v378
          %v380 = vcombine.low %v371, %v379
          %v381 = vcombine.high %v371, %v379
          %v383 = vunpack.c.l.s4 1934713408
          %v384 = vunpack.c.0.s8 %v383
          %v385 = vlaneseq
          %v386 = vshrl.u32 %v385, 7
          %v387 = vsub.s32 %v384, %v386
          %v388 = vrot.slane %v380, %v387
          %v390 = vunpack.c.l.s4 1934713408
          %v391 = vunpack.c.0.s8 %v390
          %v392 = vlaneseq
          %v393 = vshrl.u32 %v392, 7
          %v394 = vsub.s32 %v391, %v393
          %v395 = vrot.slane %v381, %v394
          %v396 = vcombine.high %v388, 0
          %v397 = vcombine.high %v395, 0
          %v400 = vunpack.c.l.s4 1983009808
          %v401 = vunpack.c.0.s8 %v400
          %v402 = vlaneseq
          %v403 = vshrl.u32 %v402, 7
          %v404 = vsub.s32 %v401, %v403
          %v405 = vrot.slane %v357, %v404
          %v408 = vunpack.c.l.s4 1983009808
          %v409 = vunpack.c.0.s8 %v408
          %v410 = vlaneseq
          %v411 = vshrl.u32 %v410, 7
          %v412 = vsub.s32 %v409, %v411
          %v413 = vrot.slane %v363, %v412
          %v414 = vcombine.low %v405, %v413
          %v415 = vcombine.high %v405, %v413
          %v417 = vunpack.c.l.s4 1934713408
          %v418 = vunpack.c.0.s8 %v417
          %v419 = vlaneseq
          %v420 = vshrl.u32 %v419, 7
          %v421 = vsub.s32 %v418, %v420
          %v422 = vrot.slane %v414, %v421
          %v424 = vunpack.c.l.s4 1934713408
          %v425 = vunpack.c.0.s8 %v424
          %v426 = vlaneseq
          %v427 = vshrl.u32 %v426, 7
          %v428 = vsub.s32 %v425, %v427
          %v429 = vrot.slane %v415, %v428
          %v430 = vcombine.high %v422, 0
          %v431 = vcombine.high %v429, 0
          %v432 = vld [vmem:[%s275] sm:$0xf]
          %434 = vrot.lane.b32.xlu0 %v432, 120
          %v435 = vpop.permute.xlu0 %434
          %436 = vrot.lane.b32.xlu0 %v432, 112
          %v437 = vpop.permute.xlu0 %436
          %438 = vrot.lane.b32.xlu0 %v432, 104
          %v439 = vpop.permute.xlu0 %438
          %v442 = vpack.i.b16 %v435, %v432
          %v443 = vshrl.u32 %v432, 16
          %v444 = vshrl.u32 %v435, 16
          %v445 = vpack.i.b16 %v444, %v443
          %v448 = vpack.i.b16 %v439, %v437
          %v449 = vshrl.u32 %v437, 16
          %v450 = vshrl.u32 %v439, 16
          %v451 = vpack.i.b16 %v450, %v449
          %v454 = vunpack.c.l.s4 1983009808
          %v455 = vunpack.c.0.s8 %v454
          %v456 = vlaneseq
          %v457 = vshrl.u32 %v456, 7
          %v458 = vsub.s32 %v455, %v457
          %v459 = vrot.slane %v442, %v458
          %v462 = vunpack.c.l.s4 1983009808
          %v463 = vunpack.c.0.s8 %v462
          %v464 = vlaneseq
          %v465 = vshrl.u32 %v464, 7
          %v466 = vsub.s32 %v463, %v465
          %v467 = vrot.slane %v448, %v466
          %v468 = vcombine.low %v459, %v467
          %v469 = vcombine.high %v459, %v467
          %v471 = vunpack.c.l.s4 1934713408
          %v472 = vunpack.c.0.s8 %v471
          %v473 = vlaneseq
          %v474 = vshrl.u32 %v473, 7
          %v475 = vsub.s32 %v472, %v474
          %v476 = vrot.slane %v468, %v475
          %v478 = vunpack.c.l.s4 1934713408
          %v479 = vunpack.c.0.s8 %v478
          %v480 = vlaneseq
          %v481 = vshrl.u32 %v480, 7
          %v482 = vsub.s32 %v479, %v481
          %v483 = vrot.slane %v469, %v482
          %v484 = vcombine.high %v476, 0
          %v485 = vcombine.high %v483, 0
          %v488 = vunpack.c.l.s4 1983009808
          %v489 = vunpack.c.0.s8 %v488
          %v490 = vlaneseq
          %v491 = vshrl.u32 %v490, 7
          %v492 = vsub.s32 %v489, %v491
          %v493 = vrot.slane %v445, %v492
          %v496 = vunpack.c.l.s4 1983009808
          %v497 = vunpack.c.0.s8 %v496
          %v498 = vlaneseq
          %v499 = vshrl.u32 %v498, 7
          %v500 = vsub.s32 %v497, %v499
          %v501 = vrot.slane %v451, %v500
          %v502 = vcombine.low %v493, %v501
          %v503 = vcombine.high %v493, %v501
          %v505 = vunpack.c.l.s4 1934713408
          %v506 = vunpack.c.0.s8 %v505
          %v507 = vlaneseq
          %v508 = vshrl.u32 %v507, 7
          %v509 = vsub.s32 %v506, %v508
          %v510 = vrot.slane %v502, %v509
          %v512 = vunpack.c.l.s4 1934713408
          %v513 = vunpack.c.0.s8 %v512
          %v514 = vlaneseq
          %v515 = vshrl.u32 %v514, 7
          %v516 = vsub.s32 %v513, %v515
          %v517 = vrot.slane %v503, %v516
          %v518 = vcombine.high %v510, 0
          %v519 = vcombine.high %v517, 0
          %v520 = vld [vmem:[%s284] sm:$0xf]
          %522 = vrot.lane.b32.xlu0 %v520, 120
          %v523 = vpop.permute.xlu0 %522
          %524 = vrot.lane.b32.xlu0 %v520, 112
          %v525 = vpop.permute.xlu0 %524
          %526 = vrot.lane.b32.xlu0 %v520, 104
          %v527 = vpop.permute.xlu0 %526
          %v530 = vpack.i.b16 %v523, %v520
          %v531 = vshrl.u32 %v520, 16
          %v532 = vshrl.u32 %v523, 16
          %v533 = vpack.i.b16 %v532, %v531
          %v536 = vpack.i.b16 %v527, %v525
          %v537 = vshrl.u32 %v525, 16
          %v538 = vshrl.u32 %v527, 16
          %v539 = vpack.i.b16 %v538, %v537
          %v542 = vunpack.c.l.s4 1983009808
          %v543 = vunpack.c.0.s8 %v542
          %v544 = vlaneseq
          %v545 = vshrl.u32 %v544, 7
          %v546 = vsub.s32 %v543, %v545
          %v547 = vrot.slane %v530, %v546
          %v550 = vunpack.c.l.s4 1983009808
          %v551 = vunpack.c.0.s8 %v550
          %v552 = vlaneseq
          %v553 = vshrl.u32 %v552, 7
          %v554 = vsub.s32 %v551, %v553
          %v555 = vrot.slane %v536, %v554
          %v556 = vcombine.low %v547, %v555
          %v557 = vcombine.high %v547, %v555
          %v559 = vunpack.c.l.s4 1934713408
          %v560 = vunpack.c.0.s8 %v559
          %v561 = vlaneseq
          %v562 = vshrl.u32 %v561, 7
          %v563 = vsub.s32 %v560, %v562
          %v564 = vrot.slane %v556, %v563
          %v566 = vunpack.c.l.s4 1934713408
          %v567 = vunpack.c.0.s8 %v566
          %v568 = vlaneseq
          %v569 = vshrl.u32 %v568, 7
          %v570 = vsub.s32 %v567, %v569
          %v571 = vrot.slane %v557, %v570
          %v572 = vcombine.high %v564, 0
          %v573 = vcombine.high %v571, 0
          %v576 = vunpack.c.l.s4 1983009808
          %v577 = vunpack.c.0.s8 %v576
          %v578 = vlaneseq
          %v579 = vshrl.u32 %v578, 7
          %v580 = vsub.s32 %v577, %v579
          %v581 = vrot.slane %v533, %v580
          %v584 = vunpack.c.l.s4 1983009808
          %v585 = vunpack.c.0.s8 %v584
          %v586 = vlaneseq
          %v587 = vshrl.u32 %v586, 7
          %v588 = vsub.s32 %v585, %v587
          %v589 = vrot.slane %v539, %v588
          %v590 = vcombine.low %v581, %v589
          %v591 = vcombine.high %v581, %v589
          %v593 = vunpack.c.l.s4 1934713408
          %v594 = vunpack.c.0.s8 %v593
          %v595 = vlaneseq
          %v596 = vshrl.u32 %v595, 7
          %v597 = vsub.s32 %v594, %v596
          %v598 = vrot.slane %v590, %v597
          %v600 = vunpack.c.l.s4 1934713408
          %v601 = vunpack.c.0.s8 %v600
          %v602 = vlaneseq
          %v603 = vshrl.u32 %v602, 7
          %v604 = vsub.s32 %v601, %v603
          %v605 = vrot.slane %v591, %v604
          %v606 = vcombine.high %v598, 0
          %v607 = vcombine.high %v605, 0
          %v608 = vcombine.low %v388, %v395
          %v610 = vunpack.c.l.s4 1983009808
          %v611 = vunpack.c.0.s8 %v610
          %v612 = vlaneseq
          %v613 = vshrl.u32 %v612, 7
          %v614 = vsub.s32 %v611, %v613
          %v615 = vrot.slane %v608, %v614
          %v616 = vcombine.low %v396, %v397
          %v618 = vunpack.c.l.s4 1983009808
          %v619 = vunpack.c.0.s8 %v618
          %v620 = vlaneseq
          %v621 = vshrl.u32 %v620, 7
          %v622 = vsub.s32 %v619, %v621
          %v623 = vrot.slane %v616, %v622
          %v624 = vcombine.low %v615, %v623
          %v626 = vunpack.c.l.s4 1934713408
          %v627 = vunpack.c.0.s8 %v626
          %v628 = vlaneseq
          %v629 = vshrl.u32 %v628, 7
          %v630 = vsub.s32 %v627, %v629
          %v631 = vrot.slane %v624, %v630
          %v632 = vcombine.high %v631, 0
          %v633 = vcombine.low %v422, %v429
          %v635 = vunpack.c.l.s4 1983009808
          %v636 = vunpack.c.0.s8 %v635
          %v637 = vlaneseq
          %v638 = vshrl.u32 %v637, 7
          %v639 = vsub.s32 %v636, %v638
          %v640 = vrot.slane %v633, %v639
          %v641 = vcombine.low %v430, %v431
          %v643 = vunpack.c.l.s4 1983009808
          %v644 = vunpack.c.0.s8 %v643
          %v645 = vlaneseq
          %v646 = vshrl.u32 %v645, 7
          %v647 = vsub.s32 %v644, %v646
          %v648 = vrot.slane %v641, %v647
          %v649 = vcombine.low %v640, %v648
          %v651 = vunpack.c.l.s4 1934713408
          %v652 = vunpack.c.0.s8 %v651
          %v653 = vlaneseq
          %v654 = vshrl.u32 %v653, 7
          %v655 = vsub.s32 %v652, %v654
          %v656 = vrot.slane %v649, %v655
          %v657 = vcombine.high %v656, 0
          %v660 = vpack.i.b16 %v656, %v631
          %v661 = vshrl.u32 %v631, 16
          %v662 = vshrl.u32 %v656, 16
          %v663 = vpack.i.b16 %v662, %v661
          %v666 = vpack.i.b16 %v657, %v632
          %v667 = vshrl.u32 %v632, 16
          %v668 = vshrl.u32 %v657, 16
          %v669 = vpack.i.b16 %v668, %v667
          %670 = vxpose.xlu0.c.b16.start [1/8] %v476, 128
          %671 = vxpose.xlu0.c.b16.cont [2/8] 0, 128
          %672 = vxpose.xlu0.c.b16.cont [3/8] 0, 128
          %673 = vxpose.xlu0.c.b16.cont [4/8] 0, 128
          %674 = vxpose.xlu0.c.b16.cont [5/8] 0, 128
          %675 = vxpose.xlu0.c.b16.cont [6/8] 0, 128
          %676 = vxpose.xlu0.c.b16.cont [7/8] 0, 128
          %677 = vxpose.xlu0.c.b16.end [8/8] 0, 128
          %v678 = vpop.trf.xlu0
          %v679 = vpop.trf.xlu0
          %v680 = vpop.trf.xlu0
          %v681 = vpop.trf.xlu0
          %v682 = vpop.trf.xlu0
          %v683 = vpop.trf.xlu0
          %v684 = vpop.trf.xlu0
          %v685 = vpop.trf.xlu0
          %686 = vxpose.xlu0.c.b16.start [1/8] %v510, 128
          %687 = vxpose.xlu0.c.b16.cont [2/8] 0, 128
          %688 = vxpose.xlu0.c.b16.cont [3/8] 0, 128
          %689 = vxpose.xlu0.c.b16.cont [4/8] 0, 128
          %690 = vxpose.xlu0.c.b16.cont [5/8] 0, 128
          %691 = vxpose.xlu0.c.b16.cont [6/8] 0, 128
          %692 = vxpose.xlu0.c.b16.cont [7/8] 0, 128
          %693 = vxpose.xlu0.c.b16.end [8/8] 0, 128
          %v694 = vpop.trf.xlu0
          %v695 = vpop.trf.xlu0
          %v696 = vpop.trf.xlu0
          %v697 = vpop.trf.xlu0
          %v698 = vpop.trf.xlu0
          %v699 = vpop.trf.xlu0
          %v700 = vpop.trf.xlu0
          %v701 = vpop.trf.xlu0
          %702 = vxpose.xlu0.c.b16.start [1/8] %v484, 128
          %703 = vxpose.xlu0.c.b16.cont [2/8] 0, 128
          %704 = vxpose.xlu0.c.b16.cont [3/8] 0, 128
          %705 = vxpose.xlu0.c.b16.cont [4/8] 0, 128
          %706 = vxpose.xlu0.c.b16.cont [5/8] 0, 128
          %707 = vxpose.xlu0.c.b16.cont [6/8] 0, 128
          %708 = vxpose.xlu0.c.b16.cont [7/8] 0, 128
          %709 = vxpose.xlu0.c.b16.end [8/8] 0, 128
          %v710 = vpop.trf.xlu0
          %v711 = vpop.trf.xlu0
          %v712 = vpop.trf.xlu0
          %v713 = vpop.trf.xlu0
          %v714 = vpop.trf.xlu0
          %v715 = vpop.trf.xlu0
          %v716 = vpop.trf.xlu0
          %v717 = vpop.trf.xlu0
          %718 = vxpose.xlu0.c.b16.start [1/8] %v518, 128
          %719 = vxpose.xlu0.c.b16.cont [2/8] 0, 128
          %720 = vxpose.xlu0.c.b16.cont [3/8] 0, 128
          %721 = vxpose.xlu0.c.b16.cont [4/8] 0, 128
          %722 = vxpose.xlu0.c.b16.cont [5/8] 0, 128
          %723 = vxpose.xlu0.c.b16.cont [6/8] 0, 128
          %724 = vxpose.xlu0.c.b16.cont [7/8] 0, 128
          %725 = vxpose.xlu0.c.b16.end [8/8] 0, 128
          %v726 = vpop.trf.xlu0
          %v727 = vpop.trf.xlu0
          %v728 = vpop.trf.xlu0
          %v729 = vpop.trf.xlu0
          %v730 = vpop.trf.xlu0
          %v731 = vpop.trf.xlu0
          %v732 = vpop.trf.xlu0
          %v733 = vpop.trf.xlu0
          %734 = vxpose.xlu0.c.b16.start [1/8] %v483, 128
          %735 = vxpose.xlu0.c.b16.cont [2/8] 0, 128
          %736 = vxpose.xlu0.c.b16.cont [3/8] 0, 128
          %737 = vxpose.xlu0.c.b16.cont [4/8] 0, 128
          %738 = vxpose.xlu0.c.b16.cont [5/8] 0, 128
          %739 = vxpose.xlu0.c.b16.cont [6/8] 0, 128
          %740 = vxpose.xlu0.c.b16.cont [7/8] 0, 128
          %741 = vxpose.xlu0.c.b16.end [8/8] 0, 128
          %v742 = vpop.trf.xlu0
          %v743 = vpop.trf.xlu0
          %v744 = vpop.trf.xlu0
          %v745 = vpop.trf.xlu0
          %v746 = vpop.trf.xlu0
          %v747 = vpop.trf.xlu0
          %v748 = vpop.trf.xlu0
          %v749 = vpop.trf.xlu0
          %750 = vxpose.xlu0.c.b16.start [1/8] %v517, 128
          %751 = vxpose.xlu0.c.b16.cont [2/8] 0, 128
          %752 = vxpose.xlu0.c.b16.cont [3/8] 0, 128
          %753 = vxpose.xlu0.c.b16.cont [4/8] 0, 128
          %754 = vxpose.xlu0.c.b16.cont [5/8] 0, 128
          %755 = vxpose.xlu0.c.b16.cont [6/8] 0, 128
          %756 = vxpose.xlu0.c.b16.cont [7/8] 0, 128
          %757 = vxpose.xlu0.c.b16.end [8/8] 0, 128
          %v758 = vpop.trf.xlu0
          %v759 = vpop.trf.xlu0
          %v760 = vpop.trf.xlu0
          %v761 = vpop.trf.xlu0
          %v762 = vpop.trf.xlu0
          %v763 = vpop.trf.xlu0
          %v764 = vpop.trf.xlu0
          %v765 = vpop.trf.xlu0
          %766 = vxpose.xlu0.c.b16.start [1/8] %v485, 128
          %767 = vxpose.xlu0.c.b16.cont [2/8] 0, 128
          %768 = vxpose.xlu0.c.b16.cont [3/8] 0, 128
          %769 = vxpose.xlu0.c.b16.cont [4/8] 0, 128
          %770 = vxpose.xlu0.c.b16.cont [5/8] 0, 128
          %771 = vxpose.xlu0.c.b16.cont [6/8] 0, 128
          %772 = vxpose.xlu0.c.b16.cont [7/8] 0, 128
          %773 = vxpose.xlu0.c.b16.end [8/8] 0, 128
          %v774 = vpop.trf.xlu0
          %v775 = vpop.trf.xlu0
          %v776 = vpop.trf.xlu0
          %v777 = vpop.trf.xlu0
          %v778 = vpop.trf.xlu0
          %v779 = vpop.trf.xlu0
          %v780 = vpop.trf.xlu0
          %v781 = vpop.trf.xlu0
          %782 = vxpose.xlu0.c.b16.start [1/8] %v519, 128
          %783 = vxpose.xlu0.c.b16.cont [2/8] 0, 128
          %784 = vxpose.xlu0.c.b16.cont [3/8] 0, 128
          %785 = vxpose.xlu0.c.b16.cont [4/8] 0, 128
          %786 = vxpose.xlu0.c.b16.cont [5/8] 0, 128
          %787 = vxpose.xlu0.c.b16.cont [6/8] 0, 128
          %788 = vxpose.xlu0.c.b16.cont [7/8] 0, 128
          %789 = vxpose.xlu0.c.b16.end [8/8] 0, 128
          %v790 = vpop.trf.xlu0
          %v791 = vpop.trf.xlu0
          %v792 = vpop.trf.xlu0
          %v793 = vpop.trf.xlu0
          %v794 = vpop.trf.xlu0
          %v795 = vpop.trf.xlu0
          %v796 = vpop.trf.xlu0
          %v797 = vpop.trf.xlu0
          %v798 = vcombine.low %v678, %v742
          %v800 = vunpack.c.l.s4 1983009808
          %v801 = vunpack.c.0.s8 %v800
          %v802 = vlaneseq
          %v803 = vshrl.u32 %v802, 7
          %v804 = vsub.s32 %v801, %v803
          %v805 = vrot.slane %v798, %v804
          %v806 = vcombine.low %v710, %v774
          %v808 = vunpack.c.l.s4 1983009808
          %v809 = vunpack.c.0.s8 %v808
          %v810 = vlaneseq
          %v811 = vshrl.u32 %v810, 7
          %v812 = vsub.s32 %v809, %v811
          %v813 = vrot.slane %v806, %v812
          %v814 = vcombine.low %v805, %v813
          %v815 = vcombine.high %v805, %v813
          %v817 = vunpack.c.l.s4 1934713408
          %v818 = vunpack.c.0.s8 %v817
          %v819 = vlaneseq
          %v820 = vshrl.u32 %v819, 7
          %v821 = vsub.s32 %v818, %v820
          %v822 = vrot.slane %v814, %v821
          %v824 = vunpack.c.l.s4 1934713408
          %v825 = vunpack.c.0.s8 %v824
          %v826 = vlaneseq
          %v827 = vshrl.u32 %v826, 7
          %v828 = vsub.s32 %v825, %v827
          %v829 = vrot.slane %v815, %v828
          %v830 = vcombine.high %v822, 0
          %v831 = vcombine.high %v829, 0
          %v832 = vcombine.low %v694, %v758
          %v834 = vunpack.c.l.s4 1983009808
          %v835 = vunpack.c.0.s8 %v834
          %v836 = vlaneseq
          %v837 = vshrl.u32 %v836, 7
          %v838 = vsub.s32 %v835, %v837
          %v839 = vrot.slane %v832, %v838
          %v840 = vcombine.low %v726, %v790
          %v842 = vunpack.c.l.s4 1983009808
          %v843 = vunpack.c.0.s8 %v842
          %v844 = vlaneseq
          %v845 = vshrl.u32 %v844, 7
          %v846 = vsub.s32 %v843, %v845
          %v847 = vrot.slane %v840, %v846
          %v848 = vcombine.low %v839, %v847
          %v849 = vcombine.high %v839, %v847
          %v851 = vunpack.c.l.s4 1934713408
          %v852 = vunpack.c.0.s8 %v851
          %v853 = vlaneseq
          %v854 = vshrl.u32 %v853, 7
          %v855 = vsub.s32 %v852, %v854
          %v856 = vrot.slane %v848, %v855
          %v858 = vunpack.c.l.s4 1934713408
          %v859 = vunpack.c.0.s8 %v858
          %v860 = vlaneseq
          %v861 = vshrl.u32 %v860, 7
          %v862 = vsub.s32 %v859, %v861
          %v863 = vrot.slane %v849, %v862
          %v864 = vcombine.high %v856, 0
          %v865 = vcombine.high %v863, 0
          %v868 = vpack.i.b16 %v856, %v822
          %v870 = vshrl.u32 %v822, 16
          %v871 = vshrl.u32 %v856, 16
          %v872 = vpack.i.b16 %v871, %v870
          %v876 = vpack.i.b16 %v864, %v830
          %v878 = vshrl.u32 %v830, 16
          %v879 = vshrl.u32 %v864, 16
          %v880 = vpack.i.b16 %v879, %v878
          %v884 = vpack.i.b16 %v863, %v829
          %v886 = vshrl.u32 %v829, 16
          %v887 = vshrl.u32 %v863, 16
          %v888 = vpack.i.b16 %v887, %v886
          %v892 = vpack.i.b16 %v865, %v831
          %v894 = vshrl.u32 %v831, 16
          %v895 = vshrl.u32 %v865, 16
          %v896 = vpack.i.b16 %v895, %v894
          %898 = vxpose.xlu0.c.b16.start [1/8] %v868, 128
          %899 = vxpose.xlu0.c.b16.cont [2/8] 0, 128
          %900 = vxpose.xlu0.c.b16.cont [3/8] 0, 128
          %901 = vxpose.xlu0.c.b16.cont [4/8] 0, 128
          %902 = vxpose.xlu0.c.b16.cont [5/8] 0, 128
          %903 = vxpose.xlu0.c.b16.cont [6/8] 0, 128
          %904 = vxpose.xlu0.c.b16.cont [7/8] 0, 128
          %905 = vxpose.xlu0.c.b16.end [8/8] 0, 128
          %v906 = vpop.trf.xlu0
          %v907 = vpop.trf.xlu0
          %v908 = vpop.trf.xlu0
          %v909 = vpop.trf.xlu0
          %v910 = vpop.trf.xlu0
          %v911 = vpop.trf.xlu0
          %v912 = vpop.trf.xlu0
          %v913 = vpop.trf.xlu0
          %914 = vxpose.xlu0.c.b16.start [1/8] %v872, 128
          %915 = vxpose.xlu0.c.b16.cont [2/8] 0, 128
          %916 = vxpose.xlu0.c.b16.cont [3/8] 0, 128
          %917 = vxpose.xlu0.c.b16.cont [4/8] 0, 128
          %918 = vxpose.xlu0.c.b16.cont [5/8] 0, 128
          %919 = vxpose.xlu0.c.b16.cont [6/8] 0, 128
          %920 = vxpose.xlu0.c.b16.cont [7/8] 0, 128
          %921 = vxpose.xlu0.c.b16.end [8/8] 0, 128
          %v922 = vpop.trf.xlu0
          %v923 = vpop.trf.xlu0
          %v924 = vpop.trf.xlu0
          %v925 = vpop.trf.xlu0
          %v926 = vpop.trf.xlu0
          %v927 = vpop.trf.xlu0
          %v928 = vpop.trf.xlu0
          %v929 = vpop.trf.xlu0
          %930 = vxpose.xlu0.c.b16.start [1/8] %v876, 128
          %931 = vxpose.xlu0.c.b16.cont [2/8] 0, 128
          %932 = vxpose.xlu0.c.b16.cont [3/8] 0, 128
          %933 = vxpose.xlu0.c.b16.cont [4/8] 0, 128
          %934 = vxpose.xlu0.c.b16.cont [5/8] 0, 128
          %935 = vxpose.xlu0.c.b16.cont [6/8] 0, 128
          %936 = vxpose.xlu0.c.b16.cont [7/8] 0, 128
          %937 = vxpose.xlu0.c.b16.end [8/8] 0, 128
          %v938 = vpop.trf.xlu0
          %v939 = vpop.trf.xlu0
          %v940 = vpop.trf.xlu0
          %v941 = vpop.trf.xlu0
          %v942 = vpop.trf.xlu0
          %v943 = vpop.trf.xlu0
          %v944 = vpop.trf.xlu0
          %v945 = vpop.trf.xlu0
          %946 = vxpose.xlu0.c.b16.start [1/8] %v880, 128
          %947 = vxpose.xlu0.c.b16.cont [2/8] 0, 128
          %948 = vxpose.xlu0.c.b16.cont [3/8] 0, 128
          %949 = vxpose.xlu0.c.b16.cont [4/8] 0, 128
          %950 = vxpose.xlu0.c.b16.cont [5/8] 0, 128
          %951 = vxpose.xlu0.c.b16.cont [6/8] 0, 128
          %952 = vxpose.xlu0.c.b16.cont [7/8] 0, 128
          %953 = vxpose.xlu0.c.b16.end [8/8] 0, 128
          %v954 = vpop.trf.xlu0
          %v955 = vpop.trf.xlu0
          %v956 = vpop.trf.xlu0
          %v957 = vpop.trf.xlu0
          %v958 = vpop.trf.xlu0
          %v959 = vpop.trf.xlu0
          %v960 = vpop.trf.xlu0
          %v961 = vpop.trf.xlu0
          %962 = vxpose.xlu0.c.b16.start [1/8] %v884, 128
          %963 = vxpose.xlu0.c.b16.cont [2/8] 0, 128
          %964 = vxpose.xlu0.c.b16.cont [3/8] 0, 128
          %965 = vxpose.xlu0.c.b16.cont [4/8] 0, 128
          %966 = vxpose.xlu0.c.b16.cont [5/8] 0, 128
          %967 = vxpose.xlu0.c.b16.cont [6/8] 0, 128
          %968 = vxpose.xlu0.c.b16.cont [7/8] 0, 128
          %969 = vxpose.xlu0.c.b16.end [8/8] 0, 128
          %v970 = vpop.trf.xlu0
          %v971 = vpop.trf.xlu0
          %v972 = vpop.trf.xlu0
          %v973 = vpop.trf.xlu0
          %v974 = vpop.trf.xlu0
          %v975 = vpop.trf.xlu0
          %v976 = vpop.trf.xlu0
          %v977 = vpop.trf.xlu0
          %978 = vxpose.xlu0.c.b16.start [1/8] %v888, 128
          %979 = vxpose.xlu0.c.b16.cont [2/8] 0, 128
          %980 = vxpose.xlu0.c.b16.cont [3/8] 0, 128
          %981 = vxpose.xlu0.c.b16.cont [4/8] 0, 128
          %982 = vxpose.xlu0.c.b16.cont [5/8] 0, 128
          %983 = vxpose.xlu0.c.b16.cont [6/8] 0, 128
          %984 = vxpose.xlu0.c.b16.cont [7/8] 0, 128
          %985 = vxpose.xlu0.c.b16.end [8/8] 0, 128
          %v986 = vpop.trf.xlu0
          %v987 = vpop.trf.xlu0
          %v988 = vpop.trf.xlu0
          %v989 = vpop.trf.xlu0
          %v990 = vpop.trf.xlu0
          %v991 = vpop.trf.xlu0
          %v992 = vpop.trf.xlu0
          %v993 = vpop.trf.xlu0
          %994 = vxpose.xlu0.c.b16.start [1/8] %v892, 128
          %995 = vxpose.xlu0.c.b16.cont [2/8] 0, 128
          %996 = vxpose.xlu0.c.b16.cont [3/8] 0, 128
          %997 = vxpose.xlu0.c.b16.cont [4/8] 0, 128
          %998 = vxpose.xlu0.c.b16.cont [5/8] 0, 128
          %999 = vxpose.xlu0.c.b16.cont [6/8] 0, 128
          %1000 = vxpose.xlu0.c.b16.cont [7/8] 0, 128
          %1001 = vxpose.xlu0.c.b16.end [8/8] 0, 128
          %v1002 = vpop.trf.xlu0
          %v1003 = vpop.trf.xlu0
          %v1004 = vpop.trf.xlu0
          %v1005 = vpop.trf.xlu0
          %v1006 = vpop.trf.xlu0
          %v1007 = vpop.trf.xlu0
          %v1008 = vpop.trf.xlu0
          %v1009 = vpop.trf.xlu0
          %1010 = vxpose.xlu0.c.b16.start [1/8] %v896, 128
          %1011 = vxpose.xlu0.c.b16.cont [2/8] 0, 128
          %1012 = vxpose.xlu0.c.b16.cont [3/8] 0, 128
          %1013 = vxpose.xlu0.c.b16.cont [4/8] 0, 128
          %1014 = vxpose.xlu0.c.b16.cont [5/8] 0, 128
          %1015 = vxpose.xlu0.c.b16.cont [6/8] 0, 128
          %1016 = vxpose.xlu0.c.b16.cont [7/8] 0, 128
          %1017 = vxpose.xlu0.c.b16.end [8/8] 0, 128
          %v1018 = vpop.trf.xlu0
          %v1019 = vpop.trf.xlu0
          %v1020 = vpop.trf.xlu0
          %v1021 = vpop.trf.xlu0
          %v1022 = vpop.trf.xlu0
          %v1023 = vpop.trf.xlu0
          %v1024 = vpop.trf.xlu0
          %v1025 = vpop.trf.xlu0
          %v1026 = vcombine.low %v906, %v970
          %v1028 = vunpack.c.l.s4 1983009808
          %v1029 = vunpack.c.0.s8 %v1028
          %v1030 = vlaneseq
          %v1031 = vshrl.u32 %v1030, 7
          %v1032 = vsub.s32 %v1029, %v1031
          %v1033 = vrot.slane %v1026, %v1032
          %v1034 = vcombine.low %v938, %v1002
          %v1036 = vunpack.c.l.s4 1983009808
          %v1037 = vunpack.c.0.s8 %v1036
          %v1038 = vlaneseq
          %v1039 = vshrl.u32 %v1038, 7
          %v1040 = vsub.s32 %v1037, %v1039
          %v1041 = vrot.slane %v1034, %v1040
          %v1042 = vcombine.low %v1033, %v1041
          %v1044 = vunpack.c.l.s4 1934713408
          %v1045 = vunpack.c.0.s8 %v1044
          %v1046 = vlaneseq
          %v1047 = vshrl.u32 %v1046, 7
          %v1048 = vsub.s32 %v1045, %v1047
          %v1049 = vrot.slane %v1042, %v1048
          %v1050 = vcombine.high %v1049, 0
          %v1051 = vcombine.low %v922, %v986
          %v1053 = vunpack.c.l.s4 1983009808
          %v1054 = vunpack.c.0.s8 %v1053
          %v1055 = vlaneseq
          %v1056 = vshrl.u32 %v1055, 7
          %v1057 = vsub.s32 %v1054, %v1056
          %v1058 = vrot.slane %v1051, %v1057
          %v1059 = vcombine.low %v954, %v1018
          %v1061 = vunpack.c.l.s4 1983009808
          %v1062 = vunpack.c.0.s8 %v1061
          %v1063 = vlaneseq
          %v1064 = vshrl.u32 %v1063, 7
          %v1065 = vsub.s32 %v1062, %v1064
          %v1066 = vrot.slane %v1059, %v1065
          %v1067 = vcombine.low %v1058, %v1066
          %v1069 = vunpack.c.l.s4 1934713408
          %v1070 = vunpack.c.0.s8 %v1069
          %v1071 = vlaneseq
          %v1072 = vshrl.u32 %v1071, 7
          %v1073 = vsub.s32 %v1070, %v1072
          %v1074 = vrot.slane %v1067, %v1073
          %v1075 = vcombine.high %v1074, 0
          %v1078 = vpack.i.b16 %v1074, %v1049
          %v1079 = vshrl.u32 %v1049, 16
          %v1080 = vshrl.u32 %v1074, 16
          %v1081 = vpack.i.b16 %v1080, %v1079
          %v1084 = vpack.i.b16 %v1075, %v1050
          %v1085 = vshrl.u32 %v1050, 16
          %v1086 = vshrl.u32 %v1075, 16
          %v1087 = vpack.i.b16 %v1086, %v1085
          %vm1088 = vcmask 64512
          %v1090 = vsel %vm1088, %v660, 0
          %vm1092 = vcmask 1043456
          %v1094 = vsel %vm1092, %v1078, 0
          %1096 = vmatprep.subr.bf16.mxu0 0
          %1097 = vmatpush1.bf16.msra.mxu0 %v1094
          %1098 = vmatprep.subr.bf16.mxu0 0
          %1099 = vmatpush1.bf16.msra.mxu0 0
          %1100 = vmatprep.subr.bf16.mxu0 0
          %1101 = vmatpush1.bf16.msra.mxu0 0
          %1102 = vmatprep.subr.bf16.mxu0 0
          %1103 = vmatpush1.bf16.msra.mxu0 0
          %1104 = vmatprep.subr.bf16.mxu0 0
          %1105 = vmatpush1.bf16.msra.mxu0 0
          %1106 = vmatprep.subr.bf16.mxu0 0
          %1107 = vmatpush1.bf16.msra.mxu0 0
          %1108 = vmatprep.subr.bf16.mxu0 0
          %1109 = vmatpush1.bf16.msra.mxu0 0
          %1110 = vmatprep.subr.bf16.mxu0 0
          %1111 = vmatpush1.bf16.msra.mxu0 0
          %1112 = vmatprep.subr.bf16.mxu0 0
          %1113 = vmatpush1.bf16.msra.mxu0 0
          %1114 = vmatprep.subr.bf16.mxu0 0
          %1115 = vmatpush1.bf16.msra.mxu0 0
          %1116 = vmatprep.subr.bf16.mxu0 0
          %1117 = vmatpush1.bf16.msra.mxu0 0
          %1118 = vmatprep.subr.bf16.mxu0 0
          %1119 = vmatpush1.bf16.msra.mxu0 0
          %1120 = vmatprep.subr.bf16.mxu0 0
          %1121 = vmatpush1.bf16.msra.mxu0 0
          %1122 = vmatprep.subr.bf16.mxu0 0
          %1123 = vmatpush1.bf16.msra.mxu0 0
          %1124 = vmatprep.subr.bf16.mxu0 0
          %1125 = vmatpush1.bf16.msra.mxu0 0
          %1126 = vmatprep.subr.bf16.mxu0 0
          %1127 = vmatpush1.bf16.msra.mxu0 0
          %1128 = vmatprep.mubr.bf16.mxu0 0
          %1129 = vmatmul.mubr.bf16.gmra.mrb[0].mxu0 %v1090
          %v1130 = vpop.f32.mrb[0].mxu0
          %v1131 = vadd.f32 0.0, %v1130
          %v1132 = vpop.f32.mrb[0].mxu0
          %v1133 = vpop.f32.mrb[0].mxu0
          %v1134 = vpop.f32.mrb[0].mxu0
          %1135 = vdwg.mxu0
          %v1137 = vsel %vm1088, %v663, 0
          %v1140 = vsel %vm1092, %v1081, 0
          %1142 = vmatprep.subr.bf16.mxu0 0
          %1143 = vmatpush1.bf16.msra.mxu0 %v1140
          %1144 = vmatprep.subr.bf16.mxu0 0
          %1145 = vmatpush1.bf16.msra.mxu0 0
          %1146 = vmatprep.subr.bf16.mxu0 0
          %1147 = vmatpush1.bf16.msra.mxu0 0
          %1148 = vmatprep.subr.bf16.mxu0 0
          %1149 = vmatpush1.bf16.msra.mxu0 0
          %1150 = vmatprep.subr.bf16.mxu0 0
          %1151 = vmatpush1.bf16.msra.mxu0 0
          %1152 = vmatprep.subr.bf16.mxu0 0
          %1153 = vmatpush1.bf16.msra.mxu0 0
          %1154 = vmatprep.subr.bf16.mxu0 0
          %1155 = vmatpush1.bf16.msra.mxu0 0
          %1156 = vmatprep.subr.bf16.mxu0 0
          %1157 = vmatpush1.bf16.msra.mxu0 0
          %1158 = vmatprep.subr.bf16.mxu0 0
          %1159 = vmatpush1.bf16.msra.mxu0 0
          %1160 = vmatprep.subr.bf16.mxu0 0
          %1161 = vmatpush1.bf16.msra.mxu0 0
          %1162 = vmatprep.subr.bf16.mxu0 0
          %1163 = vmatpush1.bf16.msra.mxu0 0
          %1164 = vmatprep.subr.bf16.mxu0 0
          %1165 = vmatpush1.bf16.msra.mxu0 0
          %1166 = vmatprep.subr.bf16.mxu0 0
          %1167 = vmatpush1.bf16.msra.mxu0 0
          %1168 = vmatprep.subr.bf16.mxu0 0
          %1169 = vmatpush1.bf16.msra.mxu0 0
          %1170 = vmatprep.subr.bf16.mxu0 0
          %1171 = vmatpush1.bf16.msra.mxu0 0
          %1172 = vmatprep.subr.bf16.mxu0 0
          %1173 = vmatpush1.bf16.msra.mxu0 0
          %1174 = vmatprep.mubr.bf16.mxu0 0
          %1175 = vmatmul.mubr.bf16.gmra.mrb[0].mxu0 %v1137
          %v1176 = vpop.f32.mrb[0].mxu0
          %v1177 = vadd.f32 0.0, %v1176
          %v1178 = vpop.f32.mrb[0].mxu0
          %v1179 = vpop.f32.mrb[0].mxu0
          %v1180 = vpop.f32.mrb[0].mxu0
          %1181 = vdwg.mxu0
          %v1183 = vsel %vm1088, %v666, 0
          %v1186 = vsel %vm1092, %v1084, 0
          %1188 = vmatprep.subr.bf16.mxu0 0
          %1189 = vmatpush1.bf16.msra.mxu0 %v1186
          %1190 = vmatprep.subr.bf16.mxu0 0
          %1191 = vmatpush1.bf16.msra.mxu0 0
          %1192 = vmatprep.subr.bf16.mxu0 0
          %1193 = vmatpush1.bf16.msra.mxu0 0
          %1194 = vmatprep.subr.bf16.mxu0 0
          %1195 = vmatpush1.bf16.msra.mxu0 0
          %1196 = vmatprep.subr.bf16.mxu0 0
          %1197 = vmatpush1.bf16.msra.mxu0 0
          %1198 = vmatprep.subr.bf16.mxu0 0
          %1199 = vmatpush1.bf16.msra.mxu0 0
          %1200 = vmatprep.subr.bf16.mxu0 0
          %1201 = vmatpush1.bf16.msra.mxu0 0
          %1202 = vmatprep.subr.bf16.mxu0 0
          %1203 = vmatpush1.bf16.msra.mxu0 0
          %1204 = vmatprep.subr.bf16.mxu0 0
          %1205 = vmatpush1.bf16.msra.mxu0 0
          %1206 = vmatprep.subr.bf16.mxu0 0
          %1207 = vmatpush1.bf16.msra.mxu0 0
          %1208 = vmatprep.subr.bf16.mxu0 0
          %1209 = vmatpush1.bf16.msra.mxu0 0
          %1210 = vmatprep.subr.bf16.mxu0 0
          %1211 = vmatpush1.bf16.msra.mxu0 0
          %1212 = vmatprep.subr.bf16.mxu0 0
          %1213 = vmatpush1.bf16.msra.mxu0 0
          %1214 = vmatprep.subr.bf16.mxu0 0
          %1215 = vmatpush1.bf16.msra.mxu0 0
          %1216 = vmatprep.subr.bf16.mxu0 0
          %1217 = vmatpush1.bf16.msra.mxu0 0
          %1218 = vmatprep.subr.bf16.mxu0 0
          %1219 = vmatpush1.bf16.msra.mxu0 0
          %1220 = vmatprep.mubr.bf16.mxu0 0
          %1221 = vmatmul.mubr.bf16.gmra.mrb[0].mxu0 %v1183
          %v1222 = vpop.f32.mrb[0].mxu0
          %v1223 = vadd.f32 0.0, %v1222
          %v1224 = vpop.f32.mrb[0].mxu0
          %v1225 = vpop.f32.mrb[0].mxu0
          %v1226 = vpop.f32.mrb[0].mxu0
          %1227 = vdwg.mxu0
          %v1229 = vsel %vm1088, %v669, 0
          %v1232 = vsel %vm1092, %v1087, 0
          %1234 = vmatprep.subr.bf16.mxu0 0
          %1235 = vmatpush1.bf16.msra.mxu0 %v1232
          %1236 = vmatprep.subr.bf16.mxu0 0
          %1237 = vmatpush1.bf16.msra.mxu0 0
          %1238 = vmatprep.subr.bf16.mxu0 0
          %1239 = vmatpush1.bf16.msra.mxu0 0
          %1240 = vmatprep.subr.bf16.mxu0 0
          %1241 = vmatpush1.bf16.msra.mxu0 0
          %1242 = vmatprep.subr.bf16.mxu0 0
          %1243 = vmatpush1.bf16.msra.mxu0 0
          %1244 = vmatprep.subr.bf16.mxu0 0
          %1245 = vmatpush1.bf16.msra.mxu0 0
          %1246 = vmatprep.subr.bf16.mxu0 0
          %1247 = vmatpush1.bf16.msra.mxu0 0
          %1248 = vmatprep.subr.bf16.mxu0 0
          %1249 = vmatpush1.bf16.msra.mxu0 0
          %1250 = vmatprep.subr.bf16.mxu0 0
          %1251 = vmatpush1.bf16.msra.mxu0 0
          %1252 = vmatprep.subr.bf16.mxu0 0
          %1253 = vmatpush1.bf16.msra.mxu0 0
          %1254 = vmatprep.subr.bf16.mxu0 0
          %1255 = vmatpush1.bf16.msra.mxu0 0
          %1256 = vmatprep.subr.bf16.mxu0 0
          %1257 = vmatpush1.bf16.msra.mxu0 0
          %1258 = vmatprep.subr.bf16.mxu0 0
          %1259 = vmatpush1.bf16.msra.mxu0 0
          %1260 = vmatprep.subr.bf16.mxu0 0
          %1261 = vmatpush1.bf16.msra.mxu0 0
          %1262 = vmatprep.subr.bf16.mxu0 0
          %1263 = vmatpush1.bf16.msra.mxu0 0
          %1264 = vmatprep.subr.bf16.mxu0 0
          %1265 = vmatpush1.bf16.msra.mxu0 0
          %1266 = vmatprep.mubr.bf16.mxu0 0
          %1267 = vmatmul.mubr.bf16.gmra.mrb[0].mxu0 %v1229
          %v1268 = vpop.f32.mrb[0].mxu0
          %v1269 = vadd.f32 0.0, %v1268
          %v1270 = vpop.f32.mrb[0].mxu0
          %v1271 = vpop.f32.mrb[0].mxu0
          %v1272 = vpop.f32.mrb[0].mxu0
          %1273 = vdwg.mxu0
          %v1274 = vmul.f32 %v1131, 0.35355338
          %v1275 = vmul.f32 %v1177, 0.35355338
          %v1276 = vmul.f32 %v1223, 0.35355338
          %v1277 = vmul.f32 %v1269, 0.35355338
          %v1278 = vlaneseq
          %v1279 = vshrl.u32 %v1278, 7
          %v1280 = vlaneseq
          %v1281 = vand.u32 %v1280, 127
          %v1282 = vsub.s32 %v1281, %v1279
          %s1283 = ssub.s32 %s31, %s32
          %s1284 = smul.u32 %s1283, 8
          %v1285 = vstv %s1284
          %vm1286 = vcmp.le.s32.totalorder %v1282, %v1285
          %v1287 = vsel %vm1286, 1, 0
          %vm1288 = vcmp.eq.s32.totalorder %v1287, 1
          %v1289 = vsel %vm1288, %v1274, -1e+30
          %v1290 = vsel %vm1288, %v1275, -1e+30
          %v1291 = vsel %vm1288, %v1276, -1e+30
          %v1292 = vsel %vm1288, %v1277, -1e+30
          %v1293 = vld [vmem:[#allocation2] sm:$0xff]
          %v1294 = vld [vmem:[#allocation2 + $0x8] sm:$0xff]
          %v1295 = vld [vmem:[#allocation2 + $0x10] sm:$0xff]
          %v1296 = vld [vmem:[#allocation2 + $0x18] sm:$0xff]
          %v1297 = vsel %vm1088, %v1289, -inf
          %1298 = vmax.xlane.f32.xlu0 %v1297
          %v1299 = vpop.xlane.xlu0 %1298
          %v1300 = vsel %vm1088, %v1290, -inf
          %1301 = vmax.xlane.f32.xlu0 %v1300
          %v1302 = vpop.xlane.xlu0 %1301
          %v1303 = vsel %vm1088, %v1291, -inf
          %1304 = vmax.xlane.f32.xlu0 %v1303
          %v1305 = vpop.xlane.xlu0 %1304
          %v1306 = vsel %vm1088, %v1292, -inf
          %1307 = vmax.xlane.f32.xlu0 %v1306
          %v1308 = vpop.xlane.xlu0 %1307
          %v1309 = vmax.f32 %v1293, %v1299
          %v1310 = vmax.f32 %v1294, %v1302
          %v1311 = vmax.f32 %v1295, %v1305
          %v1312 = vmax.f32 %v1296, %v1308
          %v1313 = vsub.f32 %v1293, %v1309
          %v1314 = vsub.f32 %v1294, %v1310
          %v1315 = vsub.f32 %v1295, %v1311
          %v1316 = vsub.f32 %v1296, %v1312
          %v1317 = vmul.f32 %v1313, 1.442695
          %v1318 = vpow.pop %v1317
          %v1319 = vmul.f32 %v1314, 1.442695
          %v1320 = vpow.pop %v1319
          %v1321 = vmul.f32 %v1315, 1.442695
          %v1322 = vpow.pop %v1321
          %v1323 = vmul.f32 %v1316, 1.442695
          %v1324 = vpow.pop %v1323
          %1326 = vset.pattern.permute.xlu0 0
          %1327 = vperm.xlu0 %1326, %v1309
          %v1328 = vpop.permute.xlu0 %1327
          %1331 = vset.pattern.permute.xlu0 0
          %1332 = vperm.xlu0 %1331, %v1310
          %v1333 = vpop.permute.xlu0 %1332
          %1336 = vset.pattern.permute.xlu0 0
          %1337 = vperm.xlu0 %1336, %v1311
          %v1338 = vpop.permute.xlu0 %1337
          %1341 = vset.pattern.permute.xlu0 0
          %1342 = vperm.xlu0 %1341, %v1312
          %v1343 = vpop.permute.xlu0 %1342
          %v1345 = vsub.f32 %v1289, %v1328
          %v1346 = vsub.f32 %v1290, %v1333
          %v1347 = vsub.f32 %v1291, %v1338
          %v1348 = vsub.f32 %v1292, %v1343
          %v1349 = vpack.c.bf16 %v1345, %v1345
          %v1350 = vpack.c.bf16 %v1346, %v1346
          %v1351 = vpack.c.bf16 %v1347, %v1347
          %v1352 = vpack.c.bf16 %v1348, %v1348
          %v1354 = vmul.bf16 %v1349, 1069105081
          %v1355 = vpow.bf16.pop %v1354
          %v1357 = vmul.bf16 %v1350, 1069105081
          %v1358 = vpow.bf16.pop %v1357
          %v1360 = vmul.bf16 %v1351, 1069105081
          %v1361 = vpow.bf16.pop %v1360
          %v1363 = vmul.bf16 %v1352, 1069105081
          %v1364 = vpow.bf16.pop %v1363
          %v1365 = vld [vmem:[#allocation3] sm:$0xff]
          %v1366 = vld [vmem:[#allocation3 + $0x8] sm:$0xff]
          %v1367 = vld [vmem:[#allocation3 + $0x10] sm:$0xff]
          %v1368 = vld [vmem:[#allocation3 + $0x18] sm:$0xff]
          %v1369 = vmul.f32 %v1318, %v1365
          %v1370 = vmul.f32 %v1320, %v1366
          %v1371 = vmul.f32 %v1322, %v1367
          %v1372 = vmul.f32 %v1324, %v1368
          %v1373 = vunpack.c.l.bf16 %v1355
          %v1374 = vunpack.c.l.bf16 %v1358
          %v1375 = vunpack.c.l.bf16 %v1361
          %v1376 = vunpack.c.l.bf16 %v1364
          %v1377 = vsel %vm1088, %v1373, 0.0
          %1378 = vadd.xlane.f32.xlu0 %v1377
          %v1379 = vpop.xlane.xlu0 %1378
          %v1380 = vsel %vm1088, %v1374, 0.0
          %1381 = vadd.xlane.f32.xlu0 %v1380
          %v1382 = vpop.xlane.xlu0 %1381
          %v1383 = vsel %vm1088, %v1375, 0.0
          %1384 = vadd.xlane.f32.xlu0 %v1383
          %v1385 = vpop.xlane.xlu0 %1384
          %v1386 = vsel %vm1088, %v1376, 0.0
          %1387 = vadd.xlane.f32.xlu0 %v1386
          %v1388 = vpop.xlane.xlu0 %1387
          %v1389 = vadd.f32 %v1369, %v1379
          %v1390 = vadd.f32 %v1370, %v1382
          %v1391 = vadd.f32 %v1371, %v1385
          %v1392 = vadd.f32 %v1372, %v1388
          %vm1393 = vcmask 7168
          %1394 = vst.msk [vmem:[#allocation3] sm:$0xff] %vm1393, %v1389
          %1395 = vst.msk [vmem:[#allocation3 + $0x8] sm:$0xff] %vm1393, %v1390
          %1396 = vst.msk [vmem:[#allocation3 + $0x10] sm:$0xff] %vm1393, %v1391
          %1397 = vst.msk [vmem:[#allocation3 + $0x18] sm:$0xff] %vm1393, %v1392
          %v1398 = vld [vmem:[#allocation4] sm:$0xff]
          %v1399 = vld [vmem:[#allocation4 + $0x8] sm:$0xff]
          %v1400 = vld [vmem:[#allocation4 + $0x10] sm:$0xff]
          %v1401 = vld [vmem:[#allocation4 + $0x18] sm:$0xff]
          %1403 = vset.pattern.permute.xlu0 0
          %1404 = vperm.xlu0 %1403, %v1318
          %v1405 = vpop.permute.xlu0 %1404
          %1408 = vset.pattern.permute.xlu0 0
          %1409 = vperm.xlu0 %1408, %v1320
          %v1410 = vpop.permute.xlu0 %1409
          %1413 = vset.pattern.permute.xlu0 0
          %1414 = vperm.xlu0 %1413, %v1322
          %v1415 = vpop.permute.xlu0 %1414
          %1418 = vset.pattern.permute.xlu0 0
          %1419 = vperm.xlu0 %1418, %v1324
          %v1420 = vpop.permute.xlu0 %1419
          %v1422 = vmul.f32 %v1405, %v1398
          %v1423 = vmul.f32 %v1410, %v1399
          %v1424 = vmul.f32 %v1415, %v1400
          %v1425 = vmul.f32 %v1420, %v1401
          %v1426 = vcombine.low %v564, %v571
          %v1428 = vunpack.c.l.s4 1983009808
          %v1429 = vunpack.c.0.s8 %v1428
          %v1430 = vlaneseq
          %v1431 = vshrl.u32 %v1430, 7
          %v1432 = vsub.s32 %v1429, %v1431
          %v1433 = vrot.slane %v1426, %v1432
          %v1434 = vcombine.low %v572, %v573
          %v1436 = vunpack.c.l.s4 1983009808
          %v1437 = vunpack.c.0.s8 %v1436
          %v1438 = vlaneseq
          %v1439 = vshrl.u32 %v1438, 7
          %v1440 = vsub.s32 %v1437, %v1439
          %v1441 = vrot.slane %v1434, %v1440
          %v1442 = vcombine.low %v1433, %v1441
          %v1444 = vunpack.c.l.s4 1934713408
          %v1445 = vunpack.c.0.s8 %v1444
          %v1446 = vlaneseq
          %v1447 = vshrl.u32 %v1446, 7
          %v1448 = vsub.s32 %v1445, %v1447
          %v1449 = vrot.slane %v1442, %v1448
          %v1450 = vcombine.high %v1449, 0
          %v1451 = vcombine.low %v598, %v605
          %v1453 = vunpack.c.l.s4 1983009808
          %v1454 = vunpack.c.0.s8 %v1453
          %v1455 = vlaneseq
          %v1456 = vshrl.u32 %v1455, 7
          %v1457 = vsub.s32 %v1454, %v1456
          %v1458 = vrot.slane %v1451, %v1457
          %v1459 = vcombine.low %v606, %v607
          %v1461 = vunpack.c.l.s4 1983009808
          %v1462 = vunpack.c.0.s8 %v1461
          %v1463 = vlaneseq
          %v1464 = vshrl.u32 %v1463, 7
          %v1465 = vsub.s32 %v1462, %v1464
          %v1466 = vrot.slane %v1459, %v1465
          %v1467 = vcombine.low %v1458, %v1466
          %v1469 = vunpack.c.l.s4 1934713408
          %v1470 = vunpack.c.0.s8 %v1469
          %v1471 = vlaneseq
          %v1472 = vshrl.u32 %v1471, 7
          %v1473 = vsub.s32 %v1470, %v1472
          %v1474 = vrot.slane %v1467, %v1473
          %v1475 = vcombine.high %v1474, 0
          %v1478 = vpack.i.b16 %v1474, %v1449
          %v1479 = vshrl.u32 %v1449, 16
          %v1480 = vshrl.u32 %v1474, 16
          %v1481 = vpack.i.b16 %v1480, %v1479
          %v1484 = vpack.i.b16 %v1475, %v1450
          %v1485 = vshrl.u32 %v1450, 16
          %v1486 = vshrl.u32 %v1475, 16
          %v1487 = vpack.i.b16 %v1486, %v1485
          %v1489 = vsel %vm1088, %v1355, 0
          %v1492 = vsel %vm1092, %v1478, 0
          %1494 = vmatprep.subr.bf16.mxu0 0
          %1495 = vmatpush1.bf16.msra.mxu0 %v1492
          %1496 = vmatprep.subr.bf16.mxu0 0
          %1497 = vmatpush1.bf16.msra.mxu0 0
          %1498 = vmatprep.subr.bf16.mxu0 0
          %1499 = vmatpush1.bf16.msra.mxu0 0
          %1500 = vmatprep.subr.bf16.mxu0 0
          %1501 = vmatpush1.bf16.msra.mxu0 0
          %1502 = vmatprep.subr.bf16.mxu0 0
          %1503 = vmatpush1.bf16.msra.mxu0 0
          %1504 = vmatprep.subr.bf16.mxu0 0
          %1505 = vmatpush1.bf16.msra.mxu0 0
          %1506 = vmatprep.subr.bf16.mxu0 0
          %1507 = vmatpush1.bf16.msra.mxu0 0
          %1508 = vmatprep.subr.bf16.mxu0 0
          %1509 = vmatpush1.bf16.msra.mxu0 0
          %1510 = vmatprep.subr.bf16.mxu0 0
          %1511 = vmatpush1.bf16.msra.mxu0 0
          %1512 = vmatprep.subr.bf16.mxu0 0
          %1513 = vmatpush1.bf16.msra.mxu0 0
          %1514 = vmatprep.subr.bf16.mxu0 0
          %1515 = vmatpush1.bf16.msra.mxu0 0
          %1516 = vmatprep.subr.bf16.mxu0 0
          %1517 = vmatpush1.bf16.msra.mxu0 0
          %1518 = vmatprep.subr.bf16.mxu0 0
          %1519 = vmatpush1.bf16.msra.mxu0 0
          %1520 = vmatprep.subr.bf16.mxu0 0
          %1521 = vmatpush1.bf16.msra.mxu0 0
          %1522 = vmatprep.subr.bf16.mxu0 0
          %1523 = vmatpush1.bf16.msra.mxu0 0
          %1524 = vmatprep.subr.bf16.mxu0 0
          %1525 = vmatpush1.bf16.msra.mxu0 0
          %1526 = vmatprep.mubr.bf16.mxu0 0
          %1527 = vmatmul.mubr.bf16.gmra.mrb[0].mxu0 %v1489
          %v1528 = vpop.f32.mrb[0].mxu0
          %v1529 = vadd.f32 0.0, %v1528
          %v1530 = vpop.f32.mrb[0].mxu0
          %v1531 = vpop.f32.mrb[0].mxu0
          %v1532 = vpop.f32.mrb[0].mxu0
          %1533 = vdwg.mxu0
          %v1535 = vsel %vm1088, %v1358, 0
          %v1538 = vsel %vm1092, %v1481, 0
          %1540 = vmatprep.subr.bf16.mxu0 0
          %1541 = vmatpush1.bf16.msra.mxu0 %v1538
          %1542 = vmatprep.subr.bf16.mxu0 0
          %1543 = vmatpush1.bf16.msra.mxu0 0
          %1544 = vmatprep.subr.bf16.mxu0 0
          %1545 = vmatpush1.bf16.msra.mxu0 0
          %1546 = vmatprep.subr.bf16.mxu0 0
          %1547 = vmatpush1.bf16.msra.mxu0 0
          %1548 = vmatprep.subr.bf16.mxu0 0
          %1549 = vmatpush1.bf16.msra.mxu0 0
          %1550 = vmatprep.subr.bf16.mxu0 0
          %1551 = vmatpush1.bf16.msra.mxu0 0
          %1552 = vmatprep.subr.bf16.mxu0 0
          %1553 = vmatpush1.bf16.msra.mxu0 0
          %1554 = vmatprep.subr.bf16.mxu0 0
          %1555 = vmatpush1.bf16.msra.mxu0 0
          %1556 = vmatprep.subr.bf16.mxu0 0
          %1557 = vmatpush1.bf16.msra.mxu0 0
          %1558 = vmatprep.subr.bf16.mxu0 0
          %1559 = vmatpush1.bf16.msra.mxu0 0
          %1560 = vmatprep.subr.bf16.mxu0 0
          %1561 = vmatpush1.bf16.msra.mxu0 0
          %1562 = vmatprep.subr.bf16.mxu0 0
          %1563 = vmatpush1.bf16.msra.mxu0 0
          %1564 = vmatprep.subr.bf16.mxu0 0
          %1565 = vmatpush1.bf16.msra.mxu0 0
          %1566 = vmatprep.subr.bf16.mxu0 0
          %1567 = vmatpush1.bf16.msra.mxu0 0
          %1568 = vmatprep.subr.bf16.mxu0 0
          %1569 = vmatpush1.bf16.msra.mxu0 0
          %1570 = vmatprep.subr.bf16.mxu0 0
          %1571 = vmatpush1.bf16.msra.mxu0 0
          %1572 = vmatprep.mubr.bf16.mxu0 0
          %1573 = vmatmul.mubr.bf16.gmra.mrb[0].mxu0 %v1535
          %v1574 = vpop.f32.mrb[0].mxu0
          %v1575 = vadd.f32 0.0, %v1574
          %v1576 = vpop.f32.mrb[0].mxu0
          %v1577 = vpop.f32.mrb[0].mxu0
          %v1578 = vpop.f32.mrb[0].mxu0
          %1579 = vdwg.mxu0
          %v1581 = vsel %vm1088, %v1361, 0
          %v1584 = vsel %vm1092, %v1484, 0
          %1586 = vmatprep.subr.bf16.mxu0 0
          %1587 = vmatpush1.bf16.msra.mxu0 %v1584
          %1588 = vmatprep.subr.bf16.mxu0 0
          %1589 = vmatpush1.bf16.msra.mxu0 0
          %1590 = vmatprep.subr.bf16.mxu0 0
          %1591 = vmatpush1.bf16.msra.mxu0 0
          %1592 = vmatprep.subr.bf16.mxu0 0
          %1593 = vmatpush1.bf16.msra.mxu0 0
          %1594 = vmatprep.subr.bf16.mxu0 0
          %1595 = vmatpush1.bf16.msra.mxu0 0
          %1596 = vmatprep.subr.bf16.mxu0 0
          %1597 = vmatpush1.bf16.msra.mxu0 0
          %1598 = vmatprep.subr.bf16.mxu0 0
          %1599 = vmatpush1.bf16.msra.mxu0 0
          %1600 = vmatprep.subr.bf16.mxu0 0
          %1601 = vmatpush1.bf16.msra.mxu0 0
          %1602 = vmatprep.subr.bf16.mxu0 0
          %1603 = vmatpush1.bf16.msra.mxu0 0
          %1604 = vmatprep.subr.bf16.mxu0 0
          %1605 = vmatpush1.bf16.msra.mxu0 0
          %1606 = vmatprep.subr.bf16.mxu0 0
          %1607 = vmatpush1.bf16.msra.mxu0 0
          %1608 = vmatprep.subr.bf16.mxu0 0
          %1609 = vmatpush1.bf16.msra.mxu0 0
          %1610 = vmatprep.subr.bf16.mxu0 0
          %1611 = vmatpush1.bf16.msra.mxu0 0
          %1612 = vmatprep.subr.bf16.mxu0 0
          %1613 = vmatpush1.bf16.msra.mxu0 0
          %1614 = vmatprep.subr.bf16.mxu0 0
          %1615 = vmatpush1.bf16.msra.mxu0 0
          %1616 = vmatprep.subr.bf16.mxu0 0
          %1617 = vmatpush1.bf16.msra.mxu0 0
          %1618 = vmatprep.mubr.bf16.mxu0 0
          %1619 = vmatmul.mubr.bf16.gmra.mrb[0].mxu0 %v1581
          %v1620 = vpop.f32.mrb[0].mxu0
          %v1621 = vadd.f32 0.0, %v1620
          %v1622 = vpop.f32.mrb[0].mxu0
          %v1623 = vpop.f32.mrb[0].mxu0
          %v1624 = vpop.f32.mrb[0].mxu0
          %1625 = vdwg.mxu0
          %v1627 = vsel %vm1088, %v1364, 0
          %v1630 = vsel %vm1092, %v1487, 0
          %1632 = vmatprep.subr.bf16.mxu0 0
          %1633 = vmatpush1.bf16.msra.mxu0 %v1630
          %1634 = vmatprep.subr.bf16.mxu0 0
          %1635 = vmatpush1.bf16.msra.mxu0 0
          %1636 = vmatprep.subr.bf16.mxu0 0
          %1637 = vmatpush1.bf16.msra.mxu0 0
          %1638 = vmatprep.subr.bf16.mxu0 0
          %1639 = vmatpush1.bf16.msra.mxu0 0
          %1640 = vmatprep.subr.bf16.mxu0 0
          %1641 = vmatpush1.bf16.msra.mxu0 0
          %1642 = vmatprep.subr.bf16.mxu0 0
          %1643 = vmatpush1.bf16.msra.mxu0 0
          %1644 = vmatprep.subr.bf16.mxu0 0
          %1645 = vmatpush1.bf16.msra.mxu0 0
          %1646 = vmatprep.subr.bf16.mxu0 0
          %1647 = vmatpush1.bf16.msra.mxu0 0
          %1648 = vmatprep.subr.bf16.mxu0 0
          %1649 = vmatpush1.bf16.msra.mxu0 0
          %1650 = vmatprep.subr.bf16.mxu0 0
          %1651 = vmatpush1.bf16.msra.mxu0 0
          %1652 = vmatprep.subr.bf16.mxu0 0
          %1653 = vmatpush1.bf16.msra.mxu0 0
          %1654 = vmatprep.subr.bf16.mxu0 0
          %1655 = vmatpush1.bf16.msra.mxu0 0
          %1656 = vmatprep.subr.bf16.mxu0 0
          %1657 = vmatpush1.bf16.msra.mxu0 0
          %1658 = vmatprep.subr.bf16.mxu0 0
          %1659 = vmatpush1.bf16.msra.mxu0 0
          %1660 = vmatprep.subr.bf16.mxu0 0
          %1661 = vmatpush1.bf16.msra.mxu0 0
          %1662 = vmatprep.subr.bf16.mxu0 0
          %1663 = vmatpush1.bf16.msra.mxu0 0
          %1664 = vmatprep.mubr.bf16.mxu0 0
          %1665 = vmatmul.mubr.bf16.gmra.mrb[0].mxu0 %v1627
          %v1666 = vpop.f32.mrb[0].mxu0
          %v1667 = vadd.f32 0.0, %v1666
          %v1668 = vpop.f32.mrb[0].mxu0
          %v1669 = vpop.f32.mrb[0].mxu0
          %v1670 = vpop.f32.mrb[0].mxu0
          %1671 = vdwg.mxu0
          %v1672 = vadd.f32 %v1422, %v1529
          %v1673 = vadd.f32 %v1423, %v1575
          %v1674 = vadd.f32 %v1424, %v1621
          %v1675 = vadd.f32 %v1425, %v1667
          %1676 = vst.msk [vmem:[#allocation4] sm:$0xff] %vm1088, %v1672
          %1677 = vst.msk [vmem:[#allocation4 + $0x8] sm:$0xff] %vm1088, %v1673
          %1678 = vst.msk [vmem:[#allocation4 + $0x10] sm:$0xff] %vm1088, %v1674
          %1679 = vst.msk [vmem:[#allocation4 + $0x18] sm:$0xff] %vm1088, %v1675
          %1680 = vst.msk [vmem:[#allocation2] sm:$0xff] %vm1393, %v1309
          %1681 = vst.msk [vmem:[#allocation2 + $0x8] sm:$0xff] %vm1393, %v1310
          %1682 = vst.msk [vmem:[#allocation2 + $0x10] sm:$0xff] %vm1393, %v1311
          %1683 = vst.msk [vmem:[#allocation2 + $0x18] sm:$0xff] %vm1393, %v1312
        $region52: #{gigachad_forward.8} parent=31 // pred_fallthru
          _
        %p1684 = scmp.eq.s32.totalorder %s32, %s31
        // Predicated region
        $region53: #{gigachad_forward.8} parent=31 // pred_check
          %p1685 = pneg %p1684
        $region54: #{gigachad_forward.8} parent=31 // pred_check_branch
          %1687 = sbr.rel (%p1685) target = $region56
        $region55: #{gigachad_forward.8} parent=31 // pred_region
          %v1688 = vld [vmem:[#allocation4] sm:$0xff]
          %v1689 = vld [vmem:[#allocation4 + $0x8] sm:$0xff]
          %v1690 = vld [vmem:[#allocation4 + $0x10] sm:$0xff]
          %v1691 = vld [vmem:[#allocation4 + $0x18] sm:$0xff]
          %v1692 = vld [vmem:[#allocation3] sm:$0xff]
          %v1693 = vld [vmem:[#allocation3 + $0x8] sm:$0xff]
          %v1694 = vld [vmem:[#allocation3 + $0x10] sm:$0xff]
          %v1695 = vld [vmem:[#allocation3 + $0x18] sm:$0xff]
          %v1696 = vrcp.pop %v1692
          %v1697 = vrcp.pop %v1693
          %v1698 = vrcp.pop %v1694
          %v1699 = vrcp.pop %v1695
          %1701 = vset.pattern.permute.xlu0 0
          %1702 = vperm.xlu0 %1701, %v1696
          %v1703 = vpop.permute.xlu0 %1702
          %1706 = vset.pattern.permute.xlu0 0
          %1707 = vperm.xlu0 %1706, %v1697
          %v1708 = vpop.permute.xlu0 %1707
          %1711 = vset.pattern.permute.xlu0 0
          %1712 = vperm.xlu0 %1711, %v1698
          %v1713 = vpop.permute.xlu0 %1712
          %1716 = vset.pattern.permute.xlu0 0
          %1717 = vperm.xlu0 %1716, %v1699
          %v1718 = vpop.permute.xlu0 %1717
          %v1720 = vmul.f32 %v1688, %v1703
          %v1721 = vmul.f32 %v1689, %v1708
          %v1722 = vmul.f32 %v1690, %v1713
          %v1723 = vmul.f32 %v1691, %v1718
          %v1724 = vcombine.low %v1720, %v1722
          %v1725 = vcombine.high %v1720, %v1722
          %v1727 = vunpack.c.l.s4 1983009808
          %v1728 = vunpack.c.0.s8 %v1727
          %v1729 = vlaneseq
          %v1730 = vshrl.u32 %v1729, 7
          %v1731 = vsub.s32 %v1728, %v1730
          %v1732 = vrot.slane %v1724, %v1731
          %v1734 = vunpack.c.l.s4 1983009808
          %v1735 = vunpack.c.0.s8 %v1734
          %v1736 = vlaneseq
          %v1737 = vshrl.u32 %v1736, 7
          %v1738 = vsub.s32 %v1735, %v1737
          %v1739 = vrot.slane %v1725, %v1738
          %v1740 = vcombine.low %v1721, %v1723
          %v1741 = vcombine.high %v1721, %v1723
          %v1743 = vunpack.c.l.s4 1983009808
          %v1744 = vunpack.c.0.s8 %v1743
          %v1745 = vlaneseq
          %v1746 = vshrl.u32 %v1745, 7
          %v1747 = vsub.s32 %v1744, %v1746
          %v1748 = vrot.slane %v1740, %v1747
          %v1750 = vunpack.c.l.s4 1983009808
          %v1751 = vunpack.c.0.s8 %v1750
          %v1752 = vlaneseq
          %v1753 = vshrl.u32 %v1752, 7
          %v1754 = vsub.s32 %v1751, %v1753
          %v1755 = vrot.slane %v1741, %v1754
          %v1756 = vcombine.low %v1732, %v1748
          %v1757 = vcombine.high %v1732, %v1748
          %v1759 = vunpack.c.l.s4 1934713408
          %v1760 = vunpack.c.0.s8 %v1759
          %v1761 = vlaneseq
          %v1762 = vshrl.u32 %v1761, 7
          %v1763 = vsub.s32 %v1760, %v1762
          %v1764 = vrot.slane %v1756, %v1763
          %v1766 = vunpack.c.l.s4 1934713408
          %v1767 = vunpack.c.0.s8 %v1766
          %v1768 = vlaneseq
          %v1769 = vshrl.u32 %v1768, 7
          %v1770 = vsub.s32 %v1767, %v1769
          %v1771 = vrot.slane %v1757, %v1770
          %v1772 = vcombine.low %v1739, %v1755
          %v1773 = vcombine.high %v1739, %v1755
          %v1775 = vunpack.c.l.s4 1934713408
          %v1776 = vunpack.c.0.s8 %v1775
          %v1777 = vlaneseq
          %v1778 = vshrl.u32 %v1777, 7
          %v1779 = vsub.s32 %v1776, %v1778
          %v1780 = vrot.slane %v1772, %v1779
          %v1782 = vunpack.c.l.s4 1934713408
          %v1783 = vunpack.c.0.s8 %v1782
          %v1784 = vlaneseq
          %v1785 = vshrl.u32 %v1784, 7
          %v1786 = vsub.s32 %v1783, %v1785
          %v1787 = vrot.slane %v1773, %v1786
          %v1788 = vcombine.high %v1764, 0.0
          %v1789 = vcombine.high %v1771, 0.0
          %v1790 = vcombine.high %v1780, 0.0
          %v1791 = vcombine.high %v1787, 0.0
          %v1792 = vcombine.low %v1764, %v1771
          %v1794 = vunpack.c.l.s4 1983009808
          %v1795 = vunpack.c.0.s8 %v1794
          %v1796 = vlaneseq
          %v1797 = vshrl.u32 %v1796, 7
          %v1798 = vsub.s32 %v1795, %v1797
          %v1799 = vrot.slane %v1792, %v1798
          %v1800 = vcombine.low %v1788, %v1789
          %v1802 = vunpack.c.l.s4 1983009808
          %v1803 = vunpack.c.0.s8 %v1802
          %v1804 = vlaneseq
          %v1805 = vshrl.u32 %v1804, 7
          %v1806 = vsub.s32 %v1803, %v1805
          %v1807 = vrot.slane %v1800, %v1806
          %v1808 = vcombine.low %v1780, %v1787
          %v1810 = vunpack.c.l.s4 1983009808
          %v1811 = vunpack.c.0.s8 %v1810
          %v1812 = vlaneseq
          %v1813 = vshrl.u32 %v1812, 7
          %v1814 = vsub.s32 %v1811, %v1813
          %v1815 = vrot.slane %v1808, %v1814
          %v1816 = vcombine.low %v1790, %v1791
          %v1818 = vunpack.c.l.s4 1983009808
          %v1819 = vunpack.c.0.s8 %v1818
          %v1820 = vlaneseq
          %v1821 = vshrl.u32 %v1820, 7
          %v1822 = vsub.s32 %v1819, %v1821
          %v1823 = vrot.slane %v1816, %v1822
          %v1824 = vcombine.low %v1799, %v1807
          %v1825 = vcombine.high %v1799, %v1807
          %v1827 = vunpack.c.l.s4 1934713408
          %v1828 = vunpack.c.0.s8 %v1827
          %v1829 = vlaneseq
          %v1830 = vshrl.u32 %v1829, 7
          %v1831 = vsub.s32 %v1828, %v1830
          %v1832 = vrot.slane %v1824, %v1831
          %v1834 = vunpack.c.l.s4 1934713408
          %v1835 = vunpack.c.0.s8 %v1834
          %v1836 = vlaneseq
          %v1837 = vshrl.u32 %v1836, 7
          %v1838 = vsub.s32 %v1835, %v1837
          %v1839 = vrot.slane %v1825, %v1838
          %v1840 = vcombine.low %v1815, %v1823
          %v1841 = vcombine.high %v1815, %v1823
          %v1843 = vunpack.c.l.s4 1934713408
          %v1844 = vunpack.c.0.s8 %v1843
          %v1845 = vlaneseq
          %v1846 = vshrl.u32 %v1845, 7
          %v1847 = vsub.s32 %v1844, %v1846
          %v1848 = vrot.slane %v1840, %v1847
          %v1850 = vunpack.c.l.s4 1934713408
          %v1851 = vunpack.c.0.s8 %v1850
          %v1852 = vlaneseq
          %v1853 = vshrl.u32 %v1852, 7
          %v1854 = vsub.s32 %v1851, %v1853
          %v1855 = vrot.slane %v1841, %v1854
          %v1856 = vcombine.low %v1832, %v1848
          %v1857 = vcombine.high %v1832, %v1848
          %v1858 = vcombine.low %v1839, %v1855
          %v1859 = vcombine.high %v1839, %v1855
          %1861 = vrot.lane.b32.xlu0 %v1857, 8
          %v1862 = vpop.permute.xlu0 %1861
          %1865 = vrot.lane.b32.xlu0 %v1858, 16
          %v1866 = vpop.permute.xlu0 %1865
          %1869 = vrot.lane.b32.xlu0 %v1859, 24
          %v1870 = vpop.permute.xlu0 %1869
          %vm1872 = vcmask 64512
          %v1873 = vsel %vm1872, %v1856, %v1862
          %vm1874 = vcmask 130048
          %v1875 = vsel %vm1874, %v1873, %v1866
          %vm1876 = vcmask 195584
          %v1877 = vsel %vm1876, %v1875, %v1870
          %v1878 = vpack.c.bf16 %v1877, %v1877
          %vm1879 = vcmask 257024
          %1880 = vst.msk [vmem:[%s316] sm:$0xf] %vm1879, %v1878
        $region56: #{gigachad_forward.8} parent=31 // pred_fallthru
          _
        %s1881 = sand.u32 %s159, 1
        %s1882 = scalar_lea.sflag [#allocation7], %s1881
        %s1883 = sand.u32 %s159, 1
        %s1884 = smul.addr %s1883, 4
        %s1885 = scalar_lea.vmem [#allocation11], %s1884
        // Predicated region
        $region57: #{gigachad_forward.8} parent=31 // pred_check
          %p1886 = pneg %p169
        $region58: #{gigachad_forward.8} parent=31 // pred_check_branch
          %1888 = sbr.rel (%p1886) target = $region60
        $region59: #{gigachad_forward.8} parent=31 // pred_region
          %s1890 = ssub.s32 64, 64
          %1891 = vsyncadd %s1882, %s1890
          %s1892 = sadd.s32 %s30, %s31
          %s1893 = sadd.s32 %s1892, %s29
          %s1894 = smul.addr %s1893, 64
          %s1895 = scalar_lea.hbm %s3, %s1894
          %s1897 = sshll.u32 %s1885, 4
          %s1898 = int_to_ptr.vmem [resolvable:$true] %s1897
          %1900 = dma.vmem_to_hbm [thread:$0]  %s1898, 64, %s1895, %s1882
        $region60: #{gigachad_forward.8} parent=31 // pred_fallthru
          _
      $region32: #{gigachad_forward.8} parent=5 // pred_fallthru
        _
      %p1901 = scmp.le.s32.totalorder 2, %s18
      // Predicated region
      $region61: #{gigachad_forward.8} parent=5 // pred_check
        %p1902 = pneg %p1901
      $region62: #{gigachad_forward.8} parent=5 // pred_check_branch
        %1904 = sbr.rel (%p1902) target = $region64
      $region63: #{gigachad_forward.8} parent=5 // pred_region
        %s1905 = ssub.s32 %s18, 2
        // Predicated region
        $region65: #{gigachad_forward.8} parent=63 // pred_check
          %p1906 = pneg %p175
        $region66: #{gigachad_forward.8} parent=63 // pred_check_branch
          %1908 = sbr.rel (%p1906) target = $region68
        $region67: #{gigachad_forward.8} parent=63 // pred_region
          %s1909 = sand.u32 %s160, 1
          %s1910 = scalar_lea.sflag [#allocation7], %s1909
          %s1911 = sand.u32 %s160, 1
          %s1912 = smul.addr %s1911, 4
          %s1913 = scalar_lea.vmem [#allocation11], %s1912
          %1914 = dma.done %s1910, 64
        $region68: #{gigachad_forward.8} parent=63 // pred_fallthru
          _
      $region64: #{gigachad_forward.8} parent=5 // pred_fallthru
        _
    $region6: #{gigachad_forward.8} parent=1 // loop_footer
      %s22 = sadd.s32 1, %s18
    $region7: #{gigachad_forward.8} parent=1 // loop_footer_branch
      %17 = sbr.rel target = $region3
    $region8: #{gigachad_forward.8} parent=1 // loop_exit
      _
    %1915 = vsyncpa [#allocation6], 1
    %s1916 = scalar_lea.sflag [#allocation6], 1
    %1917 = vsyncpa %s1916, 1
    %1918 = vsyncpa [#allocation9], 1
    %s1919 = scalar_lea.sflag [#allocation9], 1
    %1920 = vsyncpa %s1919, 1
    %1921 = vsyncpa [#allocation7], 1
    %s1922 = scalar_lea.sflag [#allocation7], 1
    %1923 = vsyncpa %s1922, 1

</llo_original>
